<compile_context>
chip_gen: v7x
topology: tpu7x:2x2x1
jax: 0.10.0
libtpu: 0.0.40
codegen_flags: <defaults>
</compile_context>

<pallas_src>
import jax
import jax.numpy as jnp
import numpy as np
from jax import lax
from jax.experimental import pallas as pl
from jax.experimental.pallas import tpu as pltpu

# symlet-like filters from the PyTorch module
H_FILTER = np.array([-0.0322, -0.0126, 0.0992, 0.2978, -0.8037, 0.49761, 0.0296, -0.0757],
                    dtype=np.float32)
L_FILTER = np.array([-0.0757, -0.0296, 0.4976, 0.8037, 0.2978, -0.0992, -0.0126, 0.0322],
                    dtype=np.float32)


def create_W(P, is_l, key):
    """Replicates wavelet_decomp.create_W: banded filter matrix over a small random base."""
    filt = L_FILTER if is_l else H_FILTER
    max_eps = float(np.min(np.abs(filt)))
    W = np.array(jax.random.normal(key, (P, P), dtype=jnp.float32)) * 0.1 * max_eps
    for i in range(P):
        filter_index = 0
        for j in range(i - 4, P):
            if j < 0:
                filter_index += 1
            elif filter_index < len(filt):
                W[i, j] = filt[filter_index]
                filter_index += 1
    return jnp.asarray(W, dtype=jnp.float32)


# -------------------------- shared math (kernel body and pure-JAX reference) ---------------------

def _mm(a, b):
    """2D (M, K) @ (K, N) -> (M, N), f32 accumulation on the MXU."""
    return jnp.dot(a, b, preferred_element_type=jnp.float32)


def _bmm(a, b):
    """(Bt, M, K) @ (Bt, K, N) -> (Bt, M, N), f32 accumulation."""
    return lax.dot_general(a, b, (((2,), (1,)), ((0,), (0,))),
                           preferred_element_type=jnp.float32)


def _bmm_nt(a, b):
    """(Bt, M, K) @ (Bt, N, K)^T -> (Bt, M, N)."""
    return lax.dot_general(a, b, (((2,), (2,)), ((0,), (0,))),
                           preferred_element_type=jnp.float32)


def _seq_matmul(w, x):
    """Sequence-axis Linear: (R, L) weight applied to (Bt, L, D) -> (Bt, R, D).

    The weight stays un-batched (2D matmul per batch element, Bt is small & static), so no
    (Bt, R, L) broadcast is ever materialized in VMEM.
    """
    outs = [_mm(w, x[b]) for b in range(x.shape[0])]
    return jnp.stack(outs, axis=0)


def _layernorm(v, g, b, eps=1e-5):
    mu = jnp.mean(v, axis=-1, keepdims=True)
    var = jnp.mean((v - mu) ** 2, axis=-1, keepdims=True)
    return (v - mu) * lax.rsqrt(var + eps) * g + b


def _softmax_last(s):
    m = jnp.max(s, axis=-1, keepdims=True)
    e = jnp.exp(s - m)
    return e / jnp.sum(e, axis=-1, keepdims=True)   # exact reciprocal (correctness over approx)


def _forward_tile(x, cross, params):
    """Forward pass for one (Bt, L, D) activation tile.

    params (already in matmul-ready shapes, D = d_model, F = d_ff, L = seq_len):
      sqkv_w (D, 3D)  fused self Q/K/V weight (Q columns carry the 1/sqrt(D) score scale)
      sqkv_b (1, 3D)  fused self Q/K/V bias
      so_w   (D, D)   self output projection        so_b (1, D)
      cq_w   (D, D)   cross query (scale folded)    cq_b (1, D)
      ckv_w  (D, 2D)  fused cross K/V               ckv_b (1, 2D)
      co_w   (D, D)   cross output projection       co_b (1, D)
      w21    (3D, F)  conv21 (1x1)                  b21  (1, F)
      w22    (F, D)   conv22 (1x1)                  b22  (1, D)
      ww     (3, 2L, L) per wavelet level, stacked [Wh; Wl]
      wb     (3, 2L, 1) per wavelet level, stacked [bh; bl]
      nrm    (6, D)   rows [g1, b1, g2, b2, g3, b3]
    """
    (sqkv_w, sqkv_b, so_w, so_b, cq_w, cq_b, ckv_w, ckv_b, co_w, co_b,
     w21, b21, w22, b22, ww, wb, nrm) = params
    Bt, L, D = x.shape
    Lc = cross.shape[1]

    x2 = x.reshape(Bt * L, D)                       # free leading-dim merge, D stays lane-dim

    # ---- x = norm1(x + self_attention(x, x, x))  (fused QKV, dropout = identity) ----
    qkv = _mm(x2, sqkv_w) + sqkv_b                  # (Bt*L, 3D), one matmul for the whole tile
    q = qkv[:, :D].reshape(Bt, L, D)
    k = qkv[:, D:2 * D].reshape(Bt, L, D)
    v = qkv[:, 2 * D:].reshape(Bt, L, D)
    o = _bmm(_softmax_last(_bmm_nt(q, k)), v)       # batched score / PV matmuls
    x2 = _layernorm(x2 + _mm(o.reshape(Bt * L, D), so_w) + so_b, nrm[0:1], nrm[1:2])
    x = x2.reshape(Bt, L, D)

    # ---- wavelet levels 1 & 2: stacked [Wh; Wl] seq-axis Linear + sigmoid each ----
    hl1 = jax.nn.sigmoid(_seq_matmul(ww[0], x) + wb[0])
    h1, l1 = hl1[:, :L, :], hl1[:, L:, :]
    hl2 = jax.nn.sigmoid(_seq_matmul(ww[1], l1) + wb[1])
    h2, l2 = hl2[:, :L, :], hl2[:, L:, :]

    # ---- xh2 = conv22(relu(conv21(cat([x, h1, h2]))))  (1x1 convs == feature matmuls) ----
    cat = jnp.concatenate([x, h1, h2], axis=-1).reshape(Bt * L, 3 * D)
    t = jnp.maximum(_mm(cat, w21) + b21, 0.0)
    x2 = _layernorm(x2 + _mm(t, w22) + b22, nrm[2:3], nrm[3:4])
    x = x2.reshape(Bt, L, D)

    # ---- x = x + cross_attention(x, cross, cross)  (fused KV) ----
    qc = (_mm(x2, cq_w) + cq_b).reshape(Bt, L, D)
    kvc = _mm(cross.reshape(Bt * Lc, D), ckv_w) + ckv_b          # (Bt*Lc, 2D)
    kc = kvc[:, :D].reshape(Bt, Lc, D)
    vc = kvc[:, D:].reshape(Bt, Lc, D)
    oc = _bmm(_softmax_last(_bmm_nt(qc, kc)), vc)
    x2 = x2 + _mm(oc.reshape(Bt * L, D), co_w) + co_b
    x = x2.reshape(Bt, L, D)

    # ---- wavelet level 3 on l2, final residual + norm ----
    hl3 = jax.nn.sigmoid(_seq_matmul(ww[2], l2) + wb[2])
    h3, l3 = hl3[:, :L, :], hl3[:, L:, :]
    return _layernorm(x + h3 + l3, nrm[4:5], nrm[5:6])


# ----------------------------------------- Pallas kernel -----------------------------------------

def mlwt_layer_kernel(x_ref, cross_ref, *rest):
    *param_refs, y_ref = rest
    y_ref[...] = _forward_tile(x_ref[...], cross_ref[...],
                               tuple(r[...] for r in param_refs))


def _default_batch_tile(B):
    """grid=(1,) on 1-TensorCore chips (v5e/v6e); 2 'parallel' steps only on 2-TC v7x."""
    try:
        kind = jax.devices()[0].device_kind.lower()
    except Exception:
        kind = ""
    if "v7" in kind and B >= 2 and B % 2 == 0:
        return B // 2
    return B                                    # never fall back to B tiny per-sample steps


def mlwt_layer_forward(x, cross, params, *, batch_tile=None):
    B, L, D = x.shape
    _, Lc, Dc = cross.shape
    assert Dc == D
    if batch_tile is None:
        batch_tile = _default_batch_tile(B)
    assert B % batch_tile == 0, "pad the batch to a multiple of batch_tile"
    grid = (B // batch_tile,)

    def const_spec(p):  # full-array block, constant index map -> fetched once, resident in VMEM
        zeros = (0,) * p.ndim
        return pl.BlockSpec(p.shape, lambda b, _z=zeros: _z)

    in_specs = [
        pl.BlockSpec((batch_tile, L, D), lambda b: (b, 0, 0)),
        pl.BlockSpec((batch_tile, Lc, D), lambda b: (b, 0, 0)),
    ] + [const_spec(p) for p in params]

    return pl.pallas_call(
        mlwt_layer_kernel,
        grid=grid,
        in_specs=in_specs,
        out_specs=pl.BlockSpec((batch_tile, L, D), lambda b: (b, 0, 0)),
        out_shape=jax.ShapeDtypeStruct((B, L, D), jnp.float32),
        compiler_params=pltpu.CompilerParams(dimension_semantics=("parallel",)),
    )(x, cross, *params)


# --------------------------------------- parameter setup -----------------------------------------

def init_params(key, seq_len, d_model, d_ff):
    """Builds the 17 matmul-ready parameter arrays (see _forward_tile docstring)."""
    keys = iter(jax.random.split(key, 64))
    D = d_model

    def linear_T(din, dout):
        W = jax.random.normal(next(keys), (dout, din), dtype=jnp.float32) / float(np.sqrt(din))
        b = jax.random.normal(next(keys), (1, dout), dtype=jnp.float32) * 0.02
        return W.T, b                      # pre-transposed: x @ W^T

    # single-head self- / cross-attention projections
    sWqT, sbq = linear_T(D, D); sWkT, sbk = linear_T(D, D)
    sWvT, sbv = linear_T(D, D); sWoT, sbo = linear_T(D, D)
    cWqT, cbq = linear_T(D, D); cWkT, cbk = linear_T(D, D)
    cWvT, cbv = linear_T(D, D); cWoT, cbo = linear_T(D, D)

    # fold the 1/sqrt(d_keys) attention score scale into the query projections
    scale = float(1.0 / np.sqrt(D))
    sWqT, sbq = sWqT * scale, sbq * scale
    cWqT, cbq = cWqT * scale, cbq * scale

    sqkv_w = jnp.concatenate([sWqT, sWkT, sWvT], axis=1)      # (D, 3D)
    sqkv_b = jnp.concatenate([sbq, sbk, sbv], axis=1)         # (1, 3D)
    ckv_w = jnp.concatenate([cWkT, cWvT], axis=1)             # (D, 2D)
    ckv_b = jnp.concatenate([cbk, cbv], axis=1)               # (1, 2D)

    # conv21: Conv1d(3*d_model -> d_ff, k=1) on cat([x,h1,h2]); conv22: Conv1d(d_ff -> d_model, k=1)
    W21 = jax.random.normal(next(keys), (d_ff, 3 * D), dtype=jnp.float32) / float(np.sqrt(3 * D))
    b21 = jax.random.normal(next(keys), (1, d_ff), dtype=jnp.float32) * 0.02
    W22T, b22 = linear_T(d_ff, D)

    # three wavelet-decomposition levels (Linear(seq_len, seq_len) + bias), h & l stacked
    bound = float(1.0 / np.sqrt(seq_len))
    ww, wb = [], []
    for _ in range(3):
        Wh = create_W(seq_len, False, next(keys))
        bh = jax.random.uniform(next(keys), (seq_len, 1), minval=-bound, maxval=bound,
                                dtype=jnp.float32)
        Wl = create_W(seq_len, True, next(keys))
        bl = jax.random.uniform(next(keys), (seq_len, 1), minval=-bound, maxval=bound,
                                dtype=jnp.float32)
        ww.append(jnp.concatenate([Wh, Wl], axis=0))   # (2L, L)
        wb.append(jnp.concatenate([bh, bl], axis=0))   # (2L, 1)
    wave_w = jnp.stack(ww, axis=0)                      # (3, 2L, L)
    wave_b = jnp.stack(wb, axis=0)                      # (3, 2L, 1)

    # layernorm affine params as rows (leading-axis slices in-kernel are free views)
    norm = jnp.concatenate(
        [jnp.ones((1, D), jnp.float32), jnp.zeros((1, D), jnp.float32)] * 3, axis=0)  # (6, D)

    return (sqkv_w, sqkv_b, sWoT, sbo, cWqT, cbq, ckv_w, ckv_b, cWoT, cbo,
            W21.T, b21, W22T, b22, wave_w, wave_b, norm)


# ---------------------------------------------- main ---------------------------------------------

if __name__ == "__main__":
    B, L, Lc, D, D_FF = 4, 16, 16, 8, 32   # seq_len=16, d_model=8, d_ff=4*d_model
    key = jax.random.PRNGKey(0)
    kx, kc, kp = jax.random.split(key, 3)

    x = jax.random.normal(kx, (B, L, D), dtype=jnp.float32)
    cross = jax.random.normal(kc, (B, Lc, D), dtype=jnp.float32)
    params = init_params(kp, L, D, D_FF)

    y = jax.block_until_ready(mlwt_layer_forward(x, cross, params))

    # pure-JAX reference: identical math on the same params (validates the Pallas lowering)
    ref = _forward_tile(x, cross, params)
    np.testing.assert_allclose(np.asarray(y), np.asarray(ref), rtol=2e-3, atol=2e-3)

    print("KERNEL_OK")
</pallas_src>

<mosaic_0001>
module attributes {stable_mosaic.version = 11 : i64} {
  func.func @mlwt_layer_kernel(%arg0: i32, %arg1: memref<4x16x8xf32, #tpu.memory_space<vmem>>, %arg2: memref<4x16x8xf32, #tpu.memory_space<vmem>>, %arg3: memref<8x24xf32, #tpu.memory_space<vmem>>, %arg4: memref<1x24xf32, #tpu.memory_space<vmem>>, %arg5: memref<8x8xf32, #tpu.memory_space<vmem>>, %arg6: memref<1x8xf32, #tpu.memory_space<vmem>>, %arg7: memref<8x8xf32, #tpu.memory_space<vmem>>, %arg8: memref<1x8xf32, #tpu.memory_space<vmem>>, %arg9: memref<8x16xf32, #tpu.memory_space<vmem>>, %arg10: memref<1x16xf32, #tpu.memory_space<vmem>>, %arg11: memref<8x8xf32, #tpu.memory_space<vmem>>, %arg12: memref<1x8xf32, #tpu.memory_space<vmem>>, %arg13: memref<24x32xf32, #tpu.memory_space<vmem>>, %arg14: memref<1x32xf32, #tpu.memory_space<vmem>>, %arg15: memref<32x8xf32, #tpu.memory_space<vmem>>, %arg16: memref<1x8xf32, #tpu.memory_space<vmem>>, %arg17: memref<3x32x16xf32, #tpu.memory_space<vmem>>, %arg18: memref<3x32x1xf32, #tpu.memory_space<vmem>>, %arg19: memref<6x8xf32, #tpu.memory_space<vmem>>, %arg20: memref<4x16x8xf32, #tpu.memory_space<vmem>>) attributes {dimension_semantics = [#tpu.dimension_semantics<parallel>], iteration_bounds = array<i64: 1>, scalar_prefetch = 0 : i64, scratch_operands = 0 : i64, tpu.core_type = #tpu.core_type<tc>, window_params = [{transform_indices = @transform_0, window_bounds = array<i64: 4, 16, 8>}, {transform_indices = @transform_1, window_bounds = array<i64: 4, 16, 8>}, {pipeline_mode = #tpu.pipeline_mode<synchronous>, transform_indices = @transform_2, window_bounds = array<i64: 8, 24>}, {pipeline_mode = #tpu.pipeline_mode<synchronous>, transform_indices = @transform_3, window_bounds = array<i64: 1, 24>}, {pipeline_mode = #tpu.pipeline_mode<synchronous>, transform_indices = @transform_4, window_bounds = array<i64: 8, 8>}, {pipeline_mode = #tpu.pipeline_mode<synchronous>, transform_indices = @transform_5, window_bounds = array<i64: 1, 8>}, {pipeline_mode = #tpu.pipeline_mode<synchronous>, transform_indices = @transform_6, window_bounds = array<i64: 8, 8>}, {pipeline_mode = #tpu.pipeline_mode<synchronous>, transform_indices = @transform_7, window_bounds = array<i64: 1, 8>}, {pipeline_mode = #tpu.pipeline_mode<synchronous>, transform_indices = @transform_8, window_bounds = array<i64: 8, 16>}, {pipeline_mode = #tpu.pipeline_mode<synchronous>, transform_indices = @transform_9, window_bounds = array<i64: 1, 16>}, {pipeline_mode = #tpu.pipeline_mode<synchronous>, transform_indices = @transform_10, window_bounds = array<i64: 8, 8>}, {pipeline_mode = #tpu.pipeline_mode<synchronous>, transform_indices = @transform_11, window_bounds = array<i64: 1, 8>}, {pipeline_mode = #tpu.pipeline_mode<synchronous>, transform_indices = @transform_12, window_bounds = array<i64: 24, 32>}, {pipeline_mode = #tpu.pipeline_mode<synchronous>, transform_indices = @transform_13, window_bounds = array<i64: 1, 32>}, {pipeline_mode = #tpu.pipeline_mode<synchronous>, transform_indices = @transform_14, window_bounds = array<i64: 32, 8>}, {pipeline_mode = #tpu.pipeline_mode<synchronous>, transform_indices = @transform_15, window_bounds = array<i64: 1, 8>}, {pipeline_mode = #tpu.pipeline_mode<synchronous>, transform_indices = @transform_16, window_bounds = array<i64: 3, 32, 16>}, {pipeline_mode = #tpu.pipeline_mode<synchronous>, transform_indices = @transform_17, window_bounds = array<i64: 3, 32, 1>}, {pipeline_mode = #tpu.pipeline_mode<synchronous>, transform_indices = @transform_18, window_bounds = array<i64: 6, 8>}, {transform_indices = @transform_19, window_bounds = array<i64: 4, 16, 8>}]} {
    %c0 = arith.constant 0 : index
    %c0_0 = arith.constant 0 : index
    %c0_1 = arith.constant 0 : index
    %0 = vector.load %arg1[%c0, %c0_0, %c0_1] : memref<4x16x8xf32, #tpu.memory_space<vmem>>, vector<4x16x8xf32>
    %c0_2 = arith.constant 0 : index
    %c0_3 = arith.constant 0 : index
    %c0_4 = arith.constant 0 : index
    %1 = vector.load %arg2[%c0_2, %c0_3, %c0_4] : memref<4x16x8xf32, #tpu.memory_space<vmem>>, vector<4x16x8xf32>
    %c0_5 = arith.constant 0 : index
    %c0_6 = arith.constant 0 : index
    %2 = vector.load %arg3[%c0_5, %c0_6] : memref<8x24xf32, #tpu.memory_space<vmem>>, vector<8x24xf32>
    %c0_7 = arith.constant 0 : index
    %c0_8 = arith.constant 0 : index
    %3 = vector.load %arg4[%c0_7, %c0_8] : memref<1x24xf32, #tpu.memory_space<vmem>>, vector<1x24xf32>
    %c0_9 = arith.constant 0 : index
    %c0_10 = arith.constant 0 : index
    %4 = vector.load %arg5[%c0_9, %c0_10] : memref<8x8xf32, #tpu.memory_space<vmem>>, vector<8x8xf32>
    %c0_11 = arith.constant 0 : index
    %c0_12 = arith.constant 0 : index
    %5 = vector.load %arg6[%c0_11, %c0_12] : memref<1x8xf32, #tpu.memory_space<vmem>>, vector<1x8xf32>
    %c0_13 = arith.constant 0 : index
    %c0_14 = arith.constant 0 : index
    %6 = vector.load %arg7[%c0_13, %c0_14] : memref<8x8xf32, #tpu.memory_space<vmem>>, vector<8x8xf32>
    %c0_15 = arith.constant 0 : index
    %c0_16 = arith.constant 0 : index
    %7 = vector.load %arg8[%c0_15, %c0_16] : memref<1x8xf32, #tpu.memory_space<vmem>>, vector<1x8xf32>
    %c0_17 = arith.constant 0 : index
    %c0_18 = arith.constant 0 : index
    %8 = vector.load %arg9[%c0_17, %c0_18] : memref<8x16xf32, #tpu.memory_space<vmem>>, vector<8x16xf32>
    %c0_19 = arith.constant 0 : index
    %c0_20 = arith.constant 0 : index
    %9 = vector.load %arg10[%c0_19, %c0_20] : memref<1x16xf32, #tpu.memory_space<vmem>>, vector<1x16xf32>
    %c0_21 = arith.constant 0 : index
    %c0_22 = arith.constant 0 : index
    %10 = vector.load %arg11[%c0_21, %c0_22] : memref<8x8xf32, #tpu.memory_space<vmem>>, vector<8x8xf32>
    %c0_23 = arith.constant 0 : index
    %c0_24 = arith.constant 0 : index
    %11 = vector.load %arg12[%c0_23, %c0_24] : memref<1x8xf32, #tpu.memory_space<vmem>>, vector<1x8xf32>
    %c0_25 = arith.constant 0 : index
    %c0_26 = arith.constant 0 : index
    %12 = vector.load %arg13[%c0_25, %c0_26] : memref<24x32xf32, #tpu.memory_space<vmem>>, vector<24x32xf32>
    %c0_27 = arith.constant 0 : index
    %c0_28 = arith.constant 0 : index
    %13 = vector.load %arg14[%c0_27, %c0_28] : memref<1x32xf32, #tpu.memory_space<vmem>>, vector<1x32xf32>
    %c0_29 = arith.constant 0 : index
    %c0_30 = arith.constant 0 : index
    %14 = vector.load %arg15[%c0_29, %c0_30] : memref<32x8xf32, #tpu.memory_space<vmem>>, vector<32x8xf32>
    %c0_31 = arith.constant 0 : index
    %c0_32 = arith.constant 0 : index
    %15 = vector.load %arg16[%c0_31, %c0_32] : memref<1x8xf32, #tpu.memory_space<vmem>>, vector<1x8xf32>
    %c0_33 = arith.constant 0 : index
    %c0_34 = arith.constant 0 : index
    %c0_35 = arith.constant 0 : index
    %16 = vector.load %arg17[%c0_33, %c0_34, %c0_35] : memref<3x32x16xf32, #tpu.memory_space<vmem>>, vector<3x32x16xf32>
    %c0_36 = arith.constant 0 : index
    %c0_37 = arith.constant 0 : index
    %c0_38 = arith.constant 0 : index
    %17 = vector.load %arg18[%c0_36, %c0_37, %c0_38] : memref<3x32x1xf32, #tpu.memory_space<vmem>>, vector<3x32x1xf32>
    %c0_39 = arith.constant 0 : index
    %c0_40 = arith.constant 0 : index
    %18 = vector.load %arg19[%c0_39, %c0_40] : memref<6x8xf32, #tpu.memory_space<vmem>>, vector<6x8xf32>
    %19 = vector.shape_cast %0 : vector<4x16x8xf32> to vector<64x8xf32>
    %cst = arith.constant dense<0.000000e+00> : vector<64x24xf32>
    %20 = tpu.matmul %19, %2, %cst {dimension_numbers = #tpu.dot_dimension_numbers<[1], [0], [0], [1], [0, 0, 1, 1], [], []>} : vector<64x8xf32>, vector<8x24xf32>, vector<64x24xf32> -> vector<64x24xf32>
    %21 = vector.broadcast %3 : vector<1x24xf32> to vector<64x24xf32>
    %22 = arith.addf %20, %21 : vector<64x24xf32>
    %23 = vector.extract_strided_slice %22 {offsets = [0, 0], sizes = [64, 8], strides = [1, 1]} : vector<64x24xf32> to vector<64x8xf32>
    %24 = vector.shape_cast %23 : vector<64x8xf32> to vector<4x16x8xf32>
    %25 = vector.extract_strided_slice %22 {offsets = [0, 8], sizes = [64, 8], strides = [1, 1]} : vector<64x24xf32> to vector<64x8xf32>
    %26 = vector.shape_cast %25 : vector<64x8xf32> to vector<4x16x8xf32>
    %27 = vector.extract_strided_slice %22 {offsets = [0, 16], sizes = [64, 8], strides = [1, 1]} : vector<64x24xf32> to vector<64x8xf32>
    %28 = vector.shape_cast %27 : vector<64x8xf32> to vector<4x16x8xf32>
    %cst_41 = arith.constant dense<0.000000e+00> : vector<4x16x16xf32>
    %29 = tpu.matmul %24, %26, %cst_41 {dimension_numbers = #tpu.dot_dimension_numbers<[2], [2], [1], [1], [0, 0, 0, 1, 1, 1], [0], [0]>} : vector<4x16x8xf32>, vector<4x16x8xf32>, vector<4x16x16xf32> -> vector<4x16x16xf32>
    %cst_42 = arith.constant dense<0xFF800000> : vector<4x16xf32>
    %30 = vector.multi_reduction <maximumf>, %29, %cst_42 [2] : vector<4x16x16xf32> to vector<4x16xf32>
    %31 = vector.shape_cast %30 : vector<4x16xf32> to vector<4x16x1xf32>
    %32 = vector.broadcast %31 : vector<4x16x1xf32> to vector<4x16x16xf32>
    %33 = arith.subf %29, %32 : vector<4x16x16xf32>
    %34 = math.exp %33 : vector<4x16x16xf32>
    %cst_43 = arith.constant dense<0.000000e+00> : vector<4x16xf32>
    %35 = vector.multi_reduction <add>, %34, %cst_43 [2] : vector<4x16x16xf32> to vector<4x16xf32>
    %36 = vector.shape_cast %35 : vector<4x16xf32> to vector<4x16x1xf32>
    %37 = vector.broadcast %36 : vector<4x16x1xf32> to vector<4x16x16xf32>
    %38 = arith.divf %34, %37 : vector<4x16x16xf32>
    %cst_44 = arith.constant dense<0.000000e+00> : vector<4x16x8xf32>
    %39 = tpu.matmul %38, %28, %cst_44 {dimension_numbers = #tpu.dot_dimension_numbers<[2], [1], [1], [2], [0, 0, 0, 1, 1, 2], [0], [0]>} : vector<4x16x16xf32>, vector<4x16x8xf32>, vector<4x16x8xf32> -> vector<4x16x8xf32>
    %40 = vector.shape_cast %39 : vector<4x16x8xf32> to vector<64x8xf32>
    %cst_45 = arith.constant dense<0.000000e+00> : vector<64x8xf32>
    %41 = tpu.matmul %40, %4, %cst_45 {dimension_numbers = #tpu.dot_dimension_numbers<[1], [0], [0], [1], [0, 0, 1, 1], [], []>} : vector<64x8xf32>, vector<8x8xf32>, vector<64x8xf32> -> vector<64x8xf32>
    %42 = arith.addf %19, %41 : vector<64x8xf32>
    %43 = vector.broadcast %5 : vector<1x8xf32> to vector<64x8xf32>
    %44 = arith.addf %42, %43 : vector<64x8xf32>
    %45 = vector.extract_strided_slice %18 {offsets = [0, 0], sizes = [1, 8], strides = [1, 1]} : vector<6x8xf32> to vector<1x8xf32>
    %46 = vector.extract_strided_slice %18 {offsets = [1, 0], sizes = [1, 8], strides = [1, 1]} : vector<6x8xf32> to vector<1x8xf32>
    %cst_46 = arith.constant dense<0.000000e+00> : vector<64xf32>
    %47 = vector.multi_reduction <add>, %44, %cst_46 [1] : vector<64x8xf32> to vector<64xf32>
    %48 = vector.shape_cast %47 : vector<64xf32> to vector<64x1xf32>
    %cst_47 = arith.constant 8.000000e+00 : f32
    %49 = vector.broadcast %cst_47 : f32 to vector<64x1xf32>
    %50 = arith.divf %48, %49 : vector<64x1xf32>
    %51 = vector.broadcast %50 : vector<64x1xf32> to vector<64x8xf32>
    %52 = arith.subf %44, %51 : vector<64x8xf32>
    %53 = arith.mulf %52, %52 : vector<64x8xf32>
    %cst_48 = arith.constant dense<0.000000e+00> : vector<64xf32>
    %54 = vector.multi_reduction <add>, %53, %cst_48 [1] : vector<64x8xf32> to vector<64xf32>
    %55 = vector.shape_cast %54 : vector<64xf32> to vector<64x1xf32>
    %cst_49 = arith.constant 8.000000e+00 : f32
    %56 = vector.broadcast %cst_49 : f32 to vector<64x1xf32>
    %57 = arith.divf %55, %56 : vector<64x1xf32>
    %58 = vector.broadcast %50 : vector<64x1xf32> to vector<64x8xf32>
    %59 = arith.subf %44, %58 : vector<64x8xf32>
    %cst_50 = arith.constant 9.99999974E-6 : f32
    %60 = vector.broadcast %cst_50 : f32 to vector<64x1xf32>
    %61 = arith.addf %57, %60 : vector<64x1xf32>
    %62 = math.rsqrt %61 : vector<64x1xf32>
    %63 = vector.broadcast %62 : vector<64x1xf32> to vector<64x8xf32>
    %64 = arith.mulf %59, %63 : vector<64x8xf32>
    %65 = vector.broadcast %45 : vector<1x8xf32> to vector<64x8xf32>
    %66 = arith.mulf %64, %65 : vector<64x8xf32>
    %67 = vector.broadcast %46 : vector<1x8xf32> to vector<64x8xf32>
    %68 = arith.addf %66, %67 : vector<64x8xf32>
    %69 = vector.shape_cast %68 : vector<64x8xf32> to vector<4x16x8xf32>
    %70 = vector.extract_strided_slice %16 {offsets = [0, 0, 0], sizes = [1, 32, 16], strides = [1, 1, 1]} : vector<3x32x16xf32> to vector<1x32x16xf32>
    %71 = vector.shape_cast %70 : vector<1x32x16xf32> to vector<32x16xf32>
    %72 = vector.extract_strided_slice %69 {offsets = [0, 0, 0], sizes = [1, 16, 8], strides = [1, 1, 1]} : vector<4x16x8xf32> to vector<1x16x8xf32>
    %73 = vector.shape_cast %72 : vector<1x16x8xf32> to vector<16x8xf32>
    %cst_51 = arith.constant dense<0.000000e+00> : vector<32x8xf32>
    %74 = tpu.matmul %71, %73, %cst_51 {dimension_numbers = #tpu.dot_dimension_numbers<[1], [0], [0], [1], [0, 0, 1, 1], [], []>} : vector<32x16xf32>, vector<16x8xf32>, vector<32x8xf32> -> vector<32x8xf32>
    %75 = vector.extract_strided_slice %69 {offsets = [1, 0, 0], sizes = [1, 16, 8], strides = [1, 1, 1]} : vector<4x16x8xf32> to vector<1x16x8xf32>
    %76 = vector.shape_cast %75 : vector<1x16x8xf32> to vector<16x8xf32>
    %cst_52 = arith.constant dense<0.000000e+00> : vector<32x8xf32>
    %77 = tpu.matmul %71, %76, %cst_52 {dimension_numbers = #tpu.dot_dimension_numbers<[1], [0], [0], [1], [0, 0, 1, 1], [], []>} : vector<32x16xf32>, vector<16x8xf32>, vector<32x8xf32> -> vector<32x8xf32>
    %78 = vector.extract_strided_slice %69 {offsets = [2, 0, 0], sizes = [1, 16, 8], strides = [1, 1, 1]} : vector<4x16x8xf32> to vector<1x16x8xf32>
    %79 = vector.shape_cast %78 : vector<1x16x8xf32> to vector<16x8xf32>
    %cst_53 = arith.constant dense<0.000000e+00> : vector<32x8xf32>
    %80 = tpu.matmul %71, %79, %cst_53 {dimension_numbers = #tpu.dot_dimension_numbers<[1], [0], [0], [1], [0, 0, 1, 1], [], []>} : vector<32x16xf32>, vector<16x8xf32>, vector<32x8xf32> -> vector<32x8xf32>
    %81 = vector.extract_strided_slice %69 {offsets = [3, 0, 0], sizes = [1, 16, 8], strides = [1, 1, 1]} : vector<4x16x8xf32> to vector<1x16x8xf32>
    %82 = vector.shape_cast %81 : vector<1x16x8xf32> to vector<16x8xf32>
    %cst_54 = arith.constant dense<0.000000e+00> : vector<32x8xf32>
    %83 = tpu.matmul %71, %82, %cst_54 {dimension_numbers = #tpu.dot_dimension_numbers<[1], [0], [0], [1], [0, 0, 1, 1], [], []>} : vector<32x16xf32>, vector<16x8xf32>, vector<32x8xf32> -> vector<32x8xf32>
    %84 = vector.shape_cast %74 : vector<32x8xf32> to vector<1x32x8xf32>
    %85 = vector.shape_cast %77 : vector<32x8xf32> to vector<1x32x8xf32>
    %86 = vector.shape_cast %80 : vector<32x8xf32> to vector<1x32x8xf32>
    %87 = vector.shape_cast %83 : vector<32x8xf32> to vector<1x32x8xf32>
    %88 = tpu.concatenate %84, %85, %86, %87 in 0 : vector<1x32x8xf32>, vector<1x32x8xf32>, vector<1x32x8xf32>, vector<1x32x8xf32> -> vector<4x32x8xf32>
    %89 = vector.extract_strided_slice %17 {offsets = [0, 0, 0], sizes = [1, 32, 1], strides = [1, 1, 1]} : vector<3x32x1xf32> to vector<1x32x1xf32>
    %90 = vector.shape_cast %89 : vector<1x32x1xf32> to vector<32x1xf32>
    %91 = vector.shape_cast %90 : vector<32x1xf32> to vector<1x32x1xf32>
    %92 = vector.broadcast %91 : vector<1x32x1xf32> to vector<4x32x8xf32>
    %93 = arith.addf %88, %92 : vector<4x32x8xf32>
    %94 = arith.negf %93 : vector<4x32x8xf32>
    %95 = math.exp %94 : vector<4x32x8xf32>
    %cst_55 = arith.constant 1.000000e+00 : f32
    %96 = vector.broadcast %cst_55 : f32 to vector<4x32x8xf32>
    %97 = arith.addf %96, %95 : vector<4x32x8xf32>
    %98 = arith.divf %96, %97 : vector<4x32x8xf32>
    %99 = vector.extract_strided_slice %98 {offsets = [0, 0, 0], sizes = [4, 16, 8], strides = [1, 1, 1]} : vector<4x32x8xf32> to vector<4x16x8xf32>
    %100 = vector.extract_strided_slice %98 {offsets = [0, 16, 0], sizes = [4, 16, 8], strides = [1, 1, 1]} : vector<4x32x8xf32> to vector<4x16x8xf32>
    %101 = vector.extract_strided_slice %16 {offsets = [1, 0, 0], sizes = [1, 32, 16], strides = [1, 1, 1]} : vector<3x32x16xf32> to vector<1x32x16xf32>
    %102 = vector.shape_cast %101 : vector<1x32x16xf32> to vector<32x16xf32>
    %103 = vector.extract_strided_slice %100 {offsets = [0, 0, 0], sizes = [1, 16, 8], strides = [1, 1, 1]} : vector<4x16x8xf32> to vector<1x16x8xf32>
    %104 = vector.shape_cast %103 : vector<1x16x8xf32> to vector<16x8xf32>
    %cst_56 = arith.constant dense<0.000000e+00> : vector<32x8xf32>
    %105 = tpu.matmul %102, %104, %cst_56 {dimension_numbers = #tpu.dot_dimension_numbers<[1], [0], [0], [1], [0, 0, 1, 1], [], []>} : vector<32x16xf32>, vector<16x8xf32>, vector<32x8xf32> -> vector<32x8xf32>
    %106 = vector.extract_strided_slice %100 {offsets = [1, 0, 0], sizes = [1, 16, 8], strides = [1, 1, 1]} : vector<4x16x8xf32> to vector<1x16x8xf32>
    %107 = vector.shape_cast %106 : vector<1x16x8xf32> to vector<16x8xf32>
    %cst_57 = arith.constant dense<0.000000e+00> : vector<32x8xf32>
    %108 = tpu.matmul %102, %107, %cst_57 {dimension_numbers = #tpu.dot_dimension_numbers<[1], [0], [0], [1], [0, 0, 1, 1], [], []>} : vector<32x16xf32>, vector<16x8xf32>, vector<32x8xf32> -> vector<32x8xf32>
    %109 = vector.extract_strided_slice %100 {offsets = [2, 0, 0], sizes = [1, 16, 8], strides = [1, 1, 1]} : vector<4x16x8xf32> to vector<1x16x8xf32>
    %110 = vector.shape_cast %109 : vector<1x16x8xf32> to vector<16x8xf32>
    %cst_58 = arith.constant dense<0.000000e+00> : vector<32x8xf32>
    %111 = tpu.matmul %102, %110, %cst_58 {dimension_numbers = #tpu.dot_dimension_numbers<[1], [0], [0], [1], [0, 0, 1, 1], [], []>} : vector<32x16xf32>, vector<16x8xf32>, vector<32x8xf32> -> vector<32x8xf32>
    %112 = vector.extract_strided_slice %100 {offsets = [3, 0, 0], sizes = [1, 16, 8], strides = [1, 1, 1]} : vector<4x16x8xf32> to vector<1x16x8xf32>
    %113 = vector.shape_cast %112 : vector<1x16x8xf32> to vector<16x8xf32>
    %cst_59 = arith.constant dense<0.000000e+00> : vector<32x8xf32>
    %114 = tpu.matmul %102, %113, %cst_59 {dimension_numbers = #tpu.dot_dimension_numbers<[1], [0], [0], [1], [0, 0, 1, 1], [], []>} : vector<32x16xf32>, vector<16x8xf32>, vector<32x8xf32> -> vector<32x8xf32>
    %115 = vector.shape_cast %105 : vector<32x8xf32> to vector<1x32x8xf32>
    %116 = vector.shape_cast %108 : vector<32x8xf32> to vector<1x32x8xf32>
    %117 = vector.shape_cast %111 : vector<32x8xf32> to vector<1x32x8xf32>
    %118 = vector.shape_cast %114 : vector<32x8xf32> to vector<1x32x8xf32>
    %119 = tpu.concatenate %115, %116, %117, %118 in 0 : vector<1x32x8xf32>, vector<1x32x8xf32>, vector<1x32x8xf32>, vector<1x32x8xf32> -> vector<4x32x8xf32>
    %120 = vector.extract_strided_slice %17 {offsets = [1, 0, 0], sizes = [1, 32, 1], strides = [1, 1, 1]} : vector<3x32x1xf32> to vector<1x32x1xf32>
    %121 = vector.shape_cast %120 : vector<1x32x1xf32> to vector<32x1xf32>
    %122 = vector.shape_cast %121 : vector<32x1xf32> to vector<1x32x1xf32>
    %123 = vector.broadcast %122 : vector<1x32x1xf32> to vector<4x32x8xf32>
    %124 = arith.addf %119, %123 : vector<4x32x8xf32>
    %125 = arith.negf %124 : vector<4x32x8xf32>
    %126 = math.exp %125 : vector<4x32x8xf32>
    %cst_60 = arith.constant 1.000000e+00 : f32
    %127 = vector.broadcast %cst_60 : f32 to vector<4x32x8xf32>
    %128 = arith.addf %127, %126 : vector<4x32x8xf32>
    %129 = arith.divf %127, %128 : vector<4x32x8xf32>
    %130 = vector.extract_strided_slice %129 {offsets = [0, 0, 0], sizes = [4, 16, 8], strides = [1, 1, 1]} : vector<4x32x8xf32> to vector<4x16x8xf32>
    %131 = vector.extract_strided_slice %129 {offsets = [0, 16, 0], sizes = [4, 16, 8], strides = [1, 1, 1]} : vector<4x32x8xf32> to vector<4x16x8xf32>
    %132 = tpu.concatenate %69, %99, %130 in 2 : vector<4x16x8xf32>, vector<4x16x8xf32>, vector<4x16x8xf32> -> vector<4x16x24xf32>
    %133 = vector.shape_cast %132 : vector<4x16x24xf32> to vector<64x24xf32>
    %cst_61 = arith.constant dense<0.000000e+00> : vector<64x32xf32>
    %134 = tpu.matmul %133, %12, %cst_61 {dimension_numbers = #tpu.dot_dimension_numbers<[1], [0], [0], [1], [0, 0, 1, 1], [], []>} : vector<64x24xf32>, vector<24x32xf32>, vector<64x32xf32> -> vector<64x32xf32>
    %135 = vector.broadcast %13 : vector<1x32xf32> to vector<64x32xf32>
    %136 = arith.addf %134, %135 : vector<64x32xf32>
    %cst_62 = arith.constant 0.000000e+00 : f32
    %137 = vector.broadcast %cst_62 : f32 to vector<64x32xf32>
    %138 = arith.maximumf %136, %137 : vector<64x32xf32>
    %cst_63 = arith.constant dense<0.000000e+00> : vector<64x8xf32>
    %139 = tpu.matmul %138, %14, %cst_63 {dimension_numbers = #tpu.dot_dimension_numbers<[1], [0], [0], [1], [0, 0, 1, 1], [], []>} : vector<64x32xf32>, vector<32x8xf32>, vector<64x8xf32> -> vector<64x8xf32>
    %140 = arith.addf %68, %139 : vector<64x8xf32>
    %141 = vector.broadcast %15 : vector<1x8xf32> to vector<64x8xf32>
    %142 = arith.addf %140, %141 : vector<64x8xf32>
    %143 = vector.extract_strided_slice %18 {offsets = [2, 0], sizes = [1, 8], strides = [1, 1]} : vector<6x8xf32> to vector<1x8xf32>
    %144 = vector.extract_strided_slice %18 {offsets = [3, 0], sizes = [1, 8], strides = [1, 1]} : vector<6x8xf32> to vector<1x8xf32>
    %cst_64 = arith.constant dense<0.000000e+00> : vector<64xf32>
    %145 = vector.multi_reduction <add>, %142, %cst_64 [1] : vector<64x8xf32> to vector<64xf32>
    %146 = vector.shape_cast %145 : vector<64xf32> to vector<64x1xf32>
    %cst_65 = arith.constant 8.000000e+00 : f32
    %147 = vector.broadcast %cst_65 : f32 to vector<64x1xf32>
    %148 = arith.divf %146, %147 : vector<64x1xf32>
    %149 = vector.broadcast %148 : vector<64x1xf32> to vector<64x8xf32>
    %150 = arith.subf %142, %149 : vector<64x8xf32>
    %151 = arith.mulf %150, %150 : vector<64x8xf32>
    %cst_66 = arith.constant dense<0.000000e+00> : vector<64xf32>
    %152 = vector.multi_reduction <add>, %151, %cst_66 [1] : vector<64x8xf32> to vector<64xf32>
    %153 = vector.shape_cast %152 : vector<64xf32> to vector<64x1xf32>
    %cst_67 = arith.constant 8.000000e+00 : f32
    %154 = vector.broadcast %cst_67 : f32 to vector<64x1xf32>
    %155 = arith.divf %153, %154 : vector<64x1xf32>
    %156 = vector.broadcast %148 : vector<64x1xf32> to vector<64x8xf32>
    %157 = arith.subf %142, %156 : vector<64x8xf32>
    %cst_68 = arith.constant 9.99999974E-6 : f32
    %158 = vector.broadcast %cst_68 : f32 to vector<64x1xf32>
    %159 = arith.addf %155, %158 : vector<64x1xf32>
    %160 = math.rsqrt %159 : vector<64x1xf32>
    %161 = vector.broadcast %160 : vector<64x1xf32> to vector<64x8xf32>
    %162 = arith.mulf %157, %161 : vector<64x8xf32>
    %163 = vector.broadcast %143 : vector<1x8xf32> to vector<64x8xf32>
    %164 = arith.mulf %162, %163 : vector<64x8xf32>
    %165 = vector.broadcast %144 : vector<1x8xf32> to vector<64x8xf32>
    %166 = arith.addf %164, %165 : vector<64x8xf32>
    %cst_69 = arith.constant dense<0.000000e+00> : vector<64x8xf32>
    %167 = tpu.matmul %166, %6, %cst_69 {dimension_numbers = #tpu.dot_dimension_numbers<[1], [0], [0], [1], [0, 0, 1, 1], [], []>} : vector<64x8xf32>, vector<8x8xf32>, vector<64x8xf32> -> vector<64x8xf32>
    %168 = vector.broadcast %7 : vector<1x8xf32> to vector<64x8xf32>
    %169 = arith.addf %167, %168 : vector<64x8xf32>
    %170 = vector.shape_cast %169 : vector<64x8xf32> to vector<4x16x8xf32>
    %171 = vector.shape_cast %1 : vector<4x16x8xf32> to vector<64x8xf32>
    %cst_70 = arith.constant dense<0.000000e+00> : vector<64x16xf32>
    %172 = tpu.matmul %171, %8, %cst_70 {dimension_numbers = #tpu.dot_dimension_numbers<[1], [0], [0], [1], [0, 0, 1, 1], [], []>} : vector<64x8xf32>, vector<8x16xf32>, vector<64x16xf32> -> vector<64x16xf32>
    %173 = vector.broadcast %9 : vector<1x16xf32> to vector<64x16xf32>
    %174 = arith.addf %172, %173 : vector<64x16xf32>
    %175 = vector.extract_strided_slice %174 {offsets = [0, 0], sizes = [64, 8], strides = [1, 1]} : vector<64x16xf32> to vector<64x8xf32>
    %176 = vector.shape_cast %175 : vector<64x8xf32> to vector<4x16x8xf32>
    %177 = vector.extract_strided_slice %174 {offsets = [0, 8], sizes = [64, 8], strides = [1, 1]} : vector<64x16xf32> to vector<64x8xf32>
    %178 = vector.shape_cast %177 : vector<64x8xf32> to vector<4x16x8xf32>
    %cst_71 = arith.constant dense<0.000000e+00> : vector<4x16x16xf32>
    %179 = tpu.matmul %170, %176, %cst_71 {dimension_numbers = #tpu.dot_dimension_numbers<[2], [2], [1], [1], [0, 0, 0, 1, 1, 1], [0], [0]>} : vector<4x16x8xf32>, vector<4x16x8xf32>, vector<4x16x16xf32> -> vector<4x16x16xf32>
    %cst_72 = arith.constant dense<0xFF800000> : vector<4x16xf32>
    %180 = vector.multi_reduction <maximumf>, %179, %cst_72 [2] : vector<4x16x16xf32> to vector<4x16xf32>
    %181 = vector.shape_cast %180 : vector<4x16xf32> to vector<4x16x1xf32>
    %182 = vector.broadcast %181 : vector<4x16x1xf32> to vector<4x16x16xf32>
    %183 = arith.subf %179, %182 : vector<4x16x16xf32>
    %184 = math.exp %183 : vector<4x16x16xf32>
    %cst_73 = arith.constant dense<0.000000e+00> : vector<4x16xf32>
    %185 = vector.multi_reduction <add>, %184, %cst_73 [2] : vector<4x16x16xf32> to vector<4x16xf32>
    %186 = vector.shape_cast %185 : vector<4x16xf32> to vector<4x16x1xf32>
    %187 = vector.broadcast %186 : vector<4x16x1xf32> to vector<4x16x16xf32>
    %188 = arith.divf %184, %187 : vector<4x16x16xf32>
    %cst_74 = arith.constant dense<0.000000e+00> : vector<4x16x8xf32>
    %189 = tpu.matmul %188, %178, %cst_74 {dimension_numbers = #tpu.dot_dimension_numbers<[2], [1], [1], [2], [0, 0, 0, 1, 1, 2], [0], [0]>} : vector<4x16x16xf32>, vector<4x16x8xf32>, vector<4x16x8xf32> -> vector<4x16x8xf32>
    %190 = vector.shape_cast %189 : vector<4x16x8xf32> to vector<64x8xf32>
    %cst_75 = arith.constant dense<0.000000e+00> : vector<64x8xf32>
    %191 = tpu.matmul %190, %10, %cst_75 {dimension_numbers = #tpu.dot_dimension_numbers<[1], [0], [0], [1], [0, 0, 1, 1], [], []>} : vector<64x8xf32>, vector<8x8xf32>, vector<64x8xf32> -> vector<64x8xf32>
    %192 = arith.addf %166, %191 : vector<64x8xf32>
    %193 = vector.broadcast %11 : vector<1x8xf32> to vector<64x8xf32>
    %194 = arith.addf %192, %193 : vector<64x8xf32>
    %195 = vector.shape_cast %194 : vector<64x8xf32> to vector<4x16x8xf32>
    %196 = vector.extract_strided_slice %16 {offsets = [2, 0, 0], sizes = [1, 32, 16], strides = [1, 1, 1]} : vector<3x32x16xf32> to vector<1x32x16xf32>
    %197 = vector.shape_cast %196 : vector<1x32x16xf32> to vector<32x16xf32>
    %198 = vector.extract_strided_slice %131 {offsets = [0, 0, 0], sizes = [1, 16, 8], strides = [1, 1, 1]} : vector<4x16x8xf32> to vector<1x16x8xf32>
    %199 = vector.shape_cast %198 : vector<1x16x8xf32> to vector<16x8xf32>
    %cst_76 = arith.constant dense<0.000000e+00> : vector<32x8xf32>
    %200 = tpu.matmul %197, %199, %cst_76 {dimension_numbers = #tpu.dot_dimension_numbers<[1], [0], [0], [1], [0, 0, 1, 1], [], []>} : vector<32x16xf32>, vector<16x8xf32>, vector<32x8xf32> -> vector<32x8xf32>
    %201 = vector.extract_strided_slice %131 {offsets = [1, 0, 0], sizes = [1, 16, 8], strides = [1, 1, 1]} : vector<4x16x8xf32> to vector<1x16x8xf32>
    %202 = vector.shape_cast %201 : vector<1x16x8xf32> to vector<16x8xf32>
    %cst_77 = arith.constant dense<0.000000e+00> : vector<32x8xf32>
    %203 = tpu.matmul %197, %202, %cst_77 {dimension_numbers = #tpu.dot_dimension_numbers<[1], [0], [0], [1], [0, 0, 1, 1], [], []>} : vector<32x16xf32>, vector<16x8xf32>, vector<32x8xf32> -> vector<32x8xf32>
    %204 = vector.extract_strided_slice %131 {offsets = [2, 0, 0], sizes = [1, 16, 8], strides = [1, 1, 1]} : vector<4x16x8xf32> to vector<1x16x8xf32>
    %205 = vector.shape_cast %204 : vector<1x16x8xf32> to vector<16x8xf32>
    %cst_78 = arith.constant dense<0.000000e+00> : vector<32x8xf32>
    %206 = tpu.matmul %197, %205, %cst_78 {dimension_numbers = #tpu.dot_dimension_numbers<[1], [0], [0], [1], [0, 0, 1, 1], [], []>} : vector<32x16xf32>, vector<16x8xf32>, vector<32x8xf32> -> vector<32x8xf32>
    %207 = vector.extract_strided_slice %131 {offsets = [3, 0, 0], sizes = [1, 16, 8], strides = [1, 1, 1]} : vector<4x16x8xf32> to vector<1x16x8xf32>
    %208 = vector.shape_cast %207 : vector<1x16x8xf32> to vector<16x8xf32>
    %cst_79 = arith.constant dense<0.000000e+00> : vector<32x8xf32>
    %209 = tpu.matmul %197, %208, %cst_79 {dimension_numbers = #tpu.dot_dimension_numbers<[1], [0], [0], [1], [0, 0, 1, 1], [], []>} : vector<32x16xf32>, vector<16x8xf32>, vector<32x8xf32> -> vector<32x8xf32>
    %210 = vector.shape_cast %200 : vector<32x8xf32> to vector<1x32x8xf32>
    %211 = vector.shape_cast %203 : vector<32x8xf32> to vector<1x32x8xf32>
    %212 = vector.shape_cast %206 : vector<32x8xf32> to vector<1x32x8xf32>
    %213 = vector.shape_cast %209 : vector<32x8xf32> to vector<1x32x8xf32>
    %214 = tpu.concatenate %210, %211, %212, %213 in 0 : vector<1x32x8xf32>, vector<1x32x8xf32>, vector<1x32x8xf32>, vector<1x32x8xf32> -> vector<4x32x8xf32>
    %215 = vector.extract_strided_slice %17 {offsets = [2, 0, 0], sizes = [1, 32, 1], strides = [1, 1, 1]} : vector<3x32x1xf32> to vector<1x32x1xf32>
    %216 = vector.shape_cast %215 : vector<1x32x1xf32> to vector<32x1xf32>
    %217 = vector.shape_cast %216 : vector<32x1xf32> to vector<1x32x1xf32>
    %218 = vector.broadcast %217 : vector<1x32x1xf32> to vector<4x32x8xf32>
    %219 = arith.addf %214, %218 : vector<4x32x8xf32>
    %220 = arith.negf %219 : vector<4x32x8xf32>
    %221 = math.exp %220 : vector<4x32x8xf32>
    %cst_80 = arith.constant 1.000000e+00 : f32
    %222 = vector.broadcast %cst_80 : f32 to vector<4x32x8xf32>
    %223 = arith.addf %222, %221 : vector<4x32x8xf32>
    %224 = arith.divf %222, %223 : vector<4x32x8xf32>
    %225 = vector.extract_strided_slice %224 {offsets = [0, 0, 0], sizes = [4, 16, 8], strides = [1, 1, 1]} : vector<4x32x8xf32> to vector<4x16x8xf32>
    %226 = vector.extract_strided_slice %224 {offsets = [0, 16, 0], sizes = [4, 16, 8], strides = [1, 1, 1]} : vector<4x32x8xf32> to vector<4x16x8xf32>
    %227 = arith.addf %195, %225 : vector<4x16x8xf32>
    %228 = arith.addf %227, %226 : vector<4x16x8xf32>
    %229 = vector.extract_strided_slice %18 {offsets = [4, 0], sizes = [1, 8], strides = [1, 1]} : vector<6x8xf32> to vector<1x8xf32>
    %230 = vector.extract_strided_slice %18 {offsets = [5, 0], sizes = [1, 8], strides = [1, 1]} : vector<6x8xf32> to vector<1x8xf32>
    %cst_81 = arith.constant dense<0.000000e+00> : vector<4x16xf32>
    %231 = vector.multi_reduction <add>, %228, %cst_81 [2] : vector<4x16x8xf32> to vector<4x16xf32>
    %232 = vector.shape_cast %231 : vector<4x16xf32> to vector<4x16x1xf32>
    %cst_82 = arith.constant 8.000000e+00 : f32
    %233 = vector.broadcast %cst_82 : f32 to vector<4x16x1xf32>
    %234 = arith.divf %232, %233 : vector<4x16x1xf32>
    %235 = vector.broadcast %234 : vector<4x16x1xf32> to vector<4x16x8xf32>
    %236 = arith.subf %228, %235 : vector<4x16x8xf32>
    %237 = arith.mulf %236, %236 : vector<4x16x8xf32>
    %cst_83 = arith.constant dense<0.000000e+00> : vector<4x16xf32>
    %238 = vector.multi_reduction <add>, %237, %cst_83 [2] : vector<4x16x8xf32> to vector<4x16xf32>
    %239 = vector.shape_cast %238 : vector<4x16xf32> to vector<4x16x1xf32>
    %cst_84 = arith.constant 8.000000e+00 : f32
    %240 = vector.broadcast %cst_84 : f32 to vector<4x16x1xf32>
    %241 = arith.divf %239, %240 : vector<4x16x1xf32>
    %242 = vector.broadcast %234 : vector<4x16x1xf32> to vector<4x16x8xf32>
    %243 = arith.subf %228, %242 : vector<4x16x8xf32>
    %cst_85 = arith.constant 9.99999974E-6 : f32
    %244 = vector.broadcast %cst_85 : f32 to vector<4x16x1xf32>
    %245 = arith.addf %241, %244 : vector<4x16x1xf32>
    %246 = math.rsqrt %245 : vector<4x16x1xf32>
    %247 = vector.broadcast %246 : vector<4x16x1xf32> to vector<4x16x8xf32>
    %248 = arith.mulf %243, %247 : vector<4x16x8xf32>
    %249 = vector.shape_cast %229 : vector<1x8xf32> to vector<1x1x8xf32>
    %250 = vector.broadcast %249 : vector<1x1x8xf32> to vector<4x16x8xf32>
    %251 = arith.mulf %248, %250 : vector<4x16x8xf32>
    %252 = vector.shape_cast %230 : vector<1x8xf32> to vector<1x1x8xf32>
    %253 = vector.broadcast %252 : vector<1x1x8xf32> to vector<4x16x8xf32>
    %254 = arith.addf %251, %253 : vector<4x16x8xf32>
    %c0_86 = arith.constant 0 : index
    %c0_87 = arith.constant 0 : index
    %c0_88 = arith.constant 0 : index
    %255 = vector.load %arg20[%c0_86, %c0_87, %c0_88] : memref<4x16x8xf32, #tpu.memory_space<vmem>>, vector<4x16x8xf32>
    tpu.vector_store %arg20[%c0_86, %c0_87, %c0_88], %254 {strides = array<i32>} : memref<4x16x8xf32, #tpu.memory_space<vmem>>, vector<4x16x8xf32>,
    return
  }
  func.func @transform_0(%arg0: i32) -> (i32, i32, i32) {
    %c0_i32 = arith.constant 0 : i32
    %c0_i32_0 = arith.constant 0 : i32
    %c0_i32_1 = arith.constant 0 : i32
    return %arg0, %c0_i32, %c0_i32_0 : i32, i32, i32
  }
  func.func @transform_1(%arg0: i32) -> (i32, i32, i32) {
    %c0_i32 = arith.constant 0 : i32
    %c0_i32_0 = arith.constant 0 : i32
    %c0_i32_1 = arith.constant 0 : i32
    return %arg0, %c0_i32, %c0_i32_0 : i32, i32, i32
  }
  func.func @transform_2(%arg0: i32) -> (i32, i32) {
    %c0_i32 = arith.constant 0 : i32
    %c0_i32_0 = arith.constant 0 : i32
    %c0_i32_1 = arith.constant 0 : i32
    return %c0_i32, %c0_i32_0 : i32, i32
  }
  func.func @transform_3(%arg0: i32) -> (i32, i32) {
    %c0_i32 = arith.constant 0 : i32
    %c0_i32_0 = arith.constant 0 : i32
    %c0_i32_1 = arith.constant 0 : i32
    return %c0_i32, %c0_i32_0 : i32, i32
  }
  func.func @transform_4(%arg0: i32) -> (i32, i32) {
    %c0_i32 = arith.constant 0 : i32
    %c0_i32_0 = arith.constant 0 : i32
    %c0_i32_1 = arith.constant 0 : i32
    return %c0_i32, %c0_i32_0 : i32, i32
  }
  func.func @transform_5(%arg0: i32) -> (i32, i32) {
    %c0_i32 = arith.constant 0 : i32
    %c0_i32_0 = arith.constant 0 : i32
    %c0_i32_1 = arith.constant 0 : i32
    return %c0_i32, %c0_i32_0 : i32, i32
  }
  func.func @transform_6(%arg0: i32) -> (i32, i32) {
    %c0_i32 = arith.constant 0 : i32
    %c0_i32_0 = arith.constant 0 : i32
    %c0_i32_1 = arith.constant 0 : i32
    return %c0_i32, %c0_i32_0 : i32, i32
  }
  func.func @transform_7(%arg0: i32) -> (i32, i32) {
    %c0_i32 = arith.constant 0 : i32
    %c0_i32_0 = arith.constant 0 : i32
    %c0_i32_1 = arith.constant 0 : i32
    return %c0_i32, %c0_i32_0 : i32, i32
  }
  func.func @transform_8(%arg0: i32) -> (i32, i32) {
    %c0_i32 = arith.constant 0 : i32
    %c0_i32_0 = arith.constant 0 : i32
    %c0_i32_1 = arith.constant 0 : i32
    return %c0_i32, %c0_i32_0 : i32, i32
  }
  func.func @transform_9(%arg0: i32) -> (i32, i32) {
    %c0_i32 = arith.constant 0 : i32
    %c0_i32_0 = arith.constant 0 : i32
    %c0_i32_1 = arith.constant 0 : i32
    return %c0_i32, %c0_i32_0 : i32, i32
  }
  func.func @transform_10(%arg0: i32) -> (i32, i32) {
    %c0_i32 = arith.constant 0 : i32
    %c0_i32_0 = arith.constant 0 : i32
    %c0_i32_1 = arith.constant 0 : i32
    return %c0_i32, %c0_i32_0 : i32, i32
  }
  func.func @transform_11(%arg0: i32) -> (i32, i32) {
    %c0_i32 = arith.constant 0 : i32
    %c0_i32_0 = arith.constant 0 : i32
    %c0_i32_1 = arith.constant 0 : i32
    return %c0_i32, %c0_i32_0 : i32, i32
  }
  func.func @transform_12(%arg0: i32) -> (i32, i32) {
    %c0_i32 = arith.constant 0 : i32
    %c0_i32_0 = arith.constant 0 : i32
    %c0_i32_1 = arith.constant 0 : i32
    return %c0_i32, %c0_i32_0 : i32, i32
  }
  func.func @transform_13(%arg0: i32) -> (i32, i32) {
    %c0_i32 = arith.constant 0 : i32
    %c0_i32_0 = arith.constant 0 : i32
    %c0_i32_1 = arith.constant 0 : i32
    return %c0_i32, %c0_i32_0 : i32, i32
  }
  func.func @transform_14(%arg0: i32) -> (i32, i32) {
    %c0_i32 = arith.constant 0 : i32
    %c0_i32_0 = arith.constant 0 : i32
    %c0_i32_1 = arith.constant 0 : i32
    return %c0_i32, %c0_i32_0 : i32, i32
  }
  func.func @transform_15(%arg0: i32) -> (i32, i32) {
    %c0_i32 = arith.constant 0 : i32
    %c0_i32_0 = arith.constant 0 : i32
    %c0_i32_1 = arith.constant 0 : i32
    return %c0_i32, %c0_i32_0 : i32, i32
  }
  func.func @transform_16(%arg0: i32) -> (i32, i32, i32) {
    %c0_i32 = arith.constant 0 : i32
    %c0_i32_0 = arith.constant 0 : i32
    %c0_i32_1 = arith.constant 0 : i32
    %c0_i32_2 = arith.constant 0 : i32
    return %c0_i32, %c0_i32_0, %c0_i32_1 : i32, i32, i32
  }
  func.func @transform_17(%arg0: i32) -> (i32, i32, i32) {
    %c0_i32 = arith.constant 0 : i32
    %c0_i32_0 = arith.constant 0 : i32
    %c0_i32_1 = arith.constant 0 : i32
    %c0_i32_2 = arith.constant 0 : i32
    return %c0_i32, %c0_i32_0, %c0_i32_1 : i32, i32, i32
  }
  func.func @transform_18(%arg0: i32) -> (i32, i32) {
    %c0_i32 = arith.constant 0 : i32
    %c0_i32_0 = arith.constant 0 : i32
    %c0_i32_1 = arith.constant 0 : i32
    return %c0_i32, %c0_i32_0 : i32, i32
  }
  func.func @transform_19(%arg0: i32) -> (i32, i32, i32) {
    %c0_i32 = arith.constant 0 : i32
    %c0_i32_0 = arith.constant 0 : i32
    %c0_i32_1 = arith.constant 0 : i32
    return %arg0, %c0_i32, %c0_i32_0 : i32, i32, i32
  }
}

</mosaic_0001>

<llo_original>
// kernel: tpu_custom_call.1
$region0: #{tpu_custom_call.1}
  #allocation0 [shape = 'u32[]', space=smem, size = 0x4, offset = 0x4, fixed_abs, tag = 'smem constant byte address 0x4 - core index']
  #allocation1 [shape = 'u32[144,128]{1,0:T(1,128)}', space=vmem, size = 0x12000, scoped, tag = 'internal scratch']
  %s0 = inlined_call_operand.vmem [shape: f32[4,16,8], index: 0, kind: input, shape index: {}]
  %s1 = inlined_call_operand.vmem [shape: f32[4,16,8], index: 1, kind: input, shape index: {}]
  %s2 = inlined_call_operand.vmem [shape: f32[8,24], index: 2, kind: input, shape index: {}]
  %s3 = inlined_call_operand.vmem [shape: f32[1,24], index: 3, kind: input, shape index: {}]
  %s4 = inlined_call_operand.vmem [shape: f32[8,8], index: 4, kind: input, shape index: {}]
  %s5 = inlined_call_operand.vmem [shape: f32[1,8], index: 5, kind: input, shape index: {}]
  %s6 = inlined_call_operand.vmem [shape: f32[8,8], index: 6, kind: input, shape index: {}]
  %s7 = inlined_call_operand.vmem [shape: f32[1,8], index: 7, kind: input, shape index: {}]
  %s8 = inlined_call_operand.vmem [shape: f32[8,16], index: 8, kind: input, shape index: {}]
  %s9 = inlined_call_operand.vmem [shape: f32[1,16], index: 9, kind: input, shape index: {}]
  %s10 = inlined_call_operand.vmem [shape: f32[8,8], index: 10, kind: input, shape index: {}]
  %s11 = inlined_call_operand.vmem [shape: f32[1,8], index: 11, kind: input, shape index: {}]
  %s12 = inlined_call_operand.vmem [shape: f32[24,32], index: 12, kind: input, shape index: {}]
  %s13 = inlined_call_operand.vmem [shape: f32[1,32], index: 13, kind: input, shape index: {}]
  %s14 = inlined_call_operand.vmem [shape: f32[32,8], index: 14, kind: input, shape index: {}]
  %s15 = inlined_call_operand.vmem [shape: f32[1,8], index: 15, kind: input, shape index: {}]
  %s16 = inlined_call_operand.vmem [shape: f32[3,32,16], index: 16, kind: input, shape index: {}]
  %s17 = inlined_call_operand.vmem [shape: f32[3,32,1], index: 17, kind: input, shape index: {}]
  %s18 = inlined_call_operand.vmem [shape: f32[6,8], index: 18, kind: input, shape index: {}]
  %s19 = inlined_call_operand.vmem [shape: f32[4,16,8], index: 19, kind: output, shape index: {}]
  %s20 = sld [smem:[#allocation0]]
  $region86: #{tpu_custom_call.1} parent=0
    _
  %s22 = ssub.s32 1, %s20
  %s23 = scalar_select 0, %s22, %s20
  // Predicated region
  $region2: #{tpu_custom_call.1} parent=0 // pred_check
    _
  $region3: #{tpu_custom_call.1} parent=0 // pred_check_branch
    %25 = sbr.rel (0) target = $region5
  $region4: #{tpu_custom_call.1} parent=0 // pred_region
    _
  $region5: #{tpu_custom_call.1} parent=0 // pred_fallthru
    _
  // Predicated region
  $region6: #{tpu_custom_call.1} parent=0 // pred_check
    _
  $region7: #{tpu_custom_call.1} parent=0 // pred_check_branch
    %27 = sbr.rel (0) target = $region9
  $region8: #{tpu_custom_call.1} parent=0 // pred_region
    _
  $region9: #{tpu_custom_call.1} parent=0 // pred_fallthru
    _
  // Predicated region
  $region10: #{tpu_custom_call.1} parent=0 // pred_check
    _
  $region11: #{tpu_custom_call.1} parent=0 // pred_check_branch
    %29 = sbr.rel (0) target = $region13
  $region12: #{tpu_custom_call.1} parent=0 // pred_region
    _
  $region13: #{tpu_custom_call.1} parent=0 // pred_fallthru
    _
  // Predicated region
  $region14: #{tpu_custom_call.1} parent=0 // pred_check
    _
  $region15: #{tpu_custom_call.1} parent=0 // pred_check_branch
    %31 = sbr.rel (0) target = $region17
  $region16: #{tpu_custom_call.1} parent=0 // pred_region
    _
  $region17: #{tpu_custom_call.1} parent=0 // pred_fallthru
    _
  // Predicated region
  $region18: #{tpu_custom_call.1} parent=0 // pred_check
    _
  $region19: #{tpu_custom_call.1} parent=0 // pred_check_branch
    %33 = sbr.rel (0) target = $region21
  $region20: #{tpu_custom_call.1} parent=0 // pred_region
    _
  $region21: #{tpu_custom_call.1} parent=0 // pred_fallthru
    _
  // Predicated region
  $region22: #{tpu_custom_call.1} parent=0 // pred_check
    _
  $region23: #{tpu_custom_call.1} parent=0 // pred_check_branch
    %35 = sbr.rel (0) target = $region25
  $region24: #{tpu_custom_call.1} parent=0 // pred_region
    _
  $region25: #{tpu_custom_call.1} parent=0 // pred_fallthru
    _
  // Predicated region
  $region26: #{tpu_custom_call.1} parent=0 // pred_check
    _
  $region27: #{tpu_custom_call.1} parent=0 // pred_check_branch
    %37 = sbr.rel (0) target = $region29
  $region28: #{tpu_custom_call.1} parent=0 // pred_region
    _
  $region29: #{tpu_custom_call.1} parent=0 // pred_fallthru
    _
  // Predicated region
  $region30: #{tpu_custom_call.1} parent=0 // pred_check
    _
  $region31: #{tpu_custom_call.1} parent=0 // pred_check_branch
    %39 = sbr.rel (0) target = $region33
  $region32: #{tpu_custom_call.1} parent=0 // pred_region
    _
  $region33: #{tpu_custom_call.1} parent=0 // pred_fallthru
    _
  // Predicated region
  $region34: #{tpu_custom_call.1} parent=0 // pred_check
    _
  $region35: #{tpu_custom_call.1} parent=0 // pred_check_branch
    %41 = sbr.rel (0) target = $region37
  $region36: #{tpu_custom_call.1} parent=0 // pred_region
    _
  $region37: #{tpu_custom_call.1} parent=0 // pred_fallthru
    _
  // Predicated region
  $region38: #{tpu_custom_call.1} parent=0 // pred_check
    _
  $region39: #{tpu_custom_call.1} parent=0 // pred_check_branch
    %43 = sbr.rel (0) target = $region41
  $region40: #{tpu_custom_call.1} parent=0 // pred_region
    _
  $region41: #{tpu_custom_call.1} parent=0 // pred_fallthru
    _
  // Predicated region
  $region42: #{tpu_custom_call.1} parent=0 // pred_check
    _
  $region43: #{tpu_custom_call.1} parent=0 // pred_check_branch
    %45 = sbr.rel (0) target = $region45
  $region44: #{tpu_custom_call.1} parent=0 // pred_region
    _
  $region45: #{tpu_custom_call.1} parent=0 // pred_fallthru
    _
  // Predicated region
  $region46: #{tpu_custom_call.1} parent=0 // pred_check
    _
  $region47: #{tpu_custom_call.1} parent=0 // pred_check_branch
    %47 = sbr.rel (0) target = $region49
  $region48: #{tpu_custom_call.1} parent=0 // pred_region
    _
  $region49: #{tpu_custom_call.1} parent=0 // pred_fallthru
    _
  // Predicated region
  $region50: #{tpu_custom_call.1} parent=0 // pred_check
    _
  $region51: #{tpu_custom_call.1} parent=0 // pred_check_branch
    %49 = sbr.rel (0) target = $region53
  $region52: #{tpu_custom_call.1} parent=0 // pred_region
    _
  $region53: #{tpu_custom_call.1} parent=0 // pred_fallthru
    _
  // Predicated region
  $region54: #{tpu_custom_call.1} parent=0 // pred_check
    _
  $region55: #{tpu_custom_call.1} parent=0 // pred_check_branch
    %51 = sbr.rel (0) target = $region57
  $region56: #{tpu_custom_call.1} parent=0 // pred_region
    _
  $region57: #{tpu_custom_call.1} parent=0 // pred_fallthru
    _
  // Predicated region
  $region58: #{tpu_custom_call.1} parent=0 // pred_check
    _
  $region59: #{tpu_custom_call.1} parent=0 // pred_check_branch
    %53 = sbr.rel (0) target = $region61
  $region60: #{tpu_custom_call.1} parent=0 // pred_region
    _
  $region61: #{tpu_custom_call.1} parent=0 // pred_fallthru
    _
  // Predicated region
  $region62: #{tpu_custom_call.1} parent=0 // pred_check
    _
  $region63: #{tpu_custom_call.1} parent=0 // pred_check_branch
    %55 = sbr.rel (0) target = $region65
  $region64: #{tpu_custom_call.1} parent=0 // pred_region
    _
  $region65: #{tpu_custom_call.1} parent=0 // pred_fallthru
    _
  // Predicated region
  $region66: #{tpu_custom_call.1} parent=0 // pred_check
    _
  $region67: #{tpu_custom_call.1} parent=0 // pred_check_branch
    %57 = sbr.rel (0) target = $region69
  $region68: #{tpu_custom_call.1} parent=0 // pred_region
    _
  $region69: #{tpu_custom_call.1} parent=0 // pred_fallthru
    _
  // Predicated region
  $region70: #{tpu_custom_call.1} parent=0 // pred_check
    _
  $region71: #{tpu_custom_call.1} parent=0 // pred_check_branch
    %59 = sbr.rel (0) target = $region73
  $region72: #{tpu_custom_call.1} parent=0 // pred_region
    _
  $region73: #{tpu_custom_call.1} parent=0 // pred_fallthru
    _
  // Predicated region
  $region74: #{tpu_custom_call.1} parent=0 // pred_check
    _
  $region75: #{tpu_custom_call.1} parent=0 // pred_check_branch
    %61 = sbr.rel (0) target = $region77
  $region76: #{tpu_custom_call.1} parent=0 // pred_region
    _
  $region77: #{tpu_custom_call.1} parent=0 // pred_fallthru
    _
  %v62 = vld [vmem:[%s0] sm:$0xff]
  %v63 = vld [vmem:[%s0 + $0x8] sm:$0xff]
  %v64 = vld [vmem:[%s0 + $0x10] sm:$0xff]
  %v65 = vld [vmem:[%s0 + $0x18] sm:$0xff]
  %v66 = vld [vmem:[%s0 + $0x20] sm:$0xff]
  %v67 = vld [vmem:[%s0 + $0x28] sm:$0xff]
  %v68 = vld [vmem:[%s0 + $0x30] sm:$0xff]
  %v69 = vld [vmem:[%s0 + $0x38] sm:$0xff]
  %v70 = vld [vmem:[%s1] sm:$0xff]
  %v71 = vld [vmem:[%s1 + $0x8] sm:$0xff]
  %v72 = vld [vmem:[%s1 + $0x10] sm:$0xff]
  %v73 = vld [vmem:[%s1 + $0x18] sm:$0xff]
  %v74 = vld [vmem:[%s1 + $0x20] sm:$0xff]
  %v75 = vld [vmem:[%s1 + $0x28] sm:$0xff]
  %v76 = vld [vmem:[%s1 + $0x30] sm:$0xff]
  %v77 = vld [vmem:[%s1 + $0x38] sm:$0xff]
  %v78 = vld [vmem:[%s2] sm:$0xff]
  %v79 = vld [vmem:[%s3] sm:$0x1]
  %v80 = vld [vmem:[%s4] sm:$0xff]
  %v81 = vld [vmem:[%s5] sm:$0x1]
  %v82 = vld [vmem:[%s6] sm:$0xff]
  %v83 = vld [vmem:[%s7] sm:$0x1]
  %v84 = vld [vmem:[%s8] sm:$0xff]
  %v85 = vld [vmem:[%s9] sm:$0x1]
  %v86 = vld [vmem:[%s10] sm:$0xff]
  %v87 = vld [vmem:[%s11] sm:$0x1]
  %v88 = vld [vmem:[%s12] sm:$0xff]
  %v89 = vld [vmem:[%s12 + $0x8] sm:$0xff]
  %v90 = vld [vmem:[%s12 + $0x10] sm:$0xff]
  %v91 = vld [vmem:[%s13] sm:$0x1]
  %v92 = vld [vmem:[%s14] sm:$0xff]
  %v93 = vld [vmem:[%s14 + $0x8] sm:$0xff]
  %v94 = vld [vmem:[%s14 + $0x10] sm:$0xff]
  %v95 = vld [vmem:[%s14 + $0x18] sm:$0xff]
  %v96 = vld [vmem:[%s15] sm:$0x1]
  %v97 = vld [vmem:[%s16] sm:$0xff]
  %v98 = vld [vmem:[%s16 + $0x8] sm:$0xff]
  %v99 = vld [vmem:[%s16 + $0x10] sm:$0xff]
  %v100 = vld [vmem:[%s16 + $0x18] sm:$0xff]
  %v101 = vld [vmem:[%s16 + $0x20] sm:$0xff]
  %v102 = vld [vmem:[%s16 + $0x28] sm:$0xff]
  %v103 = vld [vmem:[%s16 + $0x30] sm:$0xff]
  %v104 = vld [vmem:[%s16 + $0x38] sm:$0xff]
  %v105 = vld [vmem:[%s16 + $0x40] sm:$0xff]
  %v106 = vld [vmem:[%s16 + $0x48] sm:$0xff]
  %v107 = vld [vmem:[%s16 + $0x50] sm:$0xff]
  %v108 = vld [vmem:[%s16 + $0x58] sm:$0xff]
  %v109 = vld [vmem:[%s17] sm:$0xff]
  %v110 = vld [vmem:[%s17 + $0x8] sm:$0xff]
  %v111 = vld [vmem:[%s17 + $0x10] sm:$0xff]
  %v112 = vld [vmem:[%s17 + $0x18] sm:$0xff]
  %v113 = vld [vmem:[%s17 + $0x20] sm:$0xff]
  %v114 = vld [vmem:[%s17 + $0x28] sm:$0xff]
  %v115 = vld [vmem:[%s17 + $0x30] sm:$0xff]
  %v116 = vld [vmem:[%s17 + $0x38] sm:$0xff]
  %v117 = vld [vmem:[%s17 + $0x40] sm:$0xff]
  %v118 = vld [vmem:[%s17 + $0x48] sm:$0xff]
  %v119 = vld [vmem:[%s17 + $0x50] sm:$0xff]
  %v120 = vld [vmem:[%s17 + $0x58] sm:$0xff]
  %v121 = vld [vmem:[%s18] sm:$0x3f]
  %v123 = vlaneseq
  %v124 = vshrl.u32 %v123, 7
  %v125 = vsub.s32 0, %v124
  %v126 = vrot.slane %v79, %v125
  %vm128 = vcmask 64512
  %v130 = vsel %vm128, %v62, 0
  %v133 = vsel %vm128, %v63, 0
  %v136 = vsel %vm128, %v64, 0
  %v139 = vsel %vm128, %v65, 0
  %v142 = vsel %vm128, %v66, 0
  %v145 = vsel %vm128, %v67, 0
  %v148 = vsel %vm128, %v68, 0
  %v151 = vsel %vm128, %v69, 0
  %153 = vmatprep.subr.mxu0 0.0
  %154 = vmatpush1.msra.mxu0 %v78
  %155 = vmatprep.subr.mxu0 0.0
  %156 = vmatpush1.msra.mxu0 0.0
  %157 = vmatprep.subr.mxu0 0.0
  %158 = vmatpush1.msra.mxu0 0.0
  %159 = vmatprep.subr.mxu0 0.0
  %160 = vmatpush1.msra.mxu0 0.0
  %161 = vmatprep.subr.mxu0 0.0
  %162 = vmatpush1.msra.mxu0 0.0
  %163 = vmatprep.subr.mxu0 0.0
  %164 = vmatpush1.msra.mxu0 0.0
  %165 = vmatprep.subr.mxu0 0.0
  %166 = vmatpush1.msra.mxu0 0.0
  %167 = vmatprep.subr.mxu0 0.0
  %168 = vmatpush1.msra.mxu0 0.0
  %169 = vmatprep.subr.mxu0 0.0
  %170 = vmatpush1.msra.mxu0 0.0
  %171 = vmatprep.subr.mxu0 0.0
  %172 = vmatpush1.msra.mxu0 0.0
  %173 = vmatprep.subr.mxu0 0.0
  %174 = vmatpush1.msra.mxu0 0.0
  %175 = vmatprep.subr.mxu0 0.0
  %176 = vmatpush1.msra.mxu0 0.0
  %177 = vmatprep.subr.mxu0 0.0
  %178 = vmatpush1.msra.mxu0 0.0
  %179 = vmatprep.subr.mxu0 0.0
  %180 = vmatpush1.msra.mxu0 0.0
  %181 = vmatprep.subr.mxu0 0.0
  %182 = vmatpush1.msra.mxu0 0.0
  %183 = vmatprep.subr.mxu0 0.0
  %184 = vmatpush1.msra.mxu0 0.0
  %185 = vmatprep.subr.mxu0 0.0
  %186 = vmatpush1.msra.mxu0 0.0
  %187 = vmatprep.subr.mxu0 0.0
  %188 = vmatpush1.msra.mxu0 0.0
  %189 = vmatprep.subr.mxu0 0.0
  %190 = vmatpush1.msra.mxu0 0.0
  %191 = vmatprep.subr.mxu0 0.0
  %192 = vmatpush1.msra.mxu0 0.0
  %193 = vmatprep.subr.mxu0 0.0
  %194 = vmatpush1.msra.mxu0 0.0
  %195 = vmatprep.subr.mxu0 0.0
  %196 = vmatpush1.msra.mxu0 0.0
  %197 = vmatprep.subr.mxu0 0.0
  %198 = vmatpush1.msra.mxu0 0.0
  %199 = vmatprep.subr.mxu0 0.0
  %200 = vmatpush1.msra.mxu0 0.0
  %201 = vmatprep.subr.mxu0 0.0
  %202 = vmatpush1.msra.mxu0 0.0
  %203 = vmatprep.subr.mxu0 0.0
  %204 = vmatpush1.msra.mxu0 0.0
  %205 = vmatprep.subr.mxu0 0.0
  %206 = vmatpush1.msra.mxu0 0.0
  %207 = vmatprep.subr.mxu0 0.0
  %208 = vmatpush1.msra.mxu0 0.0
  %209 = vmatprep.subr.mxu0 0.0
  %210 = vmatpush1.msra.mxu0 0.0
  %211 = vmatprep.subr.mxu0 0.0
  %212 = vmatpush1.msra.mxu0 0.0
  %213 = vmatprep.subr.mxu0 0.0
  %214 = vmatpush1.msra.mxu0 0.0
  %215 = vmatprep.subr.mxu0 0.0
  %216 = vmatpush1.msra.mxu0 0.0
  %217 = vmatprep.mubr.f32.mxu0 0.0
  %218 = vmatmul.mubr.f32.gmra.mrb[0].mxu0 %v130
  %v219 = vpop.f32.mrb[0].mxu0
  %v220 = vadd.f32 %v126, %v219
  %v221 = vpop.f32.mrb[0].mxu0
  %222 = vmatprep.mubr.f32.mxu0 0.0
  %223 = vmatmul.mubr.f32.gmra.mrb[0].mxu0 %v133
  %v224 = vpop.f32.mrb[0].mxu0
  %v225 = vadd.f32 %v126, %v224
  %v226 = vpop.f32.mrb[0].mxu0
  %227 = vmatprep.mubr.f32.mxu0 0.0
  %228 = vmatmul.mubr.f32.gmra.mrb[0].mxu0 %v136
  %v229 = vpop.f32.mrb[0].mxu0
  %v230 = vadd.f32 %v126, %v229
  %v231 = vpop.f32.mrb[0].mxu0
  %232 = vmatprep.mubr.f32.mxu0 0.0
  %233 = vmatmul.mubr.f32.gmra.mrb[0].mxu0 %v139
  %v234 = vpop.f32.mrb[0].mxu0
  %v235 = vadd.f32 %v126, %v234
  %v236 = vpop.f32.mrb[0].mxu0
  %237 = vmatprep.mubr.f32.mxu0 0.0
  %238 = vmatmul.mubr.f32.gmra.mrb[0].mxu0 %v142
  %v239 = vpop.f32.mrb[0].mxu0
  %v240 = vadd.f32 %v126, %v239
  %v241 = vpop.f32.mrb[0].mxu0
  %242 = vmatprep.mubr.f32.mxu0 0.0
  %243 = vmatmul.mubr.f32.gmra.mrb[0].mxu0 %v145
  %v244 = vpop.f32.mrb[0].mxu0
  %v245 = vadd.f32 %v126, %v244
  %v246 = vpop.f32.mrb[0].mxu0
  %247 = vmatprep.mubr.f32.mxu0 0.0
  %248 = vmatmul.mubr.f32.gmra.mrb[0].mxu0 %v148
  %v249 = vpop.f32.mrb[0].mxu0
  %v250 = vadd.f32 %v126, %v249
  %v251 = vpop.f32.mrb[0].mxu0
  %252 = vmatprep.mubr.f32.mxu0 0.0
  %253 = vmatmul.mubr.f32.gmra.mrb[0].mxu0 %v151
  %v254 = vpop.f32.mrb[0].mxu0
  %v255 = vadd.f32 %v126, %v254
  %v256 = vpop.f32.mrb[0].mxu0
  %257 = vdwg.mxu0
  %260 = vrot.lane.b32.xlu0 %v220, 120
  %v261 = vpop.permute.xlu0 %260
  %262 = vrot.lane.b32.xlu0 %v225, 120
  %v263 = vpop.permute.xlu0 %262
  %v264 = vsel %vm128, %v220, 0
  %v266 = vsel %vm128, %v225, 0
  %v268 = vsel %vm128, %v261, 0
  %v270 = vsel %vm128, %v263, 0
  %272 = vmatprep.subr.mxu0 0.0
  %273 = vmatpush1.xpose.msra.mxu0 %v268
  %274 = vmatprep.subr.mxu0 0.0
  %275 = vmatpush1.xpose.msra.mxu0 %v270
  %276 = vmatprep.subr.mxu0 0.0
  %277 = vmatpush1.xpose.msra.mxu0 0.0
  %278 = vmatprep.subr.mxu0 0.0
  %279 = vmatpush1.xpose.msra.mxu0 0.0
  %280 = vmatprep.subr.mxu0 0.0
  %281 = vmatpush1.xpose.msra.mxu0 0.0
  %282 = vmatprep.subr.mxu0 0.0
  %283 = vmatpush1.xpose.msra.mxu0 0.0
  %284 = vmatprep.subr.mxu0 0.0
  %285 = vmatpush1.xpose.msra.mxu0 0.0
  %286 = vmatprep.subr.mxu0 0.0
  %287 = vmatpush1.xpose.msra.mxu0 0.0
  %288 = vmatprep.subr.mxu0 0.0
  %289 = vmatpush1.xpose.msra.mxu0 0.0
  %290 = vmatprep.subr.mxu0 0.0
  %291 = vmatpush1.xpose.msra.mxu0 0.0
  %292 = vmatprep.subr.mxu0 0.0
  %293 = vmatpush1.xpose.msra.mxu0 0.0
  %294 = vmatprep.subr.mxu0 0.0
  %295 = vmatpush1.xpose.msra.mxu0 0.0
  %296 = vmatprep.subr.mxu0 0.0
  %297 = vmatpush1.xpose.msra.mxu0 0.0
  %298 = vmatprep.subr.mxu0 0.0
  %299 = vmatpush1.xpose.msra.mxu0 0.0
  %300 = vmatprep.subr.mxu0 0.0
  %301 = vmatpush1.xpose.msra.mxu0 0.0
  %302 = vmatprep.subr.mxu0 0.0
  %303 = vmatpush1.xpose.msra.mxu0 0.0
  %304 = vmatprep.subr.mxu0 0.0
  %305 = vmatpush1.xpose.msra.mxu0 0.0
  %306 = vmatprep.subr.mxu0 0.0
  %307 = vmatpush1.xpose.msra.mxu0 0.0
  %308 = vmatprep.subr.mxu0 0.0
  %309 = vmatpush1.xpose.msra.mxu0 0.0
  %310 = vmatprep.subr.mxu0 0.0
  %311 = vmatpush1.xpose.msra.mxu0 0.0
  %312 = vmatprep.subr.mxu0 0.0
  %313 = vmatpush1.xpose.msra.mxu0 0.0
  %314 = vmatprep.subr.mxu0 0.0
  %315 = vmatpush1.xpose.msra.mxu0 0.0
  %316 = vmatprep.subr.mxu0 0.0
  %317 = vmatpush1.xpose.msra.mxu0 0.0
  %318 = vmatprep.subr.mxu0 0.0
  %319 = vmatpush1.xpose.msra.mxu0 0.0
  %320 = vmatprep.subr.mxu0 0.0
  %321 = vmatpush1.xpose.msra.mxu0 0.0
  %322 = vmatprep.subr.mxu0 0.0
  %323 = vmatpush1.xpose.msra.mxu0 0.0
  %324 = vmatprep.subr.mxu0 0.0
  %325 = vmatpush1.xpose.msra.mxu0 0.0
  %326 = vmatprep.subr.mxu0 0.0
  %327 = vmatpush1.xpose.msra.mxu0 0.0
  %328 = vmatprep.subr.mxu0 0.0
  %329 = vmatpush1.xpose.msra.mxu0 0.0
  %330 = vmatprep.subr.mxu0 0.0
  %331 = vmatpush1.xpose.msra.mxu0 0.0
  %332 = vmatprep.subr.mxu0 0.0
  %333 = vmatpush1.xpose.msra.mxu0 0.0
  %334 = vmatprep.subr.mxu0 0.0
  %335 = vmatpush1.xpose.msra.mxu0 0.0
  %336 = vmatprep.mubr.f32.mxu0 0.0
  %337 = vmatmul.mubr.f32.gmra.mrb[0].mxu0 %v264
  %v338 = vpop.f32.mrb[0].mxu0
  %v339 = vadd.f32 0.0, %v338
  %v340 = vpop.f32.mrb[0].mxu0
  %341 = vmatprep.mubr.f32.mxu0 0.0
  %342 = vmatmul.mubr.f32.gmra.mrb[0].mxu0 %v266
  %v343 = vpop.f32.mrb[0].mxu0
  %v344 = vadd.f32 0.0, %v343
  %v345 = vpop.f32.mrb[0].mxu0
  %346 = vdwg.mxu0
  %349 = vrot.lane.b32.xlu0 %v230, 120
  %v350 = vpop.permute.xlu0 %349
  %351 = vrot.lane.b32.xlu0 %v235, 120
  %v352 = vpop.permute.xlu0 %351
  %v353 = vsel %vm128, %v230, 0
  %v355 = vsel %vm128, %v235, 0
  %v357 = vsel %vm128, %v350, 0
  %v359 = vsel %vm128, %v352, 0
  %361 = vmatprep.subr.mxu0 0.0
  %362 = vmatpush1.xpose.msra.mxu0 %v357
  %363 = vmatprep.subr.mxu0 0.0
  %364 = vmatpush1.xpose.msra.mxu0 %v359
  %365 = vmatprep.subr.mxu0 0.0
  %366 = vmatpush1.xpose.msra.mxu0 0.0
  %367 = vmatprep.subr.mxu0 0.0
  %368 = vmatpush1.xpose.msra.mxu0 0.0
  %369 = vmatprep.subr.mxu0 0.0
  %370 = vmatpush1.xpose.msra.mxu0 0.0
  %371 = vmatprep.subr.mxu0 0.0
  %372 = vmatpush1.xpose.msra.mxu0 0.0
  %373 = vmatprep.subr.mxu0 0.0
  %374 = vmatpush1.xpose.msra.mxu0 0.0
  %375 = vmatprep.subr.mxu0 0.0
  %376 = vmatpush1.xpose.msra.mxu0 0.0
  %377 = vmatprep.subr.mxu0 0.0
  %378 = vmatpush1.xpose.msra.mxu0 0.0
  %379 = vmatprep.subr.mxu0 0.0
  %380 = vmatpush1.xpose.msra.mxu0 0.0
  %381 = vmatprep.subr.mxu0 0.0
  %382 = vmatpush1.xpose.msra.mxu0 0.0
  %383 = vmatprep.subr.mxu0 0.0
  %384 = vmatpush1.xpose.msra.mxu0 0.0
  %385 = vmatprep.subr.mxu0 0.0
  %386 = vmatpush1.xpose.msra.mxu0 0.0
  %387 = vmatprep.subr.mxu0 0.0
  %388 = vmatpush1.xpose.msra.mxu0 0.0
  %389 = vmatprep.subr.mxu0 0.0
  %390 = vmatpush1.xpose.msra.mxu0 0.0
  %391 = vmatprep.subr.mxu0 0.0
  %392 = vmatpush1.xpose.msra.mxu0 0.0
  %393 = vmatprep.subr.mxu0 0.0
  %394 = vmatpush1.xpose.msra.mxu0 0.0
  %395 = vmatprep.subr.mxu0 0.0
  %396 = vmatpush1.xpose.msra.mxu0 0.0
  %397 = vmatprep.subr.mxu0 0.0
  %398 = vmatpush1.xpose.msra.mxu0 0.0
  %399 = vmatprep.subr.mxu0 0.0
  %400 = vmatpush1.xpose.msra.mxu0 0.0
  %401 = vmatprep.subr.mxu0 0.0
  %402 = vmatpush1.xpose.msra.mxu0 0.0
  %403 = vmatprep.subr.mxu0 0.0
  %404 = vmatpush1.xpose.msra.mxu0 0.0
  %405 = vmatprep.subr.mxu0 0.0
  %406 = vmatpush1.xpose.msra.mxu0 0.0
  %407 = vmatprep.subr.mxu0 0.0
  %408 = vmatpush1.xpose.msra.mxu0 0.0
  %409 = vmatprep.subr.mxu0 0.0
  %410 = vmatpush1.xpose.msra.mxu0 0.0
  %411 = vmatprep.subr.mxu0 0.0
  %412 = vmatpush1.xpose.msra.mxu0 0.0
  %413 = vmatprep.subr.mxu0 0.0
  %414 = vmatpush1.xpose.msra.mxu0 0.0
  %415 = vmatprep.subr.mxu0 0.0
  %416 = vmatpush1.xpose.msra.mxu0 0.0
  %417 = vmatprep.subr.mxu0 0.0
  %418 = vmatpush1.xpose.msra.mxu0 0.0
  %419 = vmatprep.subr.mxu0 0.0
  %420 = vmatpush1.xpose.msra.mxu0 0.0
  %421 = vmatprep.subr.mxu0 0.0
  %422 = vmatpush1.xpose.msra.mxu0 0.0
  %423 = vmatprep.subr.mxu0 0.0
  %424 = vmatpush1.xpose.msra.mxu0 0.0
  %425 = vmatprep.mubr.f32.mxu0 0.0
  %426 = vmatmul.mubr.f32.gmra.mrb[0].mxu0 %v353
  %v427 = vpop.f32.mrb[0].mxu0
  %v428 = vadd.f32 0.0, %v427
  %v429 = vpop.f32.mrb[0].mxu0
  %430 = vmatprep.mubr.f32.mxu0 0.0
  %431 = vmatmul.mubr.f32.gmra.mrb[0].mxu0 %v355
  %v432 = vpop.f32.mrb[0].mxu0
  %v433 = vadd.f32 0.0, %v432
  %v434 = vpop.f32.mrb[0].mxu0
  %435 = vdwg.mxu0
  %438 = vrot.lane.b32.xlu0 %v240, 120
  %v439 = vpop.permute.xlu0 %438
  %440 = vrot.lane.b32.xlu0 %v245, 120
  %v441 = vpop.permute.xlu0 %440
  %v442 = vsel %vm128, %v240, 0
  %v444 = vsel %vm128, %v245, 0
  %v446 = vsel %vm128, %v439, 0
  %v448 = vsel %vm128, %v441, 0
  %450 = vmatprep.subr.mxu0 0.0
  %451 = vmatpush1.xpose.msra.mxu0 %v446
  %452 = vmatprep.subr.mxu0 0.0
  %453 = vmatpush1.xpose.msra.mxu0 %v448
  %454 = vmatprep.subr.mxu0 0.0
  %455 = vmatpush1.xpose.msra.mxu0 0.0
  %456 = vmatprep.subr.mxu0 0.0
  %457 = vmatpush1.xpose.msra.mxu0 0.0
  %458 = vmatprep.subr.mxu0 0.0
  %459 = vmatpush1.xpose.msra.mxu0 0.0
  %460 = vmatprep.subr.mxu0 0.0
  %461 = vmatpush1.xpose.msra.mxu0 0.0
  %462 = vmatprep.subr.mxu0 0.0
  %463 = vmatpush1.xpose.msra.mxu0 0.0
  %464 = vmatprep.subr.mxu0 0.0
  %465 = vmatpush1.xpose.msra.mxu0 0.0
  %466 = vmatprep.subr.mxu0 0.0
  %467 = vmatpush1.xpose.msra.mxu0 0.0
  %468 = vmatprep.subr.mxu0 0.0
  %469 = vmatpush1.xpose.msra.mxu0 0.0
  %470 = vmatprep.subr.mxu0 0.0
  %471 = vmatpush1.xpose.msra.mxu0 0.0
  %472 = vmatprep.subr.mxu0 0.0
  %473 = vmatpush1.xpose.msra.mxu0 0.0
  %474 = vmatprep.subr.mxu0 0.0
  %475 = vmatpush1.xpose.msra.mxu0 0.0
  %476 = vmatprep.subr.mxu0 0.0
  %477 = vmatpush1.xpose.msra.mxu0 0.0
  %478 = vmatprep.subr.mxu0 0.0
  %479 = vmatpush1.xpose.msra.mxu0 0.0
  %480 = vmatprep.subr.mxu0 0.0
  %481 = vmatpush1.xpose.msra.mxu0 0.0
  %482 = vmatprep.subr.mxu0 0.0
  %483 = vmatpush1.xpose.msra.mxu0 0.0
  %484 = vmatprep.subr.mxu0 0.0
  %485 = vmatpush1.xpose.msra.mxu0 0.0
  %486 = vmatprep.subr.mxu0 0.0
  %487 = vmatpush1.xpose.msra.mxu0 0.0
  %488 = vmatprep.subr.mxu0 0.0
  %489 = vmatpush1.xpose.msra.mxu0 0.0
  %490 = vmatprep.subr.mxu0 0.0
  %491 = vmatpush1.xpose.msra.mxu0 0.0
  %492 = vmatprep.subr.mxu0 0.0
  %493 = vmatpush1.xpose.msra.mxu0 0.0
  %494 = vmatprep.subr.mxu0 0.0
  %495 = vmatpush1.xpose.msra.mxu0 0.0
  %496 = vmatprep.subr.mxu0 0.0
  %497 = vmatpush1.xpose.msra.mxu0 0.0
  %498 = vmatprep.subr.mxu0 0.0
  %499 = vmatpush1.xpose.msra.mxu0 0.0
  %500 = vmatprep.subr.mxu0 0.0
  %501 = vmatpush1.xpose.msra.mxu0 0.0
  %502 = vmatprep.subr.mxu0 0.0
  %503 = vmatpush1.xpose.msra.mxu0 0.0
  %504 = vmatprep.subr.mxu0 0.0
  %505 = vmatpush1.xpose.msra.mxu0 0.0
  %506 = vmatprep.subr.mxu0 0.0
  %507 = vmatpush1.xpose.msra.mxu0 0.0
  %508 = vmatprep.subr.mxu0 0.0
  %509 = vmatpush1.xpose.msra.mxu0 0.0
  %510 = vmatprep.subr.mxu0 0.0
  %511 = vmatpush1.xpose.msra.mxu0 0.0
  %512 = vmatprep.subr.mxu0 0.0
  %513 = vmatpush1.xpose.msra.mxu0 0.0
  %514 = vmatprep.mubr.f32.mxu0 0.0
  %515 = vmatmul.mubr.f32.gmra.mrb[0].mxu0 %v442
  %v516 = vpop.f32.mrb[0].mxu0
  %v517 = vadd.f32 0.0, %v516
  %v518 = vpop.f32.mrb[0].mxu0
  %519 = vmatprep.mubr.f32.mxu0 0.0
  %520 = vmatmul.mubr.f32.gmra.mrb[0].mxu0 %v444
  %v521 = vpop.f32.mrb[0].mxu0
  %v522 = vadd.f32 0.0, %v521
  %v523 = vpop.f32.mrb[0].mxu0
  %524 = vdwg.mxu0
  %527 = vrot.lane.b32.xlu0 %v250, 120
  %v528 = vpop.permute.xlu0 %527
  %529 = vrot.lane.b32.xlu0 %v255, 120
  %v530 = vpop.permute.xlu0 %529
  %v531 = vsel %vm128, %v250, 0
  %v533 = vsel %vm128, %v255, 0
  %v535 = vsel %vm128, %v528, 0
  %v537 = vsel %vm128, %v530, 0
  %539 = vmatprep.subr.mxu0 0.0
  %540 = vmatpush1.xpose.msra.mxu0 %v535
  %541 = vmatprep.subr.mxu0 0.0
  %542 = vmatpush1.xpose.msra.mxu0 %v537
  %543 = vmatprep.subr.mxu0 0.0
  %544 = vmatpush1.xpose.msra.mxu0 0.0
  %545 = vmatprep.subr.mxu0 0.0
  %546 = vmatpush1.xpose.msra.mxu0 0.0
  %547 = vmatprep.subr.mxu0 0.0
  %548 = vmatpush1.xpose.msra.mxu0 0.0
  %549 = vmatprep.subr.mxu0 0.0
  %550 = vmatpush1.xpose.msra.mxu0 0.0
  %551 = vmatprep.subr.mxu0 0.0
  %552 = vmatpush1.xpose.msra.mxu0 0.0
  %553 = vmatprep.subr.mxu0 0.0
  %554 = vmatpush1.xpose.msra.mxu0 0.0
  %555 = vmatprep.subr.mxu0 0.0
  %556 = vmatpush1.xpose.msra.mxu0 0.0
  %557 = vmatprep.subr.mxu0 0.0
  %558 = vmatpush1.xpose.msra.mxu0 0.0
  %559 = vmatprep.subr.mxu0 0.0
  %560 = vmatpush1.xpose.msra.mxu0 0.0
  %561 = vmatprep.subr.mxu0 0.0
  %562 = vmatpush1.xpose.msra.mxu0 0.0
  %563 = vmatprep.subr.mxu0 0.0
  %564 = vmatpush1.xpose.msra.mxu0 0.0
  %565 = vmatprep.subr.mxu0 0.0
  %566 = vmatpush1.xpose.msra.mxu0 0.0
  %567 = vmatprep.subr.mxu0 0.0
  %568 = vmatpush1.xpose.msra.mxu0 0.0
  %569 = vmatprep.subr.mxu0 0.0
  %570 = vmatpush1.xpose.msra.mxu0 0.0
  %571 = vmatprep.subr.mxu0 0.0
  %572 = vmatpush1.xpose.msra.mxu0 0.0
  %573 = vmatprep.subr.mxu0 0.0
  %574 = vmatpush1.xpose.msra.mxu0 0.0
  %575 = vmatprep.subr.mxu0 0.0
  %576 = vmatpush1.xpose.msra.mxu0 0.0
  %577 = vmatprep.subr.mxu0 0.0
  %578 = vmatpush1.xpose.msra.mxu0 0.0
  %579 = vmatprep.subr.mxu0 0.0
  %580 = vmatpush1.xpose.msra.mxu0 0.0
  %581 = vmatprep.subr.mxu0 0.0
  %582 = vmatpush1.xpose.msra.mxu0 0.0
  %583 = vmatprep.subr.mxu0 0.0
  %584 = vmatpush1.xpose.msra.mxu0 0.0
  %585 = vmatprep.subr.mxu0 0.0
  %586 = vmatpush1.xpose.msra.mxu0 0.0
  %587 = vmatprep.subr.mxu0 0.0
  %588 = vmatpush1.xpose.msra.mxu0 0.0
  %589 = vmatprep.subr.mxu0 0.0
  %590 = vmatpush1.xpose.msra.mxu0 0.0
  %591 = vmatprep.subr.mxu0 0.0
  %592 = vmatpush1.xpose.msra.mxu0 0.0
  %593 = vmatprep.subr.mxu0 0.0
  %594 = vmatpush1.xpose.msra.mxu0 0.0
  %595 = vmatprep.subr.mxu0 0.0
  %596 = vmatpush1.xpose.msra.mxu0 0.0
  %597 = vmatprep.subr.mxu0 0.0
  %598 = vmatpush1.xpose.msra.mxu0 0.0
  %599 = vmatprep.subr.mxu0 0.0
  %600 = vmatpush1.xpose.msra.mxu0 0.0
  %601 = vmatprep.subr.mxu0 0.0
  %602 = vmatpush1.xpose.msra.mxu0 0.0
  %603 = vmatprep.mubr.f32.mxu0 0.0
  %604 = vmatmul.mubr.f32.gmra.mrb[0].mxu0 %v531
  %v605 = vpop.f32.mrb[0].mxu0
  %v606 = vadd.f32 0.0, %v605
  %v607 = vpop.f32.mrb[0].mxu0
  %608 = vmatprep.mubr.f32.mxu0 0.0
  %609 = vmatmul.mubr.f32.gmra.mrb[0].mxu0 %v533
  %v610 = vpop.f32.mrb[0].mxu0
  %v611 = vadd.f32 0.0, %v610
  %v612 = vpop.f32.mrb[0].mxu0
  %613 = vdwg.mxu0
  %vm614 = vcmask 130048
  %v615 = vsel %vm614, %v339, -inf
  %616 = vmax.xlane.f32.xlu0 %v615
  %v617 = vpop.xlane.xlu0 %616
  %v618 = vsel %vm614, %v344, -inf
  %619 = vmax.xlane.f32.xlu0 %v618
  %v620 = vpop.xlane.xlu0 %619
  %v621 = vsel %vm614, %v428, -inf
  %622 = vmax.xlane.f32.xlu0 %v621
  %v623 = vpop.xlane.xlu0 %622
  %v624 = vsel %vm614, %v433, -inf
  %625 = vmax.xlane.f32.xlu0 %v624
  %v626 = vpop.xlane.xlu0 %625
  %v627 = vsel %vm614, %v517, -inf
  %628 = vmax.xlane.f32.xlu0 %v627
  %v629 = vpop.xlane.xlu0 %628
  %v630 = vsel %vm614, %v522, -inf
  %631 = vmax.xlane.f32.xlu0 %v630
  %v632 = vpop.xlane.xlu0 %631
  %v633 = vsel %vm614, %v606, -inf
  %634 = vmax.xlane.f32.xlu0 %v633
  %v635 = vpop.xlane.xlu0 %634
  %v636 = vsel %vm614, %v611, -inf
  %637 = vmax.xlane.f32.xlu0 %v636
  %v638 = vpop.xlane.xlu0 %637
  %v639 = vsub.f32 %v339, %v617
  %v640 = vsub.f32 %v344, %v620
  %v641 = vsub.f32 %v428, %v623
  %v642 = vsub.f32 %v433, %v626
  %v643 = vsub.f32 %v517, %v629
  %v644 = vsub.f32 %v522, %v632
  %v645 = vsub.f32 %v606, %v635
  %v646 = vsub.f32 %v611, %v638
  %v647 = vmul.f32 %v639, 1.442695
  %v648 = vpow.pop %v647
  %v649 = vmul.f32 %v640, 1.442695
  %v650 = vpow.pop %v649
  %v651 = vmul.f32 %v641, 1.442695
  %v652 = vpow.pop %v651
  %v653 = vmul.f32 %v642, 1.442695
  %v654 = vpow.pop %v653
  %v655 = vmul.f32 %v643, 1.442695
  %v656 = vpow.pop %v655
  %v657 = vmul.f32 %v644, 1.442695
  %v658 = vpow.pop %v657
  %v659 = vmul.f32 %v645, 1.442695
  %v660 = vpow.pop %v659
  %v661 = vmul.f32 %v646, 1.442695
  %v662 = vpow.pop %v661
  %v663 = vsel %vm614, %v648, 0.0
  %664 = vadd.xlane.f32.xlu0 %v663
  %v665 = vpop.xlane.xlu0 %664
  %v666 = vsel %vm614, %v650, 0.0
  %667 = vadd.xlane.f32.xlu0 %v666
  %v668 = vpop.xlane.xlu0 %667
  %v669 = vsel %vm614, %v652, 0.0
  %670 = vadd.xlane.f32.xlu0 %v669
  %v671 = vpop.xlane.xlu0 %670
  %v672 = vsel %vm614, %v654, 0.0
  %673 = vadd.xlane.f32.xlu0 %v672
  %v674 = vpop.xlane.xlu0 %673
  %v675 = vsel %vm614, %v656, 0.0
  %676 = vadd.xlane.f32.xlu0 %v675
  %v677 = vpop.xlane.xlu0 %676
  %v678 = vsel %vm614, %v658, 0.0
  %679 = vadd.xlane.f32.xlu0 %v678
  %v680 = vpop.xlane.xlu0 %679
  %v681 = vsel %vm614, %v660, 0.0
  %682 = vadd.xlane.f32.xlu0 %v681
  %v683 = vpop.xlane.xlu0 %682
  %v684 = vsel %vm614, %v662, 0.0
  %685 = vadd.xlane.f32.xlu0 %v684
  %v686 = vpop.xlane.xlu0 %685
  %v687 = vrcp.pop %v665
  %v688 = vmul.f32 %v648, %v687
  %v689 = vrcp.pop %v668
  %v690 = vmul.f32 %v650, %v689
  %v691 = vrcp.pop %v671
  %v692 = vmul.f32 %v652, %v691
  %v693 = vrcp.pop %v674
  %v694 = vmul.f32 %v654, %v693
  %v695 = vrcp.pop %v677
  %v696 = vmul.f32 %v656, %v695
  %v697 = vrcp.pop %v680
  %v698 = vmul.f32 %v658, %v697
  %v699 = vrcp.pop %v683
  %v700 = vmul.f32 %v660, %v699
  %v701 = vrcp.pop %v686
  %v702 = vmul.f32 %v662, %v701
  %703 = vrot.lane.b32.xlu0 %v220, 112
  %v704 = vpop.permute.xlu0 %703
  %705 = vrot.lane.b32.xlu0 %v225, 112
  %v706 = vpop.permute.xlu0 %705
  %v710 = vsel %vm614, %v688, 0
  %v713 = vsel %vm614, %v690, 0
  %715 = vmatprep.subr.mxu0 0.0
  %716 = vmatpush1.msra.mxu0 %v704
  %717 = vmatprep.subr.mxu0 0.0
  %718 = vmatpush1.msra.mxu0 %v706
  %719 = vmatprep.subr.mxu0 0.0
  %720 = vmatpush1.msra.mxu0 0.0
  %721 = vmatprep.subr.mxu0 0.0
  %722 = vmatpush1.msra.mxu0 0.0
  %723 = vmatprep.subr.mxu0 0.0
  %724 = vmatpush1.msra.mxu0 0.0
  %725 = vmatprep.subr.mxu0 0.0
  %726 = vmatpush1.msra.mxu0 0.0
  %727 = vmatprep.subr.mxu0 0.0
  %728 = vmatpush1.msra.mxu0 0.0
  %729 = vmatprep.subr.mxu0 0.0
  %730 = vmatpush1.msra.mxu0 0.0
  %731 = vmatprep.subr.mxu0 0.0
  %732 = vmatpush1.msra.mxu0 0.0
  %733 = vmatprep.subr.mxu0 0.0
  %734 = vmatpush1.msra.mxu0 0.0
  %735 = vmatprep.subr.mxu0 0.0
  %736 = vmatpush1.msra.mxu0 0.0
  %737 = vmatprep.subr.mxu0 0.0
  %738 = vmatpush1.msra.mxu0 0.0
  %739 = vmatprep.subr.mxu0 0.0
  %740 = vmatpush1.msra.mxu0 0.0
  %741 = vmatprep.subr.mxu0 0.0
  %742 = vmatpush1.msra.mxu0 0.0
  %743 = vmatprep.subr.mxu0 0.0
  %744 = vmatpush1.msra.mxu0 0.0
  %745 = vmatprep.subr.mxu0 0.0
  %746 = vmatpush1.msra.mxu0 0.0
  %747 = vmatprep.subr.mxu0 0.0
  %748 = vmatpush1.msra.mxu0 0.0
  %749 = vmatprep.subr.mxu0 0.0
  %750 = vmatpush1.msra.mxu0 0.0
  %751 = vmatprep.subr.mxu0 0.0
  %752 = vmatpush1.msra.mxu0 0.0
  %753 = vmatprep.subr.mxu0 0.0
  %754 = vmatpush1.msra.mxu0 0.0
  %755 = vmatprep.subr.mxu0 0.0
  %756 = vmatpush1.msra.mxu0 0.0
  %757 = vmatprep.subr.mxu0 0.0
  %758 = vmatpush1.msra.mxu0 0.0
  %759 = vmatprep.subr.mxu0 0.0
  %760 = vmatpush1.msra.mxu0 0.0
  %761 = vmatprep.subr.mxu0 0.0
  %762 = vmatpush1.msra.mxu0 0.0
  %763 = vmatprep.subr.mxu0 0.0
  %764 = vmatpush1.msra.mxu0 0.0
  %765 = vmatprep.subr.mxu0 0.0
  %766 = vmatpush1.msra.mxu0 0.0
  %767 = vmatprep.subr.mxu0 0.0
  %768 = vmatpush1.msra.mxu0 0.0
  %769 = vmatprep.subr.mxu0 0.0
  %770 = vmatpush1.msra.mxu0 0.0
  %771 = vmatprep.subr.mxu0 0.0
  %772 = vmatpush1.msra.mxu0 0.0
  %773 = vmatprep.subr.mxu0 0.0
  %774 = vmatpush1.msra.mxu0 0.0
  %775 = vmatprep.subr.mxu0 0.0
  %776 = vmatpush1.msra.mxu0 0.0
  %777 = vmatprep.subr.mxu0 0.0
  %778 = vmatpush1.msra.mxu0 0.0
  %779 = vmatprep.mubr.f32.mxu0 0.0
  %780 = vmatmul.mubr.f32.gmra.mrb[0].mxu0 %v710
  %v781 = vpop.f32.mrb[0].mxu0
  %v782 = vadd.f32 0.0, %v781
  %v783 = vpop.f32.mrb[0].mxu0
  %784 = vmatprep.mubr.f32.mxu0 0.0
  %785 = vmatmul.mubr.f32.gmra.mrb[0].mxu0 %v713
  %v786 = vpop.f32.mrb[0].mxu0
  %v787 = vadd.f32 0.0, %v786
  %v788 = vpop.f32.mrb[0].mxu0
  %789 = vdwg.mxu0
  %790 = vrot.lane.b32.xlu0 %v230, 112
  %v791 = vpop.permute.xlu0 %790
  %792 = vrot.lane.b32.xlu0 %v235, 112
  %v793 = vpop.permute.xlu0 %792
  %v797 = vsel %vm614, %v692, 0
  %v800 = vsel %vm614, %v694, 0
  %802 = vmatprep.subr.mxu0 0.0
  %803 = vmatpush1.msra.mxu0 %v791
  %804 = vmatprep.subr.mxu0 0.0
  %805 = vmatpush1.msra.mxu0 %v793
  %806 = vmatprep.subr.mxu0 0.0
  %807 = vmatpush1.msra.mxu0 0.0
  %808 = vmatprep.subr.mxu0 0.0
  %809 = vmatpush1.msra.mxu0 0.0
  %810 = vmatprep.subr.mxu0 0.0
  %811 = vmatpush1.msra.mxu0 0.0
  %812 = vmatprep.subr.mxu0 0.0
  %813 = vmatpush1.msra.mxu0 0.0
  %814 = vmatprep.subr.mxu0 0.0
  %815 = vmatpush1.msra.mxu0 0.0
  %816 = vmatprep.subr.mxu0 0.0
  %817 = vmatpush1.msra.mxu0 0.0
  %818 = vmatprep.subr.mxu0 0.0
  %819 = vmatpush1.msra.mxu0 0.0
  %820 = vmatprep.subr.mxu0 0.0
  %821 = vmatpush1.msra.mxu0 0.0
  %822 = vmatprep.subr.mxu0 0.0
  %823 = vmatpush1.msra.mxu0 0.0
  %824 = vmatprep.subr.mxu0 0.0
  %825 = vmatpush1.msra.mxu0 0.0
  %826 = vmatprep.subr.mxu0 0.0
  %827 = vmatpush1.msra.mxu0 0.0
  %828 = vmatprep.subr.mxu0 0.0
  %829 = vmatpush1.msra.mxu0 0.0
  %830 = vmatprep.subr.mxu0 0.0
  %831 = vmatpush1.msra.mxu0 0.0
  %832 = vmatprep.subr.mxu0 0.0
  %833 = vmatpush1.msra.mxu0 0.0
  %834 = vmatprep.subr.mxu0 0.0
  %835 = vmatpush1.msra.mxu0 0.0
  %836 = vmatprep.subr.mxu0 0.0
  %837 = vmatpush1.msra.mxu0 0.0
  %838 = vmatprep.subr.mxu0 0.0
  %839 = vmatpush1.msra.mxu0 0.0
  %840 = vmatprep.subr.mxu0 0.0
  %841 = vmatpush1.msra.mxu0 0.0
  %842 = vmatprep.subr.mxu0 0.0
  %843 = vmatpush1.msra.mxu0 0.0
  %844 = vmatprep.subr.mxu0 0.0
  %845 = vmatpush1.msra.mxu0 0.0
  %846 = vmatprep.subr.mxu0 0.0
  %847 = vmatpush1.msra.mxu0 0.0
  %848 = vmatprep.subr.mxu0 0.0
  %849 = vmatpush1.msra.mxu0 0.0
  %850 = vmatprep.subr.mxu0 0.0
  %851 = vmatpush1.msra.mxu0 0.0
  %852 = vmatprep.subr.mxu0 0.0
  %853 = vmatpush1.msra.mxu0 0.0
  %854 = vmatprep.subr.mxu0 0.0
  %855 = vmatpush1.msra.mxu0 0.0
  %856 = vmatprep.subr.mxu0 0.0
  %857 = vmatpush1.msra.mxu0 0.0
  %858 = vmatprep.subr.mxu0 0.0
  %859 = vmatpush1.msra.mxu0 0.0
  %860 = vmatprep.subr.mxu0 0.0
  %861 = vmatpush1.msra.mxu0 0.0
  %862 = vmatprep.subr.mxu0 0.0
  %863 = vmatpush1.msra.mxu0 0.0
  %864 = vmatprep.subr.mxu0 0.0
  %865 = vmatpush1.msra.mxu0 0.0
  %866 = vmatprep.mubr.f32.mxu0 0.0
  %867 = vmatmul.mubr.f32.gmra.mrb[0].mxu0 %v797
  %v868 = vpop.f32.mrb[0].mxu0
  %v869 = vadd.f32 0.0, %v868
  %v870 = vpop.f32.mrb[0].mxu0
  %871 = vmatprep.mubr.f32.mxu0 0.0
  %872 = vmatmul.mubr.f32.gmra.mrb[0].mxu0 %v800
  %v873 = vpop.f32.mrb[0].mxu0
  %v874 = vadd.f32 0.0, %v873
  %v875 = vpop.f32.mrb[0].mxu0
  %876 = vdwg.mxu0
  %877 = vrot.lane.b32.xlu0 %v240, 112
  %v878 = vpop.permute.xlu0 %877
  %879 = vrot.lane.b32.xlu0 %v245, 112
  %v880 = vpop.permute.xlu0 %879
  %v884 = vsel %vm614, %v696, 0
  %v887 = vsel %vm614, %v698, 0
  %889 = vmatprep.subr.mxu0 0.0
  %890 = vmatpush1.msra.mxu0 %v878
  %891 = vmatprep.subr.mxu0 0.0
  %892 = vmatpush1.msra.mxu0 %v880
  %893 = vmatprep.subr.mxu0 0.0
  %894 = vmatpush1.msra.mxu0 0.0
  %895 = vmatprep.subr.mxu0 0.0
  %896 = vmatpush1.msra.mxu0 0.0
  %897 = vmatprep.subr.mxu0 0.0
  %898 = vmatpush1.msra.mxu0 0.0
  %899 = vmatprep.subr.mxu0 0.0
  %900 = vmatpush1.msra.mxu0 0.0
  %901 = vmatprep.subr.mxu0 0.0
  %902 = vmatpush1.msra.mxu0 0.0
  %903 = vmatprep.subr.mxu0 0.0
  %904 = vmatpush1.msra.mxu0 0.0
  %905 = vmatprep.subr.mxu0 0.0
  %906 = vmatpush1.msra.mxu0 0.0
  %907 = vmatprep.subr.mxu0 0.0
  %908 = vmatpush1.msra.mxu0 0.0
  %909 = vmatprep.subr.mxu0 0.0
  %910 = vmatpush1.msra.mxu0 0.0
  %911 = vmatprep.subr.mxu0 0.0
  %912 = vmatpush1.msra.mxu0 0.0
  %913 = vmatprep.subr.mxu0 0.0
  %914 = vmatpush1.msra.mxu0 0.0
  %915 = vmatprep.subr.mxu0 0.0
  %916 = vmatpush1.msra.mxu0 0.0
  %917 = vmatprep.subr.mxu0 0.0
  %918 = vmatpush1.msra.mxu0 0.0
  %919 = vmatprep.subr.mxu0 0.0
  %920 = vmatpush1.msra.mxu0 0.0
  %921 = vmatprep.subr.mxu0 0.0
  %922 = vmatpush1.msra.mxu0 0.0
  %923 = vmatprep.subr.mxu0 0.0
  %924 = vmatpush1.msra.mxu0 0.0
  %925 = vmatprep.subr.mxu0 0.0
  %926 = vmatpush1.msra.mxu0 0.0
  %927 = vmatprep.subr.mxu0 0.0
  %928 = vmatpush1.msra.mxu0 0.0
  %929 = vmatprep.subr.mxu0 0.0
  %930 = vmatpush1.msra.mxu0 0.0
  %931 = vmatprep.subr.mxu0 0.0
  %932 = vmatpush1.msra.mxu0 0.0
  %933 = vmatprep.subr.mxu0 0.0
  %934 = vmatpush1.msra.mxu0 0.0
  %935 = vmatprep.subr.mxu0 0.0
  %936 = vmatpush1.msra.mxu0 0.0
  %937 = vmatprep.subr.mxu0 0.0
  %938 = vmatpush1.msra.mxu0 0.0
  %939 = vmatprep.subr.mxu0 0.0
  %940 = vmatpush1.msra.mxu0 0.0
  %941 = vmatprep.subr.mxu0 0.0
  %942 = vmatpush1.msra.mxu0 0.0
  %943 = vmatprep.subr.mxu0 0.0
  %944 = vmatpush1.msra.mxu0 0.0
  %945 = vmatprep.subr.mxu0 0.0
  %946 = vmatpush1.msra.mxu0 0.0
  %947 = vmatprep.subr.mxu0 0.0
  %948 = vmatpush1.msra.mxu0 0.0
  %949 = vmatprep.subr.mxu0 0.0
  %950 = vmatpush1.msra.mxu0 0.0
  %951 = vmatprep.subr.mxu0 0.0
  %952 = vmatpush1.msra.mxu0 0.0
  %953 = vmatprep.mubr.f32.mxu0 0.0
  %954 = vmatmul.mubr.f32.gmra.mrb[0].mxu0 %v884
  %v955 = vpop.f32.mrb[0].mxu0
  %v956 = vadd.f32 0.0, %v955
  %v957 = vpop.f32.mrb[0].mxu0
  %958 = vmatprep.mubr.f32.mxu0 0.0
  %959 = vmatmul.mubr.f32.gmra.mrb[0].mxu0 %v887
  %v960 = vpop.f32.mrb[0].mxu0
  %v961 = vadd.f32 0.0, %v960
  %v962 = vpop.f32.mrb[0].mxu0
  %963 = vdwg.mxu0
  %964 = vrot.lane.b32.xlu0 %v250, 112
  %v965 = vpop.permute.xlu0 %964
  %966 = vrot.lane.b32.xlu0 %v255, 112
  %v967 = vpop.permute.xlu0 %966
  %v971 = vsel %vm614, %v700, 0
  %v974 = vsel %vm614, %v702, 0
  %976 = vmatprep.subr.mxu0 0.0
  %977 = vmatpush1.msra.mxu0 %v965
  %978 = vmatprep.subr.mxu0 0.0
  %979 = vmatpush1.msra.mxu0 %v967
  %980 = vmatprep.subr.mxu0 0.0
  %981 = vmatpush1.msra.mxu0 0.0
  %982 = vmatprep.subr.mxu0 0.0
  %983 = vmatpush1.msra.mxu0 0.0
  %984 = vmatprep.subr.mxu0 0.0
  %985 = vmatpush1.msra.mxu0 0.0
  %986 = vmatprep.subr.mxu0 0.0
  %987 = vmatpush1.msra.mxu0 0.0
  %988 = vmatprep.subr.mxu0 0.0
  %989 = vmatpush1.msra.mxu0 0.0
  %990 = vmatprep.subr.mxu0 0.0
  %991 = vmatpush1.msra.mxu0 0.0
  %992 = vmatprep.subr.mxu0 0.0
  %993 = vmatpush1.msra.mxu0 0.0
  %994 = vmatprep.subr.mxu0 0.0
  %995 = vmatpush1.msra.mxu0 0.0
  %996 = vmatprep.subr.mxu0 0.0
  %997 = vmatpush1.msra.mxu0 0.0
  %998 = vmatprep.subr.mxu0 0.0
  %999 = vmatpush1.msra.mxu0 0.0
  %1000 = vmatprep.subr.mxu0 0.0
  %1001 = vmatpush1.msra.mxu0 0.0
  %1002 = vmatprep.subr.mxu0 0.0
  %1003 = vmatpush1.msra.mxu0 0.0
  %1004 = vmatprep.subr.mxu0 0.0
  %1005 = vmatpush1.msra.mxu0 0.0
  %1006 = vmatprep.subr.mxu0 0.0
  %1007 = vmatpush1.msra.mxu0 0.0
  %1008 = vmatprep.subr.mxu0 0.0
  %1009 = vmatpush1.msra.mxu0 0.0
  %1010 = vmatprep.subr.mxu0 0.0
  %1011 = vmatpush1.msra.mxu0 0.0
  %1012 = vmatprep.subr.mxu0 0.0
  %1013 = vmatpush1.msra.mxu0 0.0
  %1014 = vmatprep.subr.mxu0 0.0
  %1015 = vmatpush1.msra.mxu0 0.0
  %1016 = vmatprep.subr.mxu0 0.0
  %1017 = vmatpush1.msra.mxu0 0.0
  %1018 = vmatprep.subr.mxu0 0.0
  %1019 = vmatpush1.msra.mxu0 0.0
  %1020 = vmatprep.subr.mxu0 0.0
  %1021 = vmatpush1.msra.mxu0 0.0
  %1022 = vmatprep.subr.mxu0 0.0
  %1023 = vmatpush1.msra.mxu0 0.0
  %1024 = vmatprep.subr.mxu0 0.0
  %1025 = vmatpush1.msra.mxu0 0.0
  %1026 = vmatprep.subr.mxu0 0.0
  %1027 = vmatpush1.msra.mxu0 0.0
  %1028 = vmatprep.subr.mxu0 0.0
  %1029 = vmatpush1.msra.mxu0 0.0
  %1030 = vmatprep.subr.mxu0 0.0
  %1031 = vmatpush1.msra.mxu0 0.0
  %1032 = vmatprep.subr.mxu0 0.0
  %1033 = vmatpush1.msra.mxu0 0.0
  %1034 = vmatprep.subr.mxu0 0.0
  %1035 = vmatpush1.msra.mxu0 0.0
  %1036 = vmatprep.subr.mxu0 0.0
  %1037 = vmatpush1.msra.mxu0 0.0
  %1038 = vmatprep.subr.mxu0 0.0
  %1039 = vmatpush1.msra.mxu0 0.0
  %1040 = vmatprep.mubr.f32.mxu0 0.0
  %1041 = vmatmul.mubr.f32.gmra.mrb[0].mxu0 %v971
  %v1042 = vpop.f32.mrb[0].mxu0
  %v1043 = vadd.f32 0.0, %v1042
  %v1044 = vpop.f32.mrb[0].mxu0
  %1045 = vmatprep.mubr.f32.mxu0 0.0
  %1046 = vmatmul.mubr.f32.gmra.mrb[0].mxu0 %v974
  %v1047 = vpop.f32.mrb[0].mxu0
  %v1048 = vadd.f32 0.0, %v1047
  %v1049 = vpop.f32.mrb[0].mxu0
  %1050 = vdwg.mxu0
  %v1052 = vsel %vm128, %v782, 0
  %v1055 = vsel %vm128, %v787, 0
  %v1058 = vsel %vm128, %v869, 0
  %v1061 = vsel %vm128, %v874, 0
  %v1064 = vsel %vm128, %v956, 0
  %v1067 = vsel %vm128, %v961, 0
  %v1070 = vsel %vm128, %v1043, 0
  %v1073 = vsel %vm128, %v1048, 0
  %1075 = vmatprep.subr.mxu0 0.0
  %1076 = vmatpush1.msra.mxu0 %v80
  %1077 = vmatprep.subr.mxu0 0.0
  %1078 = vmatpush1.msra.mxu0 0.0
  %1079 = vmatprep.subr.mxu0 0.0
  %1080 = vmatpush1.msra.mxu0 0.0
  %1081 = vmatprep.subr.mxu0 0.0
  %1082 = vmatpush1.msra.mxu0 0.0
  %1083 = vmatprep.subr.mxu0 0.0
  %1084 = vmatpush1.msra.mxu0 0.0
  %1085 = vmatprep.subr.mxu0 0.0
  %1086 = vmatpush1.msra.mxu0 0.0
  %1087 = vmatprep.subr.mxu0 0.0
  %1088 = vmatpush1.msra.mxu0 0.0
  %1089 = vmatprep.subr.mxu0 0.0
  %1090 = vmatpush1.msra.mxu0 0.0
  %1091 = vmatprep.subr.mxu0 0.0
  %1092 = vmatpush1.msra.mxu0 0.0
  %1093 = vmatprep.subr.mxu0 0.0
  %1094 = vmatpush1.msra.mxu0 0.0
  %1095 = vmatprep.subr.mxu0 0.0
  %1096 = vmatpush1.msra.mxu0 0.0
  %1097 = vmatprep.subr.mxu0 0.0
  %1098 = vmatpush1.msra.mxu0 0.0
  %1099 = vmatprep.subr.mxu0 0.0
  %1100 = vmatpush1.msra.mxu0 0.0
  %1101 = vmatprep.subr.mxu0 0.0
  %1102 = vmatpush1.msra.mxu0 0.0
  %1103 = vmatprep.subr.mxu0 0.0
  %1104 = vmatpush1.msra.mxu0 0.0
  %1105 = vmatprep.subr.mxu0 0.0
  %1106 = vmatpush1.msra.mxu0 0.0
  %1107 = vmatprep.subr.mxu0 0.0
  %1108 = vmatpush1.msra.mxu0 0.0
  %1109 = vmatprep.subr.mxu0 0.0
  %1110 = vmatpush1.msra.mxu0 0.0
  %1111 = vmatprep.subr.mxu0 0.0
  %1112 = vmatpush1.msra.mxu0 0.0
  %1113 = vmatprep.subr.mxu0 0.0
  %1114 = vmatpush1.msra.mxu0 0.0
  %1115 = vmatprep.subr.mxu0 0.0
  %1116 = vmatpush1.msra.mxu0 0.0
  %1117 = vmatprep.subr.mxu0 0.0
  %1118 = vmatpush1.msra.mxu0 0.0
  %1119 = vmatprep.subr.mxu0 0.0
  %1120 = vmatpush1.msra.mxu0 0.0
  %1121 = vmatprep.subr.mxu0 0.0
  %1122 = vmatpush1.msra.mxu0 0.0
  %1123 = vmatprep.subr.mxu0 0.0
  %1124 = vmatpush1.msra.mxu0 0.0
  %1125 = vmatprep.subr.mxu0 0.0
  %1126 = vmatpush1.msra.mxu0 0.0
  %1127 = vmatprep.subr.mxu0 0.0
  %1128 = vmatpush1.msra.mxu0 0.0
  %1129 = vmatprep.subr.mxu0 0.0
  %1130 = vmatpush1.msra.mxu0 0.0
  %1131 = vmatprep.subr.mxu0 0.0
  %1132 = vmatpush1.msra.mxu0 0.0
  %1133 = vmatprep.subr.mxu0 0.0
  %1134 = vmatpush1.msra.mxu0 0.0
  %1135 = vmatprep.subr.mxu0 0.0
  %1136 = vmatpush1.msra.mxu0 0.0
  %1137 = vmatprep.subr.mxu0 0.0
  %1138 = vmatpush1.msra.mxu0 0.0
  %1139 = vmatprep.mubr.f32.mxu0 0.0
  %1140 = vmatmul.mubr.f32.gmra.mrb[0].mxu0 %v1052
  %v1141 = vpop.f32.mrb[0].mxu0
  %v1142 = vadd.f32 0.0, %v1141
  %v1143 = vpop.f32.mrb[0].mxu0
  %1144 = vmatprep.mubr.f32.mxu0 0.0
  %1145 = vmatmul.mubr.f32.gmra.mrb[0].mxu0 %v1055
  %v1146 = vpop.f32.mrb[0].mxu0
  %v1147 = vadd.f32 0.0, %v1146
  %v1148 = vpop.f32.mrb[0].mxu0
  %1149 = vmatprep.mubr.f32.mxu0 0.0
  %1150 = vmatmul.mubr.f32.gmra.mrb[0].mxu0 %v1058
  %v1151 = vpop.f32.mrb[0].mxu0
  %v1152 = vadd.f32 0.0, %v1151
  %v1153 = vpop.f32.mrb[0].mxu0
  %1154 = vmatprep.mubr.f32.mxu0 0.0
  %1155 = vmatmul.mubr.f32.gmra.mrb[0].mxu0 %v1061
  %v1156 = vpop.f32.mrb[0].mxu0
  %v1157 = vadd.f32 0.0, %v1156
  %v1158 = vpop.f32.mrb[0].mxu0
  %1159 = vmatprep.mubr.f32.mxu0 0.0
  %1160 = vmatmul.mubr.f32.gmra.mrb[0].mxu0 %v1064
  %v1161 = vpop.f32.mrb[0].mxu0
  %v1162 = vadd.f32 0.0, %v1161
  %v1163 = vpop.f32.mrb[0].mxu0
  %1164 = vmatprep.mubr.f32.mxu0 0.0
  %1165 = vmatmul.mubr.f32.gmra.mrb[0].mxu0 %v1067
  %v1166 = vpop.f32.mrb[0].mxu0
  %v1167 = vadd.f32 0.0, %v1166
  %v1168 = vpop.f32.mrb[0].mxu0
  %1169 = vmatprep.mubr.f32.mxu0 0.0
  %1170 = vmatmul.mubr.f32.gmra.mrb[0].mxu0 %v1070
  %v1171 = vpop.f32.mrb[0].mxu0
  %v1172 = vadd.f32 0.0, %v1171
  %v1173 = vpop.f32.mrb[0].mxu0
  %1174 = vmatprep.mubr.f32.mxu0 0.0
  %1175 = vmatmul.mubr.f32.gmra.mrb[0].mxu0 %v1073
  %v1176 = vpop.f32.mrb[0].mxu0
  %v1177 = vadd.f32 0.0, %v1176
  %v1178 = vpop.f32.mrb[0].mxu0
  %1179 = vdwg.mxu0
  %v1180 = vadd.f32 %v62, %v1142
  %v1181 = vadd.f32 %v63, %v1147
  %v1182 = vadd.f32 %v64, %v1152
  %v1183 = vadd.f32 %v65, %v1157
  %v1184 = vadd.f32 %v66, %v1162
  %v1185 = vadd.f32 %v67, %v1167
  %v1186 = vadd.f32 %v68, %v1172
  %v1187 = vadd.f32 %v69, %v1177
  %v1189 = vlaneseq
  %v1190 = vshrl.u32 %v1189, 7
  %v1191 = vsub.s32 0, %v1190
  %v1192 = vrot.slane %v81, %v1191
  %v1194 = vadd.f32 %v1180, %v1192
  %v1195 = vadd.f32 %v1181, %v1192
  %v1196 = vadd.f32 %v1182, %v1192
  %v1197 = vadd.f32 %v1183, %v1192
  %v1198 = vadd.f32 %v1184, %v1192
  %v1199 = vadd.f32 %v1185, %v1192
  %v1200 = vadd.f32 %v1186, %v1192
  %v1201 = vadd.f32 %v1187, %v1192
  %v1202 = vsel %vm128, %v1194, 0.0
  %1203 = vadd.xlane.f32.xlu0 %v1202
  %v1204 = vpop.xlane.xlu0 %1203
  %v1205 = vsel %vm128, %v1195, 0.0
  %1206 = vadd.xlane.f32.xlu0 %v1205
  %v1207 = vpop.xlane.xlu0 %1206
  %v1208 = vsel %vm128, %v1196, 0.0
  %1209 = vadd.xlane.f32.xlu0 %v1208
  %v1210 = vpop.xlane.xlu0 %1209
  %v1211 = vsel %vm128, %v1197, 0.0
  %1212 = vadd.xlane.f32.xlu0 %v1211
  %v1213 = vpop.xlane.xlu0 %1212
  %v1214 = vsel %vm128, %v1198, 0.0
  %1215 = vadd.xlane.f32.xlu0 %v1214
  %v1216 = vpop.xlane.xlu0 %1215
  %v1217 = vsel %vm128, %v1199, 0.0
  %1218 = vadd.xlane.f32.xlu0 %v1217
  %v1219 = vpop.xlane.xlu0 %1218
  %v1220 = vsel %vm128, %v1200, 0.0
  %1221 = vadd.xlane.f32.xlu0 %v1220
  %v1222 = vpop.xlane.xlu0 %1221
  %v1223 = vsel %vm128, %v1201, 0.0
  %1224 = vadd.xlane.f32.xlu0 %v1223
  %v1225 = vpop.xlane.xlu0 %1224
  %v1226 = vrcp.pop 8.0
  %v1227 = vmul.f32 %v1204, %v1226
  %v1228 = vmul.f32 %v1207, %v1226
  %v1229 = vmul.f32 %v1210, %v1226
  %v1230 = vmul.f32 %v1213, %v1226
  %v1231 = vmul.f32 %v1216, %v1226
  %v1232 = vmul.f32 %v1219, %v1226
  %v1233 = vmul.f32 %v1222, %v1226
  %v1234 = vmul.f32 %v1225, %v1226
  %v1235 = vsub.f32 %v1194, %v1227
  %v1236 = vsub.f32 %v1195, %v1228
  %v1237 = vsub.f32 %v1196, %v1229
  %v1238 = vsub.f32 %v1197, %v1230
  %v1239 = vsub.f32 %v1198, %v1231
  %v1240 = vsub.f32 %v1199, %v1232
  %v1241 = vsub.f32 %v1200, %v1233
  %v1242 = vsub.f32 %v1201, %v1234
  %v1243 = vmul.f32 %v1235, %v1235
  %v1244 = vmul.f32 %v1236, %v1236
  %v1245 = vmul.f32 %v1237, %v1237
  %v1246 = vmul.f32 %v1238, %v1238
  %v1247 = vmul.f32 %v1239, %v1239
  %v1248 = vmul.f32 %v1240, %v1240
  %v1249 = vmul.f32 %v1241, %v1241
  %v1250 = vmul.f32 %v1242, %v1242
  %v1251 = vsel %vm128, %v1243, 0.0
  %1252 = vadd.xlane.f32.xlu0 %v1251
  %v1253 = vpop.xlane.xlu0 %1252
  %v1254 = vsel %vm128, %v1244, 0.0
  %1255 = vadd.xlane.f32.xlu0 %v1254
  %v1256 = vpop.xlane.xlu0 %1255
  %v1257 = vsel %vm128, %v1245, 0.0
  %1258 = vadd.xlane.f32.xlu0 %v1257
  %v1259 = vpop.xlane.xlu0 %1258
  %v1260 = vsel %vm128, %v1246, 0.0
  %1261 = vadd.xlane.f32.xlu0 %v1260
  %v1262 = vpop.xlane.xlu0 %1261
  %v1263 = vsel %vm128, %v1247, 0.0
  %1264 = vadd.xlane.f32.xlu0 %v1263
  %v1265 = vpop.xlane.xlu0 %1264
  %v1266 = vsel %vm128, %v1248, 0.0
  %1267 = vadd.xlane.f32.xlu0 %v1266
  %v1268 = vpop.xlane.xlu0 %1267
  %v1269 = vsel %vm128, %v1249, 0.0
  %1270 = vadd.xlane.f32.xlu0 %v1269
  %v1271 = vpop.xlane.xlu0 %1270
  %v1272 = vsel %vm128, %v1250, 0.0
  %1273 = vadd.xlane.f32.xlu0 %v1272
  %v1274 = vpop.xlane.xlu0 %1273
  %v1275 = vmul.f32 %v1253, %v1226
  %v1276 = vmul.f32 %v1256, %v1226
  %v1277 = vmul.f32 %v1259, %v1226
  %v1278 = vmul.f32 %v1262, %v1226
  %v1279 = vmul.f32 %v1265, %v1226
  %v1280 = vmul.f32 %v1268, %v1226
  %v1281 = vmul.f32 %v1271, %v1226
  %v1282 = vmul.f32 %v1274, %v1226
  %v1283 = vadd.f32 %v1275, 1e-05
  %v1284 = vadd.f32 %v1276, 1e-05
  %v1285 = vadd.f32 %v1277, 1e-05
  %v1286 = vadd.f32 %v1278, 1e-05
  %v1287 = vadd.f32 %v1279, 1e-05
  %v1288 = vadd.f32 %v1280, 1e-05
  %v1289 = vadd.f32 %v1281, 1e-05
  %v1290 = vadd.f32 %v1282, 1e-05
  %v1291 = vrsqrt.pop %v1283
  %v1292 = vrsqrt.pop %v1284
  %v1293 = vrsqrt.pop %v1285
  %v1294 = vrsqrt.pop %v1286
  %v1295 = vrsqrt.pop %v1287
  %v1296 = vrsqrt.pop %v1288
  %v1297 = vrsqrt.pop %v1289
  %v1298 = vrsqrt.pop %v1290
  %v1299 = vmul.f32 %v1235, %v1291
  %v1300 = vmul.f32 %v1236, %v1292
  %v1301 = vmul.f32 %v1237, %v1293
  %v1302 = vmul.f32 %v1238, %v1294
  %v1303 = vmul.f32 %v1239, %v1295
  %v1304 = vmul.f32 %v1240, %v1296
  %v1305 = vmul.f32 %v1241, %v1297
  %v1306 = vmul.f32 %v1242, %v1298
  %v1307 = vlaneseq
  %v1308 = vshrl.u32 %v1307, 7
  %v1309 = vsub.s32 0, %v1308
  %v1310 = vrot.slane %v121, %v1309
  %v1311 = vmul.f32 %v1299, %v1310
  %v1312 = vmul.f32 %v1300, %v1310
  %v1313 = vmul.f32 %v1301, %v1310
  %v1314 = vmul.f32 %v1302, %v1310
  %v1315 = vmul.f32 %v1303, %v1310
  %v1316 = vmul.f32 %v1304, %v1310
  %v1317 = vmul.f32 %v1305, %v1310
  %v1318 = vmul.f32 %v1306, %v1310
  %v1319 = vlaneseq
  %v1320 = vshrl.u32 %v1319, 7
  %v1321 = vsub.s32 1, %v1320
  %v1322 = vrot.slane %v121, %v1321
  %v1323 = vadd.f32 %v1311, %v1322
  %v1324 = vadd.f32 %v1312, %v1322
  %v1325 = vadd.f32 %v1313, %v1322
  %v1326 = vadd.f32 %v1314, %v1322
  %v1327 = vadd.f32 %v1315, %v1322
  %v1328 = vadd.f32 %v1316, %v1322
  %v1329 = vadd.f32 %v1317, %v1322
  %v1330 = vadd.f32 %v1318, %v1322
  %v1332 = vsel %vm614, %v97, 0
  %v1335 = vsel %vm614, %v98, 0
  %v1338 = vsel %vm614, %v99, 0
  %v1341 = vsel %vm614, %v100, 0
  %1343 = vmatprep.subr.mxu0 0.0
  %1344 = vmatpush1.msra.mxu0 %v1323
  %1345 = vmatprep.subr.mxu0 0.0
  %1346 = vmatpush1.msra.mxu0 %v1324
  %1347 = vmatprep.subr.mxu0 0.0
  %1348 = vmatpush1.msra.mxu0 0.0
  %1349 = vmatprep.subr.mxu0 0.0
  %1350 = vmatpush1.msra.mxu0 0.0
  %1351 = vmatprep.subr.mxu0 0.0
  %1352 = vmatpush1.msra.mxu0 0.0
  %1353 = vmatprep.subr.mxu0 0.0
  %1354 = vmatpush1.msra.mxu0 0.0
  %1355 = vmatprep.subr.mxu0 0.0
  %1356 = vmatpush1.msra.mxu0 0.0
  %1357 = vmatprep.subr.mxu0 0.0
  %1358 = vmatpush1.msra.mxu0 0.0
  %1359 = vmatprep.subr.mxu0 0.0
  %1360 = vmatpush1.msra.mxu0 0.0
  %1361 = vmatprep.subr.mxu0 0.0
  %1362 = vmatpush1.msra.mxu0 0.0
  %1363 = vmatprep.subr.mxu0 0.0
  %1364 = vmatpush1.msra.mxu0 0.0
  %1365 = vmatprep.subr.mxu0 0.0
  %1366 = vmatpush1.msra.mxu0 0.0
  %1367 = vmatprep.subr.mxu0 0.0
  %1368 = vmatpush1.msra.mxu0 0.0
  %1369 = vmatprep.subr.mxu0 0.0
  %1370 = vmatpush1.msra.mxu0 0.0
  %1371 = vmatprep.subr.mxu0 0.0
  %1372 = vmatpush1.msra.mxu0 0.0
  %1373 = vmatprep.subr.mxu0 0.0
  %1374 = vmatpush1.msra.mxu0 0.0
  %1375 = vmatprep.subr.mxu0 0.0
  %1376 = vmatpush1.msra.mxu0 0.0
  %1377 = vmatprep.subr.mxu0 0.0
  %1378 = vmatpush1.msra.mxu0 0.0
  %1379 = vmatprep.subr.mxu0 0.0
  %1380 = vmatpush1.msra.mxu0 0.0
  %1381 = vmatprep.subr.mxu0 0.0
  %1382 = vmatpush1.msra.mxu0 0.0
  %1383 = vmatprep.subr.mxu0 0.0
  %1384 = vmatpush1.msra.mxu0 0.0
  %1385 = vmatprep.subr.mxu0 0.0
  %1386 = vmatpush1.msra.mxu0 0.0
  %1387 = vmatprep.subr.mxu0 0.0
  %1388 = vmatpush1.msra.mxu0 0.0
  %1389 = vmatprep.subr.mxu0 0.0
  %1390 = vmatpush1.msra.mxu0 0.0
  %1391 = vmatprep.subr.mxu0 0.0
  %1392 = vmatpush1.msra.mxu0 0.0
  %1393 = vmatprep.subr.mxu0 0.0
  %1394 = vmatpush1.msra.mxu0 0.0
  %1395 = vmatprep.subr.mxu0 0.0
  %1396 = vmatpush1.msra.mxu0 0.0
  %1397 = vmatprep.subr.mxu0 0.0
  %1398 = vmatpush1.msra.mxu0 0.0
  %1399 = vmatprep.subr.mxu0 0.0
  %1400 = vmatpush1.msra.mxu0 0.0
  %1401 = vmatprep.subr.mxu0 0.0
  %1402 = vmatpush1.msra.mxu0 0.0
  %1403 = vmatprep.subr.mxu0 0.0
  %1404 = vmatpush1.msra.mxu0 0.0
  %1405 = vmatprep.subr.mxu0 0.0
  %1406 = vmatpush1.msra.mxu0 0.0
  %1407 = vmatprep.mubr.f32.mxu0 0.0
  %1408 = vmatmul.mubr.f32.gmra.mrb[0].mxu0 %v1332
  %v1409 = vpop.f32.mrb[0].mxu0
  %v1410 = vadd.f32 0.0, %v1409
  %v1411 = vpop.f32.mrb[0].mxu0
  %1412 = vmatprep.mubr.f32.mxu0 0.0
  %1413 = vmatmul.mubr.f32.gmra.mrb[0].mxu0 %v1335
  %v1414 = vpop.f32.mrb[0].mxu0
  %v1415 = vadd.f32 0.0, %v1414
  %v1416 = vpop.f32.mrb[0].mxu0
  %1417 = vmatprep.mubr.f32.mxu0 0.0
  %1418 = vmatmul.mubr.f32.gmra.mrb[0].mxu0 %v1338
  %v1419 = vpop.f32.mrb[0].mxu0
  %v1420 = vadd.f32 0.0, %v1419
  %v1421 = vpop.f32.mrb[0].mxu0
  %1422 = vmatprep.mubr.f32.mxu0 0.0
  %1423 = vmatmul.mubr.f32.gmra.mrb[0].mxu0 %v1341
  %v1424 = vpop.f32.mrb[0].mxu0
  %v1425 = vadd.f32 0.0, %v1424
  %v1426 = vpop.f32.mrb[0].mxu0
  %1427 = vdwg.mxu0
  %1428 = vmatprep.subr.mxu0 0.0
  %1429 = vmatpush1.msra.mxu0 %v1325
  %1430 = vmatprep.subr.mxu0 0.0
  %1431 = vmatpush1.msra.mxu0 %v1326
  %1432 = vmatprep.subr.mxu0 0.0
  %1433 = vmatpush1.msra.mxu0 0.0
  %1434 = vmatprep.subr.mxu0 0.0
  %1435 = vmatpush1.msra.mxu0 0.0
  %1436 = vmatprep.subr.mxu0 0.0
  %1437 = vmatpush1.msra.mxu0 0.0
  %1438 = vmatprep.subr.mxu0 0.0
  %1439 = vmatpush1.msra.mxu0 0.0
  %1440 = vmatprep.subr.mxu0 0.0
  %1441 = vmatpush1.msra.mxu0 0.0
  %1442 = vmatprep.subr.mxu0 0.0
  %1443 = vmatpush1.msra.mxu0 0.0
  %1444 = vmatprep.subr.mxu0 0.0
  %1445 = vmatpush1.msra.mxu0 0.0
  %1446 = vmatprep.subr.mxu0 0.0
  %1447 = vmatpush1.msra.mxu0 0.0
  %1448 = vmatprep.subr.mxu0 0.0
  %1449 = vmatpush1.msra.mxu0 0.0
  %1450 = vmatprep.subr.mxu0 0.0
  %1451 = vmatpush1.msra.mxu0 0.0
  %1452 = vmatprep.subr.mxu0 0.0
  %1453 = vmatpush1.msra.mxu0 0.0
  %1454 = vmatprep.subr.mxu0 0.0
  %1455 = vmatpush1.msra.mxu0 0.0
  %1456 = vmatprep.subr.mxu0 0.0
  %1457 = vmatpush1.msra.mxu0 0.0
  %1458 = vmatprep.subr.mxu0 0.0
  %1459 = vmatpush1.msra.mxu0 0.0
  %1460 = vmatprep.subr.mxu0 0.0
  %1461 = vmatpush1.msra.mxu0 0.0
  %1462 = vmatprep.subr.mxu0 0.0
  %1463 = vmatpush1.msra.mxu0 0.0
  %1464 = vmatprep.subr.mxu0 0.0
  %1465 = vmatpush1.msra.mxu0 0.0
  %1466 = vmatprep.subr.mxu0 0.0
  %1467 = vmatpush1.msra.mxu0 0.0
  %1468 = vmatprep.subr.mxu0 0.0
  %1469 = vmatpush1.msra.mxu0 0.0
  %1470 = vmatprep.subr.mxu0 0.0
  %1471 = vmatpush1.msra.mxu0 0.0
  %1472 = vmatprep.subr.mxu0 0.0
  %1473 = vmatpush1.msra.mxu0 0.0
  %1474 = vmatprep.subr.mxu0 0.0
  %1475 = vmatpush1.msra.mxu0 0.0
  %1476 = vmatprep.subr.mxu0 0.0
  %1477 = vmatpush1.msra.mxu0 0.0
  %1478 = vmatprep.subr.mxu0 0.0
  %1479 = vmatpush1.msra.mxu0 0.0
  %1480 = vmatprep.subr.mxu0 0.0
  %1481 = vmatpush1.msra.mxu0 0.0
  %1482 = vmatprep.subr.mxu0 0.0
  %1483 = vmatpush1.msra.mxu0 0.0
  %1484 = vmatprep.subr.mxu0 0.0
  %1485 = vmatpush1.msra.mxu0 0.0
  %1486 = vmatprep.subr.mxu0 0.0
  %1487 = vmatpush1.msra.mxu0 0.0
  %1488 = vmatprep.subr.mxu0 0.0
  %1489 = vmatpush1.msra.mxu0 0.0
  %1490 = vmatprep.subr.mxu0 0.0
  %1491 = vmatpush1.msra.mxu0 0.0
  %1492 = vmatprep.mubr.f32.mxu0 0.0
  %1493 = vmatmul.mubr.f32.gmra.mrb[0].mxu0 %v1332
  %v1494 = vpop.f32.mrb[0].mxu0
  %v1495 = vadd.f32 0.0, %v1494
  %v1496 = vpop.f32.mrb[0].mxu0
  %1497 = vmatprep.mubr.f32.mxu0 0.0
  %1498 = vmatmul.mubr.f32.gmra.mrb[0].mxu0 %v1335
  %v1499 = vpop.f32.mrb[0].mxu0
  %v1500 = vadd.f32 0.0, %v1499
  %v1501 = vpop.f32.mrb[0].mxu0
  %1502 = vmatprep.mubr.f32.mxu0 0.0
  %1503 = vmatmul.mubr.f32.gmra.mrb[0].mxu0 %v1338
  %v1504 = vpop.f32.mrb[0].mxu0
  %v1505 = vadd.f32 0.0, %v1504
  %v1506 = vpop.f32.mrb[0].mxu0
  %1507 = vmatprep.mubr.f32.mxu0 0.0
  %1508 = vmatmul.mubr.f32.gmra.mrb[0].mxu0 %v1341
  %v1509 = vpop.f32.mrb[0].mxu0
  %v1510 = vadd.f32 0.0, %v1509
  %v1511 = vpop.f32.mrb[0].mxu0
  %1512 = vdwg.mxu0
  %1513 = vmatprep.subr.mxu0 0.0
  %1514 = vmatpush1.msra.mxu0 %v1327
  %1515 = vmatprep.subr.mxu0 0.0
  %1516 = vmatpush1.msra.mxu0 %v1328
  %1517 = vmatprep.subr.mxu0 0.0
  %1518 = vmatpush1.msra.mxu0 0.0
  %1519 = vmatprep.subr.mxu0 0.0
  %1520 = vmatpush1.msra.mxu0 0.0
  %1521 = vmatprep.subr.mxu0 0.0
  %1522 = vmatpush1.msra.mxu0 0.0
  %1523 = vmatprep.subr.mxu0 0.0
  %1524 = vmatpush1.msra.mxu0 0.0
  %1525 = vmatprep.subr.mxu0 0.0
  %1526 = vmatpush1.msra.mxu0 0.0
  %1527 = vmatprep.subr.mxu0 0.0
  %1528 = vmatpush1.msra.mxu0 0.0
  %1529 = vmatprep.subr.mxu0 0.0
  %1530 = vmatpush1.msra.mxu0 0.0
  %1531 = vmatprep.subr.mxu0 0.0
  %1532 = vmatpush1.msra.mxu0 0.0
  %1533 = vmatprep.subr.mxu0 0.0
  %1534 = vmatpush1.msra.mxu0 0.0
  %1535 = vmatprep.subr.mxu0 0.0
  %1536 = vmatpush1.msra.mxu0 0.0
  %1537 = vmatprep.subr.mxu0 0.0
  %1538 = vmatpush1.msra.mxu0 0.0
  %1539 = vmatprep.subr.mxu0 0.0
  %1540 = vmatpush1.msra.mxu0 0.0
  %1541 = vmatprep.subr.mxu0 0.0
  %1542 = vmatpush1.msra.mxu0 0.0
  %1543 = vmatprep.subr.mxu0 0.0
  %1544 = vmatpush1.msra.mxu0 0.0
  %1545 = vmatprep.subr.mxu0 0.0
  %1546 = vmatpush1.msra.mxu0 0.0
  %1547 = vmatprep.subr.mxu0 0.0
  %1548 = vmatpush1.msra.mxu0 0.0
  %1549 = vmatprep.subr.mxu0 0.0
  %1550 = vmatpush1.msra.mxu0 0.0
  %1551 = vmatprep.subr.mxu0 0.0
  %1552 = vmatpush1.msra.mxu0 0.0
  %1553 = vmatprep.subr.mxu0 0.0
  %1554 = vmatpush1.msra.mxu0 0.0
  %1555 = vmatprep.subr.mxu0 0.0
  %1556 = vmatpush1.msra.mxu0 0.0
  %1557 = vmatprep.subr.mxu0 0.0
  %1558 = vmatpush1.msra.mxu0 0.0
  %1559 = vmatprep.subr.mxu0 0.0
  %1560 = vmatpush1.msra.mxu0 0.0
  %1561 = vmatprep.subr.mxu0 0.0
  %1562 = vmatpush1.msra.mxu0 0.0
  %1563 = vmatprep.subr.mxu0 0.0
  %1564 = vmatpush1.msra.mxu0 0.0
  %1565 = vmatprep.subr.mxu0 0.0
  %1566 = vmatpush1.msra.mxu0 0.0
  %1567 = vmatprep.subr.mxu0 0.0
  %1568 = vmatpush1.msra.mxu0 0.0
  %1569 = vmatprep.subr.mxu0 0.0
  %1570 = vmatpush1.msra.mxu0 0.0
  %1571 = vmatprep.subr.mxu0 0.0
  %1572 = vmatpush1.msra.mxu0 0.0
  %1573 = vmatprep.subr.mxu0 0.0
  %1574 = vmatpush1.msra.mxu0 0.0
  %1575 = vmatprep.subr.mxu0 0.0
  %1576 = vmatpush1.msra.mxu0 0.0
  %1577 = vmatprep.mubr.f32.mxu0 0.0
  %1578 = vmatmul.mubr.f32.gmra.mrb[0].mxu0 %v1332
  %v1579 = vpop.f32.mrb[0].mxu0
  %v1580 = vadd.f32 0.0, %v1579
  %v1581 = vpop.f32.mrb[0].mxu0
  %1582 = vmatprep.mubr.f32.mxu0 0.0
  %1583 = vmatmul.mubr.f32.gmra.mrb[0].mxu0 %v1335
  %v1584 = vpop.f32.mrb[0].mxu0
  %v1585 = vadd.f32 0.0, %v1584
  %v1586 = vpop.f32.mrb[0].mxu0
  %1587 = vmatprep.mubr.f32.mxu0 0.0
  %1588 = vmatmul.mubr.f32.gmra.mrb[0].mxu0 %v1338
  %v1589 = vpop.f32.mrb[0].mxu0
  %v1590 = vadd.f32 0.0, %v1589
  %v1591 = vpop.f32.mrb[0].mxu0
  %1592 = vmatprep.mubr.f32.mxu0 0.0
  %1593 = vmatmul.mubr.f32.gmra.mrb[0].mxu0 %v1341
  %v1594 = vpop.f32.mrb[0].mxu0
  %v1595 = vadd.f32 0.0, %v1594
  %v1596 = vpop.f32.mrb[0].mxu0
  %1597 = vdwg.mxu0
  %1598 = vmatprep.subr.mxu0 0.0
  %1599 = vmatpush1.msra.mxu0 %v1329
  %1600 = vmatprep.subr.mxu0 0.0
  %1601 = vmatpush1.msra.mxu0 %v1330
  %1602 = vmatprep.subr.mxu0 0.0
  %1603 = vmatpush1.msra.mxu0 0.0
  %1604 = vmatprep.subr.mxu0 0.0
  %1605 = vmatpush1.msra.mxu0 0.0
  %1606 = vmatprep.subr.mxu0 0.0
  %1607 = vmatpush1.msra.mxu0 0.0
  %1608 = vmatprep.subr.mxu0 0.0
  %1609 = vmatpush1.msra.mxu0 0.0
  %1610 = vmatprep.subr.mxu0 0.0
  %1611 = vmatpush1.msra.mxu0 0.0
  %1612 = vmatprep.subr.mxu0 0.0
  %1613 = vmatpush1.msra.mxu0 0.0
  %1614 = vmatprep.subr.mxu0 0.0
  %1615 = vmatpush1.msra.mxu0 0.0
  %1616 = vmatprep.subr.mxu0 0.0
  %1617 = vmatpush1.msra.mxu0 0.0
  %1618 = vmatprep.subr.mxu0 0.0
  %1619 = vmatpush1.msra.mxu0 0.0
  %1620 = vmatprep.subr.mxu0 0.0
  %1621 = vmatpush1.msra.mxu0 0.0
  %1622 = vmatprep.subr.mxu0 0.0
  %1623 = vmatpush1.msra.mxu0 0.0
  %1624 = vmatprep.subr.mxu0 0.0
  %1625 = vmatpush1.msra.mxu0 0.0
  %1626 = vmatprep.subr.mxu0 0.0
  %1627 = vmatpush1.msra.mxu0 0.0
  %1628 = vmatprep.subr.mxu0 0.0
  %1629 = vmatpush1.msra.mxu0 0.0
  %1630 = vmatprep.subr.mxu0 0.0
  %1631 = vmatpush1.msra.mxu0 0.0
  %1632 = vmatprep.subr.mxu0 0.0
  %1633 = vmatpush1.msra.mxu0 0.0
  %1634 = vmatprep.subr.mxu0 0.0
  %1635 = vmatpush1.msra.mxu0 0.0
  %1636 = vmatprep.subr.mxu0 0.0
  %1637 = vmatpush1.msra.mxu0 0.0
  %1638 = vmatprep.subr.mxu0 0.0
  %1639 = vmatpush1.msra.mxu0 0.0
  %1640 = vmatprep.subr.mxu0 0.0
  %1641 = vmatpush1.msra.mxu0 0.0
  %1642 = vmatprep.subr.mxu0 0.0
  %1643 = vmatpush1.msra.mxu0 0.0
  %1644 = vmatprep.subr.mxu0 0.0
  %1645 = vmatpush1.msra.mxu0 0.0
  %1646 = vmatprep.subr.mxu0 0.0
  %1647 = vmatpush1.msra.mxu0 0.0
  %1648 = vmatprep.subr.mxu0 0.0
  %1649 = vmatpush1.msra.mxu0 0.0
  %1650 = vmatprep.subr.mxu0 0.0
  %1651 = vmatpush1.msra.mxu0 0.0
  %1652 = vmatprep.subr.mxu0 0.0
  %1653 = vmatpush1.msra.mxu0 0.0
  %1654 = vmatprep.subr.mxu0 0.0
  %1655 = vmatpush1.msra.mxu0 0.0
  %1656 = vmatprep.subr.mxu0 0.0
  %1657 = vmatpush1.msra.mxu0 0.0
  %1658 = vmatprep.subr.mxu0 0.0
  %1659 = vmatpush1.msra.mxu0 0.0
  %1660 = vmatprep.subr.mxu0 0.0
  %1661 = vmatpush1.msra.mxu0 0.0
  %1662 = vmatprep.mubr.f32.mxu0 0.0
  %1663 = vmatmul.mubr.f32.gmra.mrb[0].mxu0 %v1332
  %v1664 = vpop.f32.mrb[0].mxu0
  %v1665 = vadd.f32 0.0, %v1664
  %v1666 = vpop.f32.mrb[0].mxu0
  %1667 = vmatprep.mubr.f32.mxu0 0.0
  %1668 = vmatmul.mubr.f32.gmra.mrb[0].mxu0 %v1335
  %v1669 = vpop.f32.mrb[0].mxu0
  %v1670 = vadd.f32 0.0, %v1669
  %v1671 = vpop.f32.mrb[0].mxu0
  %1672 = vmatprep.mubr.f32.mxu0 0.0
  %1673 = vmatmul.mubr.f32.gmra.mrb[0].mxu0 %v1338
  %v1674 = vpop.f32.mrb[0].mxu0
  %v1675 = vadd.f32 0.0, %v1674
  %v1676 = vpop.f32.mrb[0].mxu0
  %1677 = vmatprep.mubr.f32.mxu0 0.0
  %1678 = vmatmul.mubr.f32.gmra.mrb[0].mxu0 %v1341
  %v1679 = vpop.f32.mrb[0].mxu0
  %v1680 = vadd.f32 0.0, %v1679
  %v1681 = vpop.f32.mrb[0].mxu0
  %1682 = vdwg.mxu0
  %1684 = vset.pattern.permute.xlu0 0
  %1685 = vperm.xlu0 %1684, %v109
  %v1686 = vpop.permute.xlu0 %1685
  %1689 = vset.pattern.permute.xlu0 0
  %1690 = vperm.xlu0 %1689, %v110
  %v1691 = vpop.permute.xlu0 %1690
  %1694 = vset.pattern.permute.xlu0 0
  %1695 = vperm.xlu0 %1694, %v111
  %v1696 = vpop.permute.xlu0 %1695
  %1699 = vset.pattern.permute.xlu0 0
  %1700 = vperm.xlu0 %1699, %v112
  %v1701 = vpop.permute.xlu0 %1700
  %v1703 = vadd.f32 %v1410, %v1686
  %v1704 = vadd.f32 %v1415, %v1691
  %v1705 = vadd.f32 %v1420, %v1696
  %v1706 = vadd.f32 %v1425, %v1701
  %v1707 = vadd.f32 %v1495, %v1686
  %v1708 = vadd.f32 %v1500, %v1691
  %v1709 = vadd.f32 %v1505, %v1696
  %v1710 = vadd.f32 %v1510, %v1701
  %v1711 = vadd.f32 %v1580, %v1686
  %v1712 = vadd.f32 %v1585, %v1691
  %v1713 = vadd.f32 %v1590, %v1696
  %v1714 = vadd.f32 %v1595, %v1701
  %v1715 = vadd.f32 %v1665, %v1686
  %v1716 = vadd.f32 %v1670, %v1691
  %v1717 = vadd.f32 %v1675, %v1696
  %v1718 = vadd.f32 %v1680, %v1701
  %v1719 = vxor.u32 %v1703, 2147483648
  %v1720 = vxor.u32 %v1704, 2147483648
  %v1721 = vxor.u32 %v1705, 2147483648
  %v1722 = vxor.u32 %v1706, 2147483648
  %v1723 = vxor.u32 %v1707, 2147483648
  %v1724 = vxor.u32 %v1708, 2147483648
  %v1725 = vxor.u32 %v1709, 2147483648
  %v1726 = vxor.u32 %v1710, 2147483648
  %v1727 = vxor.u32 %v1711, 2147483648
  %v1728 = vxor.u32 %v1712, 2147483648
  %v1729 = vxor.u32 %v1713, 2147483648
  %v1730 = vxor.u32 %v1714, 2147483648
  %v1731 = vxor.u32 %v1715, 2147483648
  %v1732 = vxor.u32 %v1716, 2147483648
  %v1733 = vxor.u32 %v1717, 2147483648
  %v1734 = vxor.u32 %v1718, 2147483648
  %v1735 = vmul.f32 %v1719, 1.442695
  %v1736 = vpow.pop %v1735
  %v1737 = vmul.f32 %v1720, 1.442695
  %v1738 = vpow.pop %v1737
  %v1739 = vmul.f32 %v1721, 1.442695
  %v1740 = vpow.pop %v1739
  %v1741 = vmul.f32 %v1722, 1.442695
  %v1742 = vpow.pop %v1741
  %v1743 = vmul.f32 %v1723, 1.442695
  %v1744 = vpow.pop %v1743
  %v1745 = vmul.f32 %v1724, 1.442695
  %v1746 = vpow.pop %v1745
  %v1747 = vmul.f32 %v1725, 1.442695
  %v1748 = vpow.pop %v1747
  %v1749 = vmul.f32 %v1726, 1.442695
  %v1750 = vpow.pop %v1749
  %v1751 = vmul.f32 %v1727, 1.442695
  %v1752 = vpow.pop %v1751
  %v1753 = vmul.f32 %v1728, 1.442695
  %v1754 = vpow.pop %v1753
  %v1755 = vmul.f32 %v1729, 1.442695
  %v1756 = vpow.pop %v1755
  %v1757 = vmul.f32 %v1730, 1.442695
  %v1758 = vpow.pop %v1757
  %v1759 = vmul.f32 %v1731, 1.442695
  %v1760 = vpow.pop %v1759
  %v1761 = vmul.f32 %v1732, 1.442695
  %v1762 = vpow.pop %v1761
  %v1763 = vmul.f32 %v1733, 1.442695
  %v1764 = vpow.pop %v1763
  %v1765 = vmul.f32 %v1734, 1.442695
  %v1766 = vpow.pop %v1765
  %v1767 = vadd.f32 %v1736, 1.0
  %v1768 = vadd.f32 %v1738, 1.0
  %v1769 = vadd.f32 %v1740, 1.0
  %v1770 = vadd.f32 %v1742, 1.0
  %v1771 = vadd.f32 %v1744, 1.0
  %v1772 = vadd.f32 %v1746, 1.0
  %v1773 = vadd.f32 %v1748, 1.0
  %v1774 = vadd.f32 %v1750, 1.0
  %v1775 = vadd.f32 %v1752, 1.0
  %v1776 = vadd.f32 %v1754, 1.0
  %v1777 = vadd.f32 %v1756, 1.0
  %v1778 = vadd.f32 %v1758, 1.0
  %v1779 = vadd.f32 %v1760, 1.0
  %v1780 = vadd.f32 %v1762, 1.0
  %v1781 = vadd.f32 %v1764, 1.0
  %v1782 = vadd.f32 %v1766, 1.0
  %v1783 = vrcp.pop %v1767
  %v1784 = vmul.f32 1.0, %v1783
  %v1785 = vrcp.pop %v1768
  %v1786 = vmul.f32 1.0, %v1785
  %v1787 = vrcp.pop %v1769
  %v1788 = vmul.f32 1.0, %v1787
  %v1789 = vrcp.pop %v1770
  %v1790 = vmul.f32 1.0, %v1789
  %v1791 = vrcp.pop %v1771
  %v1792 = vmul.f32 1.0, %v1791
  %v1793 = vrcp.pop %v1772
  %v1794 = vmul.f32 1.0, %v1793
  %v1795 = vrcp.pop %v1773
  %v1796 = vmul.f32 1.0, %v1795
  %v1797 = vrcp.pop %v1774
  %v1798 = vmul.f32 1.0, %v1797
  %v1799 = vrcp.pop %v1775
  %v1800 = vmul.f32 1.0, %v1799
  %v1801 = vrcp.pop %v1776
  %v1802 = vmul.f32 1.0, %v1801
  %v1803 = vrcp.pop %v1777
  %v1804 = vmul.f32 1.0, %v1803
  %v1805 = vrcp.pop %v1778
  %v1806 = vmul.f32 1.0, %v1805
  %v1807 = vrcp.pop %v1779
  %v1808 = vmul.f32 1.0, %v1807
  %v1809 = vrcp.pop %v1780
  %v1810 = vmul.f32 1.0, %v1809
  %v1811 = vrcp.pop %v1781
  %v1812 = vmul.f32 1.0, %v1811
  %v1813 = vrcp.pop %v1782
  %v1814 = vmul.f32 1.0, %v1813
  %v1816 = vsel %vm614, %v101, 0
  %v1819 = vsel %vm614, %v102, 0
  %v1822 = vsel %vm614, %v103, 0
  %v1825 = vsel %vm614, %v104, 0
  %1827 = vmatprep.subr.mxu0 0.0
  %1828 = vmatpush1.msra.mxu0 %v1788
  %1829 = vmatprep.subr.mxu0 0.0
  %1830 = vmatpush1.msra.mxu0 %v1790
  %1831 = vmatprep.subr.mxu0 0.0
  %1832 = vmatpush1.msra.mxu0 0.0
  %1833 = vmatprep.subr.mxu0 0.0
  %1834 = vmatpush1.msra.mxu0 0.0
  %1835 = vmatprep.subr.mxu0 0.0
  %1836 = vmatpush1.msra.mxu0 0.0
  %1837 = vmatprep.subr.mxu0 0.0
  %1838 = vmatpush1.msra.mxu0 0.0
  %1839 = vmatprep.subr.mxu0 0.0
  %1840 = vmatpush1.msra.mxu0 0.0
  %1841 = vmatprep.subr.mxu0 0.0
  %1842 = vmatpush1.msra.mxu0 0.0
  %1843 = vmatprep.subr.mxu0 0.0
  %1844 = vmatpush1.msra.mxu0 0.0
  %1845 = vmatprep.subr.mxu0 0.0
  %1846 = vmatpush1.msra.mxu0 0.0
  %1847 = vmatprep.subr.mxu0 0.0
  %1848 = vmatpush1.msra.mxu0 0.0
  %1849 = vmatprep.subr.mxu0 0.0
  %1850 = vmatpush1.msra.mxu0 0.0
  %1851 = vmatprep.subr.mxu0 0.0
  %1852 = vmatpush1.msra.mxu0 0.0
  %1853 = vmatprep.subr.mxu0 0.0
  %1854 = vmatpush1.msra.mxu0 0.0
  %1855 = vmatprep.subr.mxu0 0.0
  %1856 = vmatpush1.msra.mxu0 0.0
  %1857 = vmatprep.subr.mxu0 0.0
  %1858 = vmatpush1.msra.mxu0 0.0
  %1859 = vmatprep.subr.mxu0 0.0
  %1860 = vmatpush1.msra.mxu0 0.0
  %1861 = vmatprep.subr.mxu0 0.0
  %1862 = vmatpush1.msra.mxu0 0.0
  %1863 = vmatprep.subr.mxu0 0.0
  %1864 = vmatpush1.msra.mxu0 0.0
  %1865 = vmatprep.subr.mxu0 0.0
  %1866 = vmatpush1.msra.mxu0 0.0
  %1867 = vmatprep.subr.mxu0 0.0
  %1868 = vmatpush1.msra.mxu0 0.0
  %1869 = vmatprep.subr.mxu0 0.0
  %1870 = vmatpush1.msra.mxu0 0.0
  %1871 = vmatprep.subr.mxu0 0.0
  %1872 = vmatpush1.msra.mxu0 0.0
  %1873 = vmatprep.subr.mxu0 0.0
  %1874 = vmatpush1.msra.mxu0 0.0
  %1875 = vmatprep.subr.mxu0 0.0
  %1876 = vmatpush1.msra.mxu0 0.0
  %1877 = vmatprep.subr.mxu0 0.0
  %1878 = vmatpush1.msra.mxu0 0.0
  %1879 = vmatprep.subr.mxu0 0.0
  %1880 = vmatpush1.msra.mxu0 0.0
  %1881 = vmatprep.subr.mxu0 0.0
  %1882 = vmatpush1.msra.mxu0 0.0
  %1883 = vmatprep.subr.mxu0 0.0
  %1884 = vmatpush1.msra.mxu0 0.0
  %1885 = vmatprep.subr.mxu0 0.0
  %1886 = vmatpush1.msra.mxu0 0.0
  %1887 = vmatprep.subr.mxu0 0.0
  %1888 = vmatpush1.msra.mxu0 0.0
  %1889 = vmatprep.subr.mxu0 0.0
  %1890 = vmatpush1.msra.mxu0 0.0
  %1891 = vmatprep.mubr.f32.mxu0 0.0
  %1892 = vmatmul.mubr.f32.gmra.mrb[0].mxu0 %v1816
  %v1893 = vpop.f32.mrb[0].mxu0
  %v1894 = vadd.f32 0.0, %v1893
  %v1895 = vpop.f32.mrb[0].mxu0
  %1896 = vmatprep.mubr.f32.mxu0 0.0
  %1897 = vmatmul.mubr.f32.gmra.mrb[0].mxu0 %v1819
  %v1898 = vpop.f32.mrb[0].mxu0
  %v1899 = vadd.f32 0.0, %v1898
  %v1900 = vpop.f32.mrb[0].mxu0
  %1901 = vmatprep.mubr.f32.mxu0 0.0
  %1902 = vmatmul.mubr.f32.gmra.mrb[0].mxu0 %v1822
  %v1903 = vpop.f32.mrb[0].mxu0
  %v1904 = vadd.f32 0.0, %v1903
  %v1905 = vpop.f32.mrb[0].mxu0
  %1906 = vmatprep.mubr.f32.mxu0 0.0
  %1907 = vmatmul.mubr.f32.gmra.mrb[0].mxu0 %v1825
  %v1908 = vpop.f32.mrb[0].mxu0
  %v1909 = vadd.f32 0.0, %v1908
  %v1910 = vpop.f32.mrb[0].mxu0
  %1911 = vdwg.mxu0
  %1912 = vmatprep.subr.mxu0 0.0
  %1913 = vmatpush1.msra.mxu0 %v1796
  %1914 = vmatprep.subr.mxu0 0.0
  %1915 = vmatpush1.msra.mxu0 %v1798
  %1916 = vmatprep.subr.mxu0 0.0
  %1917 = vmatpush1.msra.mxu0 0.0
  %1918 = vmatprep.subr.mxu0 0.0
  %1919 = vmatpush1.msra.mxu0 0.0
  %1920 = vmatprep.subr.mxu0 0.0
  %1921 = vmatpush1.msra.mxu0 0.0
  %1922 = vmatprep.subr.mxu0 0.0
  %1923 = vmatpush1.msra.mxu0 0.0
  %1924 = vmatprep.subr.mxu0 0.0
  %1925 = vmatpush1.msra.mxu0 0.0
  %1926 = vmatprep.subr.mxu0 0.0
  %1927 = vmatpush1.msra.mxu0 0.0
  %1928 = vmatprep.subr.mxu0 0.0
  %1929 = vmatpush1.msra.mxu0 0.0
  %1930 = vmatprep.subr.mxu0 0.0
  %1931 = vmatpush1.msra.mxu0 0.0
  %1932 = vmatprep.subr.mxu0 0.0
  %1933 = vmatpush1.msra.mxu0 0.0
  %1934 = vmatprep.subr.mxu0 0.0
  %1935 = vmatpush1.msra.mxu0 0.0
  %1936 = vmatprep.subr.mxu0 0.0
  %1937 = vmatpush1.msra.mxu0 0.0
  %1938 = vmatprep.subr.mxu0 0.0
  %1939 = vmatpush1.msra.mxu0 0.0
  %1940 = vmatprep.subr.mxu0 0.0
  %1941 = vmatpush1.msra.mxu0 0.0
  %1942 = vmatprep.subr.mxu0 0.0
  %1943 = vmatpush1.msra.mxu0 0.0
  %1944 = vmatprep.subr.mxu0 0.0
  %1945 = vmatpush1.msra.mxu0 0.0
  %1946 = vmatprep.subr.mxu0 0.0
  %1947 = vmatpush1.msra.mxu0 0.0
  %1948 = vmatprep.subr.mxu0 0.0
  %1949 = vmatpush1.msra.mxu0 0.0
  %1950 = vmatprep.subr.mxu0 0.0
  %1951 = vmatpush1.msra.mxu0 0.0
  %1952 = vmatprep.subr.mxu0 0.0
  %1953 = vmatpush1.msra.mxu0 0.0
  %1954 = vmatprep.subr.mxu0 0.0
  %1955 = vmatpush1.msra.mxu0 0.0
  %1956 = vmatprep.subr.mxu0 0.0
  %1957 = vmatpush1.msra.mxu0 0.0
  %1958 = vmatprep.subr.mxu0 0.0
  %1959 = vmatpush1.msra.mxu0 0.0
  %1960 = vmatprep.subr.mxu0 0.0
  %1961 = vmatpush1.msra.mxu0 0.0
  %1962 = vmatprep.subr.mxu0 0.0
  %1963 = vmatpush1.msra.mxu0 0.0
  %1964 = vmatprep.subr.mxu0 0.0
  %1965 = vmatpush1.msra.mxu0 0.0
  %1966 = vmatprep.subr.mxu0 0.0
  %1967 = vmatpush1.msra.mxu0 0.0
  %1968 = vmatprep.subr.mxu0 0.0
  %1969 = vmatpush1.msra.mxu0 0.0
  %1970 = vmatprep.subr.mxu0 0.0
  %1971 = vmatpush1.msra.mxu0 0.0
  %1972 = vmatprep.subr.mxu0 0.0
  %1973 = vmatpush1.msra.mxu0 0.0
  %1974 = vmatprep.subr.mxu0 0.0
  %1975 = vmatpush1.msra.mxu0 0.0
  %1976 = vmatprep.mubr.f32.mxu0 0.0
  %1977 = vmatmul.mubr.f32.gmra.mrb[0].mxu0 %v1816
  %v1978 = vpop.f32.mrb[0].mxu0
  %v1979 = vadd.f32 0.0, %v1978
  %v1980 = vpop.f32.mrb[0].mxu0
  %1981 = vmatprep.mubr.f32.mxu0 0.0
  %1982 = vmatmul.mubr.f32.gmra.mrb[0].mxu0 %v1819
  %v1983 = vpop.f32.mrb[0].mxu0
  %v1984 = vadd.f32 0.0, %v1983
  %v1985 = vpop.f32.mrb[0].mxu0
  %1986 = vmatprep.mubr.f32.mxu0 0.0
  %1987 = vmatmul.mubr.f32.gmra.mrb[0].mxu0 %v1822
  %v1988 = vpop.f32.mrb[0].mxu0
  %v1989 = vadd.f32 0.0, %v1988
  %v1990 = vpop.f32.mrb[0].mxu0
  %1991 = vmatprep.mubr.f32.mxu0 0.0
  %1992 = vmatmul.mubr.f32.gmra.mrb[0].mxu0 %v1825
  %v1993 = vpop.f32.mrb[0].mxu0
  %v1994 = vadd.f32 0.0, %v1993
  %v1995 = vpop.f32.mrb[0].mxu0
  %1996 = vdwg.mxu0
  %1997 = vmatprep.subr.mxu0 0.0
  %1998 = vmatpush1.msra.mxu0 %v1804
  %1999 = vmatprep.subr.mxu0 0.0
  %2000 = vmatpush1.msra.mxu0 %v1806
  %2001 = vmatprep.subr.mxu0 0.0
  %2002 = vmatpush1.msra.mxu0 0.0
  %2003 = vmatprep.subr.mxu0 0.0
  %2004 = vmatpush1.msra.mxu0 0.0
  %2005 = vmatprep.subr.mxu0 0.0
  %2006 = vmatpush1.msra.mxu0 0.0
  %2007 = vmatprep.subr.mxu0 0.0
  %2008 = vmatpush1.msra.mxu0 0.0
  %2009 = vmatprep.subr.mxu0 0.0
  %2010 = vmatpush1.msra.mxu0 0.0
  %2011 = vmatprep.subr.mxu0 0.0
  %2012 = vmatpush1.msra.mxu0 0.0
  %2013 = vmatprep.subr.mxu0 0.0
  %2014 = vmatpush1.msra.mxu0 0.0
  %2015 = vmatprep.subr.mxu0 0.0
  %2016 = vmatpush1.msra.mxu0 0.0
  %2017 = vmatprep.subr.mxu0 0.0
  %2018 = vmatpush1.msra.mxu0 0.0
  %2019 = vmatprep.subr.mxu0 0.0
  %2020 = vmatpush1.msra.mxu0 0.0
  %2021 = vmatprep.subr.mxu0 0.0
  %2022 = vmatpush1.msra.mxu0 0.0
  %2023 = vmatprep.subr.mxu0 0.0
  %2024 = vmatpush1.msra.mxu0 0.0
  %2025 = vmatprep.subr.mxu0 0.0
  %2026 = vmatpush1.msra.mxu0 0.0
  %2027 = vmatprep.subr.mxu0 0.0
  %2028 = vmatpush1.msra.mxu0 0.0
  %2029 = vmatprep.subr.mxu0 0.0
  %2030 = vmatpush1.msra.mxu0 0.0
  %2031 = vmatprep.subr.mxu0 0.0
  %2032 = vmatpush1.msra.mxu0 0.0
  %2033 = vmatprep.subr.mxu0 0.0
  %2034 = vmatpush1.msra.mxu0 0.0
  %2035 = vmatprep.subr.mxu0 0.0
  %2036 = vmatpush1.msra.mxu0 0.0
  %2037 = vmatprep.subr.mxu0 0.0
  %2038 = vmatpush1.msra.mxu0 0.0
  %2039 = vmatprep.subr.mxu0 0.0
  %2040 = vmatpush1.msra.mxu0 0.0
  %2041 = vmatprep.subr.mxu0 0.0
  %2042 = vmatpush1.msra.mxu0 0.0
  %2043 = vmatprep.subr.mxu0 0.0
  %2044 = vmatpush1.msra.mxu0 0.0
  %2045 = vmatprep.subr.mxu0 0.0
  %2046 = vmatpush1.msra.mxu0 0.0
  %2047 = vmatprep.subr.mxu0 0.0
  %2048 = vmatpush1.msra.mxu0 0.0
  %2049 = vmatprep.subr.mxu0 0.0
  %2050 = vmatpush1.msra.mxu0 0.0
  %2051 = vmatprep.subr.mxu0 0.0
  %2052 = vmatpush1.msra.mxu0 0.0
  %2053 = vmatprep.subr.mxu0 0.0
  %2054 = vmatpush1.msra.mxu0 0.0
  %2055 = vmatprep.subr.mxu0 0.0
  %2056 = vmatpush1.msra.mxu0 0.0
  %2057 = vmatprep.subr.mxu0 0.0
  %2058 = vmatpush1.msra.mxu0 0.0
  %2059 = vmatprep.subr.mxu0 0.0
  %2060 = vmatpush1.msra.mxu0 0.0
  %2061 = vmatprep.mubr.f32.mxu0 0.0
  %2062 = vmatmul.mubr.f32.gmra.mrb[0].mxu0 %v1816
  %v2063 = vpop.f32.mrb[0].mxu0
  %v2064 = vadd.f32 0.0, %v2063
  %v2065 = vpop.f32.mrb[0].mxu0
  %2066 = vmatprep.mubr.f32.mxu0 0.0
  %2067 = vmatmul.mubr.f32.gmra.mrb[0].mxu0 %v1819
  %v2068 = vpop.f32.mrb[0].mxu0
  %v2069 = vadd.f32 0.0, %v2068
  %v2070 = vpop.f32.mrb[0].mxu0
  %2071 = vmatprep.mubr.f32.mxu0 0.0
  %2072 = vmatmul.mubr.f32.gmra.mrb[0].mxu0 %v1822
  %v2073 = vpop.f32.mrb[0].mxu0
  %v2074 = vadd.f32 0.0, %v2073
  %v2075 = vpop.f32.mrb[0].mxu0
  %2076 = vmatprep.mubr.f32.mxu0 0.0
  %2077 = vmatmul.mubr.f32.gmra.mrb[0].mxu0 %v1825
  %v2078 = vpop.f32.mrb[0].mxu0
  %v2079 = vadd.f32 0.0, %v2078
  %v2080 = vpop.f32.mrb[0].mxu0
  %2081 = vdwg.mxu0
  %2082 = vmatprep.subr.mxu0 0.0
  %2083 = vmatpush1.msra.mxu0 %v1812
  %2084 = vmatprep.subr.mxu0 0.0
  %2085 = vmatpush1.msra.mxu0 %v1814
  %2086 = vmatprep.subr.mxu0 0.0
  %2087 = vmatpush1.msra.mxu0 0.0
  %2088 = vmatprep.subr.mxu0 0.0
  %2089 = vmatpush1.msra.mxu0 0.0
  %2090 = vmatprep.subr.mxu0 0.0
  %2091 = vmatpush1.msra.mxu0 0.0
  %2092 = vmatprep.subr.mxu0 0.0
  %2093 = vmatpush1.msra.mxu0 0.0
  %2094 = vmatprep.subr.mxu0 0.0
  %2095 = vmatpush1.msra.mxu0 0.0
  %2096 = vmatprep.subr.mxu0 0.0
  %2097 = vmatpush1.msra.mxu0 0.0
  %2098 = vmatprep.subr.mxu0 0.0
  %2099 = vmatpush1.msra.mxu0 0.0
  %2100 = vmatprep.subr.mxu0 0.0
  %2101 = vmatpush1.msra.mxu0 0.0
  %2102 = vmatprep.subr.mxu0 0.0
  %2103 = vmatpush1.msra.mxu0 0.0
  %2104 = vmatprep.subr.mxu0 0.0
  %2105 = vmatpush1.msra.mxu0 0.0
  %2106 = vmatprep.subr.mxu0 0.0
  %2107 = vmatpush1.msra.mxu0 0.0
  %2108 = vmatprep.subr.mxu0 0.0
  %2109 = vmatpush1.msra.mxu0 0.0
  %2110 = vmatprep.subr.mxu0 0.0
  %2111 = vmatpush1.msra.mxu0 0.0
  %2112 = vmatprep.subr.mxu0 0.0
  %2113 = vmatpush1.msra.mxu0 0.0
  %2114 = vmatprep.subr.mxu0 0.0
  %2115 = vmatpush1.msra.mxu0 0.0
  %2116 = vmatprep.subr.mxu0 0.0
  %2117 = vmatpush1.msra.mxu0 0.0
  %2118 = vmatprep.subr.mxu0 0.0
  %2119 = vmatpush1.msra.mxu0 0.0
  %2120 = vmatprep.subr.mxu0 0.0
  %2121 = vmatpush1.msra.mxu0 0.0
  %2122 = vmatprep.subr.mxu0 0.0
  %2123 = vmatpush1.msra.mxu0 0.0
  %2124 = vmatprep.subr.mxu0 0.0
  %2125 = vmatpush1.msra.mxu0 0.0
  %2126 = vmatprep.subr.mxu0 0.0
  %2127 = vmatpush1.msra.mxu0 0.0
  %2128 = vmatprep.subr.mxu0 0.0
  %2129 = vmatpush1.msra.mxu0 0.0
  %2130 = vmatprep.subr.mxu0 0.0
  %2131 = vmatpush1.msra.mxu0 0.0
  %2132 = vmatprep.subr.mxu0 0.0
  %2133 = vmatpush1.msra.mxu0 0.0
  %2134 = vmatprep.subr.mxu0 0.0
  %2135 = vmatpush1.msra.mxu0 0.0
  %2136 = vmatprep.subr.mxu0 0.0
  %2137 = vmatpush1.msra.mxu0 0.0
  %2138 = vmatprep.subr.mxu0 0.0
  %2139 = vmatpush1.msra.mxu0 0.0
  %2140 = vmatprep.subr.mxu0 0.0
  %2141 = vmatpush1.msra.mxu0 0.0
  %2142 = vmatprep.subr.mxu0 0.0
  %2143 = vmatpush1.msra.mxu0 0.0
  %2144 = vmatprep.subr.mxu0 0.0
  %2145 = vmatpush1.msra.mxu0 0.0
  %2146 = vmatprep.mubr.f32.mxu0 0.0
  %2147 = vmatmul.mubr.f32.gmra.mrb[0].mxu0 %v1816
  %v2148 = vpop.f32.mrb[0].mxu0
  %v2149 = vadd.f32 0.0, %v2148
  %v2150 = vpop.f32.mrb[0].mxu0
  %2151 = vmatprep.mubr.f32.mxu0 0.0
  %2152 = vmatmul.mubr.f32.gmra.mrb[0].mxu0 %v1819
  %v2153 = vpop.f32.mrb[0].mxu0
  %v2154 = vadd.f32 0.0, %v2153
  %v2155 = vpop.f32.mrb[0].mxu0
  %2156 = vmatprep.mubr.f32.mxu0 0.0
  %2157 = vmatmul.mubr.f32.gmra.mrb[0].mxu0 %v1822
  %v2158 = vpop.f32.mrb[0].mxu0
  %v2159 = vadd.f32 0.0, %v2158
  %v2160 = vpop.f32.mrb[0].mxu0
  %2161 = vmatprep.mubr.f32.mxu0 0.0
  %2162 = vmatmul.mubr.f32.gmra.mrb[0].mxu0 %v1825
  %v2163 = vpop.f32.mrb[0].mxu0
  %v2164 = vadd.f32 0.0, %v2163
  %v2165 = vpop.f32.mrb[0].mxu0
  %2166 = vdwg.mxu0
  %2168 = vset.pattern.permute.xlu0 0
  %2169 = vperm.xlu0 %2168, %v113
  %v2170 = vpop.permute.xlu0 %2169
  %2173 = vset.pattern.permute.xlu0 0
  %2174 = vperm.xlu0 %2173, %v114
  %v2175 = vpop.permute.xlu0 %2174
  %2178 = vset.pattern.permute.xlu0 0
  %2179 = vperm.xlu0 %2178, %v115
  %v2180 = vpop.permute.xlu0 %2179
  %2183 = vset.pattern.permute.xlu0 0
  %2184 = vperm.xlu0 %2183, %v116
  %v2185 = vpop.permute.xlu0 %2184
  %v2187 = vadd.f32 %v1894, %v2170
  %v2188 = vadd.f32 %v1899, %v2175
  %v2189 = vadd.f32 %v1904, %v2180
  %v2190 = vadd.f32 %v1909, %v2185
  %v2191 = vadd.f32 %v1979, %v2170
  %v2192 = vadd.f32 %v1984, %v2175
  %v2193 = vadd.f32 %v1989, %v2180
  %v2194 = vadd.f32 %v1994, %v2185
  %v2195 = vadd.f32 %v2064, %v2170
  %v2196 = vadd.f32 %v2069, %v2175
  %v2197 = vadd.f32 %v2074, %v2180
  %v2198 = vadd.f32 %v2079, %v2185
  %v2199 = vadd.f32 %v2149, %v2170
  %v2200 = vadd.f32 %v2154, %v2175
  %v2201 = vadd.f32 %v2159, %v2180
  %v2202 = vadd.f32 %v2164, %v2185
  %v2203 = vxor.u32 %v2187, 2147483648
  %v2204 = vxor.u32 %v2188, 2147483648
  %v2205 = vxor.u32 %v2189, 2147483648
  %v2206 = vxor.u32 %v2190, 2147483648
  %v2207 = vxor.u32 %v2191, 2147483648
  %v2208 = vxor.u32 %v2192, 2147483648
  %v2209 = vxor.u32 %v2193, 2147483648
  %v2210 = vxor.u32 %v2194, 2147483648
  %v2211 = vxor.u32 %v2195, 2147483648
  %v2212 = vxor.u32 %v2196, 2147483648
  %v2213 = vxor.u32 %v2197, 2147483648
  %v2214 = vxor.u32 %v2198, 2147483648
  %v2215 = vxor.u32 %v2199, 2147483648
  %v2216 = vxor.u32 %v2200, 2147483648
  %v2217 = vxor.u32 %v2201, 2147483648
  %v2218 = vxor.u32 %v2202, 2147483648
  %v2219 = vmul.f32 %v2203, 1.442695
  %v2220 = vpow.pop %v2219
  %v2221 = vmul.f32 %v2204, 1.442695
  %v2222 = vpow.pop %v2221
  %v2223 = vmul.f32 %v2205, 1.442695
  %v2224 = vpow.pop %v2223
  %v2225 = vmul.f32 %v2206, 1.442695
  %v2226 = vpow.pop %v2225
  %v2227 = vmul.f32 %v2207, 1.442695
  %v2228 = vpow.pop %v2227
  %v2229 = vmul.f32 %v2208, 1.442695
  %v2230 = vpow.pop %v2229
  %v2231 = vmul.f32 %v2209, 1.442695
  %v2232 = vpow.pop %v2231
  %v2233 = vmul.f32 %v2210, 1.442695
  %v2234 = vpow.pop %v2233
  %v2235 = vmul.f32 %v2211, 1.442695
  %v2236 = vpow.pop %v2235
  %v2237 = vmul.f32 %v2212, 1.442695
  %v2238 = vpow.pop %v2237
  %v2239 = vmul.f32 %v2213, 1.442695
  %v2240 = vpow.pop %v2239
  %v2241 = vmul.f32 %v2214, 1.442695
  %v2242 = vpow.pop %v2241
  %v2243 = vmul.f32 %v2215, 1.442695
  %v2244 = vpow.pop %v2243
  %v2245 = vmul.f32 %v2216, 1.442695
  %v2246 = vpow.pop %v2245
  %v2247 = vmul.f32 %v2217, 1.442695
  %v2248 = vpow.pop %v2247
  %v2249 = vmul.f32 %v2218, 1.442695
  %v2250 = vpow.pop %v2249
  %v2251 = vadd.f32 %v2220, 1.0
  %v2252 = vadd.f32 %v2222, 1.0
  %v2253 = vadd.f32 %v2224, 1.0
  %v2254 = vadd.f32 %v2226, 1.0
  %v2255 = vadd.f32 %v2228, 1.0
  %v2256 = vadd.f32 %v2230, 1.0
  %v2257 = vadd.f32 %v2232, 1.0
  %v2258 = vadd.f32 %v2234, 1.0
  %v2259 = vadd.f32 %v2236, 1.0
  %v2260 = vadd.f32 %v2238, 1.0
  %v2261 = vadd.f32 %v2240, 1.0
  %v2262 = vadd.f32 %v2242, 1.0
  %v2263 = vadd.f32 %v2244, 1.0
  %v2264 = vadd.f32 %v2246, 1.0
  %v2265 = vadd.f32 %v2248, 1.0
  %v2266 = vadd.f32 %v2250, 1.0
  %v2267 = vrcp.pop %v2251
  %v2268 = vmul.f32 1.0, %v2267
  %v2269 = vrcp.pop %v2252
  %v2270 = vmul.f32 1.0, %v2269
  %v2271 = vrcp.pop %v2253
  %v2272 = vmul.f32 1.0, %v2271
  %v2273 = vrcp.pop %v2254
  %v2274 = vmul.f32 1.0, %v2273
  %v2275 = vrcp.pop %v2255
  %v2276 = vmul.f32 1.0, %v2275
  %v2277 = vrcp.pop %v2256
  %v2278 = vmul.f32 1.0, %v2277
  %v2279 = vrcp.pop %v2257
  %v2280 = vmul.f32 1.0, %v2279
  %v2281 = vrcp.pop %v2258
  %v2282 = vmul.f32 1.0, %v2281
  %v2283 = vrcp.pop %v2259
  %v2284 = vmul.f32 1.0, %v2283
  %v2285 = vrcp.pop %v2260
  %v2286 = vmul.f32 1.0, %v2285
  %v2287 = vrcp.pop %v2261
  %v2288 = vmul.f32 1.0, %v2287
  %v2289 = vrcp.pop %v2262
  %v2290 = vmul.f32 1.0, %v2289
  %v2291 = vrcp.pop %v2263
  %v2292 = vmul.f32 1.0, %v2291
  %v2293 = vrcp.pop %v2264
  %v2294 = vmul.f32 1.0, %v2293
  %v2295 = vrcp.pop %v2265
  %v2296 = vmul.f32 1.0, %v2295
  %v2297 = vrcp.pop %v2266
  %v2298 = vmul.f32 1.0, %v2297
  %2307 = vrot.lane.b32.xlu0 %v1784, 8
  %v2308 = vpop.permute.xlu0 %2307
  %2309 = vrot.lane.b32.xlu0 %v1786, 8
  %v2310 = vpop.permute.xlu0 %2309
  %2311 = vrot.lane.b32.xlu0 %v1792, 8
  %v2312 = vpop.permute.xlu0 %2311
  %2313 = vrot.lane.b32.xlu0 %v1794, 8
  %v2314 = vpop.permute.xlu0 %2313
  %2315 = vrot.lane.b32.xlu0 %v1800, 8
  %v2316 = vpop.permute.xlu0 %2315
  %2317 = vrot.lane.b32.xlu0 %v1802, 8
  %v2318 = vpop.permute.xlu0 %2317
  %2319 = vrot.lane.b32.xlu0 %v1808, 8
  %v2320 = vpop.permute.xlu0 %2319
  %2321 = vrot.lane.b32.xlu0 %v1810, 8
  %v2322 = vpop.permute.xlu0 %2321
  %2339 = vrot.lane.b32.xlu0 %v2268, 16
  %v2340 = vpop.permute.xlu0 %2339
  %2341 = vrot.lane.b32.xlu0 %v2270, 16
  %v2342 = vpop.permute.xlu0 %2341
  %2343 = vrot.lane.b32.xlu0 %v2276, 16
  %v2344 = vpop.permute.xlu0 %2343
  %2345 = vrot.lane.b32.xlu0 %v2278, 16
  %v2346 = vpop.permute.xlu0 %2345
  %2347 = vrot.lane.b32.xlu0 %v2284, 16
  %v2348 = vpop.permute.xlu0 %2347
  %2349 = vrot.lane.b32.xlu0 %v2286, 16
  %v2350 = vpop.permute.xlu0 %2349
  %2351 = vrot.lane.b32.xlu0 %v2292, 16
  %v2352 = vpop.permute.xlu0 %2351
  %2353 = vrot.lane.b32.xlu0 %v2294, 16
  %v2354 = vpop.permute.xlu0 %2353
  %v2363 = vsel %vm128, %v1323, %v2308
  %v2364 = vsel %vm128, %v1324, %v2310
  %v2365 = vsel %vm128, %v1325, %v2312
  %v2366 = vsel %vm128, %v1326, %v2314
  %v2367 = vsel %vm128, %v1327, %v2316
  %v2368 = vsel %vm128, %v1328, %v2318
  %v2369 = vsel %vm128, %v1329, %v2320
  %v2370 = vsel %vm128, %v1330, %v2322
  %v2371 = vsel %vm614, %v2363, %v2340
  %v2372 = vsel %vm614, %v2364, %v2342
  %v2373 = vsel %vm614, %v2365, %v2344
  %v2374 = vsel %vm614, %v2366, %v2346
  %v2375 = vsel %vm614, %v2367, %v2348
  %v2376 = vsel %vm614, %v2368, %v2350
  %v2377 = vsel %vm614, %v2369, %v2352
  %v2378 = vsel %vm614, %v2370, %v2354
  %v2380 = vlaneseq
  %v2381 = vshrl.u32 %v2380, 7
  %v2382 = vsub.s32 0, %v2381
  %v2383 = vrot.slane %v91, %v2382
  %vm2385 = vcmask 195584
  %v2387 = vsel %vm2385, %v2371, 0
  %v2390 = vsel %vm2385, %v2372, 0
  %v2393 = vsel %vm2385, %v2373, 0
  %v2396 = vsel %vm2385, %v2374, 0
  %v2399 = vsel %vm2385, %v2375, 0
  %v2402 = vsel %vm2385, %v2376, 0
  %v2405 = vsel %vm2385, %v2377, 0
  %v2408 = vsel %vm2385, %v2378, 0
  %2410 = vmatprep.subr.mxu0 0.0
  %2411 = vmatpush1.msra.mxu0 %v88
  %2412 = vmatprep.subr.mxu0 0.0
  %2413 = vmatpush1.msra.mxu0 %v89
  %2414 = vmatprep.subr.mxu0 0.0
  %2415 = vmatpush1.msra.mxu0 %v90
  %2416 = vmatprep.subr.mxu0 0.0
  %2417 = vmatpush1.msra.mxu0 0.0
  %2418 = vmatprep.subr.mxu0 0.0
  %2419 = vmatpush1.msra.mxu0 0.0
  %2420 = vmatprep.subr.mxu0 0.0
  %2421 = vmatpush1.msra.mxu0 0.0
  %2422 = vmatprep.subr.mxu0 0.0
  %2423 = vmatpush1.msra.mxu0 0.0
  %2424 = vmatprep.subr.mxu0 0.0
  %2425 = vmatpush1.msra.mxu0 0.0
  %2426 = vmatprep.subr.mxu0 0.0
  %2427 = vmatpush1.msra.mxu0 0.0
  %2428 = vmatprep.subr.mxu0 0.0
  %2429 = vmatpush1.msra.mxu0 0.0
  %2430 = vmatprep.subr.mxu0 0.0
  %2431 = vmatpush1.msra.mxu0 0.0
  %2432 = vmatprep.subr.mxu0 0.0
  %2433 = vmatpush1.msra.mxu0 0.0
  %2434 = vmatprep.subr.mxu0 0.0
  %2435 = vmatpush1.msra.mxu0 0.0
  %2436 = vmatprep.subr.mxu0 0.0
  %2437 = vmatpush1.msra.mxu0 0.0
  %2438 = vmatprep.subr.mxu0 0.0
  %2439 = vmatpush1.msra.mxu0 0.0
  %2440 = vmatprep.subr.mxu0 0.0
  %2441 = vmatpush1.msra.mxu0 0.0
  %2442 = vmatprep.subr.mxu0 0.0
  %2443 = vmatpush1.msra.mxu0 0.0
  %2444 = vmatprep.subr.mxu0 0.0
  %2445 = vmatpush1.msra.mxu0 0.0
  %2446 = vmatprep.subr.mxu0 0.0
  %2447 = vmatpush1.msra.mxu0 0.0
  %2448 = vmatprep.subr.mxu0 0.0
  %2449 = vmatpush1.msra.mxu0 0.0
  %2450 = vmatprep.subr.mxu0 0.0
  %2451 = vmatpush1.msra.mxu0 0.0
  %2452 = vmatprep.subr.mxu0 0.0
  %2453 = vmatpush1.msra.mxu0 0.0
  %2454 = vmatprep.subr.mxu0 0.0
  %2455 = vmatpush1.msra.mxu0 0.0
  %2456 = vmatprep.subr.mxu0 0.0
  %2457 = vmatpush1.msra.mxu0 0.0
  %2458 = vmatprep.subr.mxu0 0.0
  %2459 = vmatpush1.msra.mxu0 0.0
  %2460 = vmatprep.subr.mxu0 0.0
  %2461 = vmatpush1.msra.mxu0 0.0
  %2462 = vmatprep.subr.mxu0 0.0
  %2463 = vmatpush1.msra.mxu0 0.0
  %2464 = vmatprep.subr.mxu0 0.0
  %2465 = vmatpush1.msra.mxu0 0.0
  %2466 = vmatprep.subr.mxu0 0.0
  %2467 = vmatpush1.msra.mxu0 0.0
  %2468 = vmatprep.subr.mxu0 0.0
  %2469 = vmatpush1.msra.mxu0 0.0
  %2470 = vmatprep.subr.mxu0 0.0
  %2471 = vmatpush1.msra.mxu0 0.0
  %2472 = vmatprep.subr.mxu0 0.0
  %2473 = vmatpush1.msra.mxu0 0.0
  %2474 = vmatprep.mubr.f32.mxu0 0.0
  %2475 = vmatmul.mubr.f32.gmra.mrb[0].mxu0 %v2387
  %v2476 = vpop.f32.mrb[0].mxu0
  %v2477 = vadd.f32 %v2383, %v2476
  %v2478 = vpop.f32.mrb[0].mxu0
  %2479 = vmatprep.mubr.f32.mxu0 0.0
  %2480 = vmatmul.mubr.f32.gmra.mrb[0].mxu0 %v2390
  %v2481 = vpop.f32.mrb[0].mxu0
  %v2482 = vadd.f32 %v2383, %v2481
  %v2483 = vpop.f32.mrb[0].mxu0
  %2484 = vmatprep.mubr.f32.mxu0 0.0
  %2485 = vmatmul.mubr.f32.gmra.mrb[0].mxu0 %v2393
  %v2486 = vpop.f32.mrb[0].mxu0
  %v2487 = vadd.f32 %v2383, %v2486
  %v2488 = vpop.f32.mrb[0].mxu0
  %2489 = vmatprep.mubr.f32.mxu0 0.0
  %2490 = vmatmul.mubr.f32.gmra.mrb[0].mxu0 %v2396
  %v2491 = vpop.f32.mrb[0].mxu0
  %v2492 = vadd.f32 %v2383, %v2491
  %v2493 = vpop.f32.mrb[0].mxu0
  %2494 = vmatprep.mubr.f32.mxu0 0.0
  %2495 = vmatmul.mubr.f32.gmra.mrb[0].mxu0 %v2399
  %v2496 = vpop.f32.mrb[0].mxu0
  %v2497 = vadd.f32 %v2383, %v2496
  %v2498 = vpop.f32.mrb[0].mxu0
  %2499 = vmatprep.mubr.f32.mxu0 0.0
  %2500 = vmatmul.mubr.f32.gmra.mrb[0].mxu0 %v2402
  %v2501 = vpop.f32.mrb[0].mxu0
  %v2502 = vadd.f32 %v2383, %v2501
  %v2503 = vpop.f32.mrb[0].mxu0
  %2504 = vmatprep.mubr.f32.mxu0 0.0
  %2505 = vmatmul.mubr.f32.gmra.mrb[0].mxu0 %v2405
  %v2506 = vpop.f32.mrb[0].mxu0
  %v2507 = vadd.f32 %v2383, %v2506
  %v2508 = vpop.f32.mrb[0].mxu0
  %2509 = vmatprep.mubr.f32.mxu0 0.0
  %2510 = vmatmul.mubr.f32.gmra.mrb[0].mxu0 %v2408
  %v2511 = vpop.f32.mrb[0].mxu0
  %v2512 = vadd.f32 %v2383, %v2511
  %v2513 = vpop.f32.mrb[0].mxu0
  %2514 = vdwg.mxu0
  %v2515 = vmax.f32 %v2477, 0.0
  %v2516 = vmax.f32 %v2482, 0.0
  %v2517 = vmax.f32 %v2487, 0.0
  %v2518 = vmax.f32 %v2492, 0.0
  %v2519 = vmax.f32 %v2497, 0.0
  %v2520 = vmax.f32 %v2502, 0.0
  %v2521 = vmax.f32 %v2507, 0.0
  %v2522 = vmax.f32 %v2512, 0.0
  %vm2523 = vcmask 261120
  %v2525 = vsel %vm2523, %v2515, 0
  %v2528 = vsel %vm2523, %v2516, 0
  %v2531 = vsel %vm2523, %v2517, 0
  %v2534 = vsel %vm2523, %v2518, 0
  %v2537 = vsel %vm2523, %v2519, 0
  %v2540 = vsel %vm2523, %v2520, 0
  %v2543 = vsel %vm2523, %v2521, 0
  %v2546 = vsel %vm2523, %v2522, 0
  %2548 = vmatprep.subr.mxu0 0.0
  %2549 = vmatpush1.msra.mxu0 %v92
  %2550 = vmatprep.subr.mxu0 0.0
  %2551 = vmatpush1.msra.mxu0 %v93
  %2552 = vmatprep.subr.mxu0 0.0
  %2553 = vmatpush1.msra.mxu0 %v94
  %2554 = vmatprep.subr.mxu0 0.0
  %2555 = vmatpush1.msra.mxu0 %v95
  %2556 = vmatprep.subr.mxu0 0.0
  %2557 = vmatpush1.msra.mxu0 0.0
  %2558 = vmatprep.subr.mxu0 0.0
  %2559 = vmatpush1.msra.mxu0 0.0
  %2560 = vmatprep.subr.mxu0 0.0
  %2561 = vmatpush1.msra.mxu0 0.0
  %2562 = vmatprep.subr.mxu0 0.0
  %2563 = vmatpush1.msra.mxu0 0.0
  %2564 = vmatprep.subr.mxu0 0.0
  %2565 = vmatpush1.msra.mxu0 0.0
  %2566 = vmatprep.subr.mxu0 0.0
  %2567 = vmatpush1.msra.mxu0 0.0
  %2568 = vmatprep.subr.mxu0 0.0
  %2569 = vmatpush1.msra.mxu0 0.0
  %2570 = vmatprep.subr.mxu0 0.0
  %2571 = vmatpush1.msra.mxu0 0.0
  %2572 = vmatprep.subr.mxu0 0.0
  %2573 = vmatpush1.msra.mxu0 0.0
  %2574 = vmatprep.subr.mxu0 0.0
  %2575 = vmatpush1.msra.mxu0 0.0
  %2576 = vmatprep.subr.mxu0 0.0
  %2577 = vmatpush1.msra.mxu0 0.0
  %2578 = vmatprep.subr.mxu0 0.0
  %2579 = vmatpush1.msra.mxu0 0.0
  %2580 = vmatprep.subr.mxu0 0.0
  %2581 = vmatpush1.msra.mxu0 0.0
  %2582 = vmatprep.subr.mxu0 0.0
  %2583 = vmatpush1.msra.mxu0 0.0
  %2584 = vmatprep.subr.mxu0 0.0
  %2585 = vmatpush1.msra.mxu0 0.0
  %2586 = vmatprep.subr.mxu0 0.0
  %2587 = vmatpush1.msra.mxu0 0.0
  %2588 = vmatprep.subr.mxu0 0.0
  %2589 = vmatpush1.msra.mxu0 0.0
  %2590 = vmatprep.subr.mxu0 0.0
  %2591 = vmatpush1.msra.mxu0 0.0
  %2592 = vmatprep.subr.mxu0 0.0
  %2593 = vmatpush1.msra.mxu0 0.0
  %2594 = vmatprep.subr.mxu0 0.0
  %2595 = vmatpush1.msra.mxu0 0.0
  %2596 = vmatprep.subr.mxu0 0.0
  %2597 = vmatpush1.msra.mxu0 0.0
  %2598 = vmatprep.subr.mxu0 0.0
  %2599 = vmatpush1.msra.mxu0 0.0
  %2600 = vmatprep.subr.mxu0 0.0
  %2601 = vmatpush1.msra.mxu0 0.0
  %2602 = vmatprep.subr.mxu0 0.0
  %2603 = vmatpush1.msra.mxu0 0.0
  %2604 = vmatprep.subr.mxu0 0.0
  %2605 = vmatpush1.msra.mxu0 0.0
  %2606 = vmatprep.subr.mxu0 0.0
  %2607 = vmatpush1.msra.mxu0 0.0
  %2608 = vmatprep.subr.mxu0 0.0
  %2609 = vmatpush1.msra.mxu0 0.0
  %2610 = vmatprep.subr.mxu0 0.0
  %2611 = vmatpush1.msra.mxu0 0.0
  %2612 = vmatprep.mubr.f32.mxu0 0.0
  %2613 = vmatmul.mubr.f32.gmra.mrb[0].mxu0 %v2525
  %v2614 = vpop.f32.mrb[0].mxu0
  %v2615 = vadd.f32 0.0, %v2614
  %v2616 = vpop.f32.mrb[0].mxu0
  %2617 = vmatprep.mubr.f32.mxu0 0.0
  %2618 = vmatmul.mubr.f32.gmra.mrb[0].mxu0 %v2528
  %v2619 = vpop.f32.mrb[0].mxu0
  %v2620 = vadd.f32 0.0, %v2619
  %v2621 = vpop.f32.mrb[0].mxu0
  %2622 = vmatprep.mubr.f32.mxu0 0.0
  %2623 = vmatmul.mubr.f32.gmra.mrb[0].mxu0 %v2531
  %v2624 = vpop.f32.mrb[0].mxu0
  %v2625 = vadd.f32 0.0, %v2624
  %v2626 = vpop.f32.mrb[0].mxu0
  %2627 = vmatprep.mubr.f32.mxu0 0.0
  %2628 = vmatmul.mubr.f32.gmra.mrb[0].mxu0 %v2534
  %v2629 = vpop.f32.mrb[0].mxu0
  %v2630 = vadd.f32 0.0, %v2629
  %v2631 = vpop.f32.mrb[0].mxu0
  %2632 = vmatprep.mubr.f32.mxu0 0.0
  %2633 = vmatmul.mubr.f32.gmra.mrb[0].mxu0 %v2537
  %v2634 = vpop.f32.mrb[0].mxu0
  %v2635 = vadd.f32 0.0, %v2634
  %v2636 = vpop.f32.mrb[0].mxu0
  %2637 = vmatprep.mubr.f32.mxu0 0.0
  %2638 = vmatmul.mubr.f32.gmra.mrb[0].mxu0 %v2540
  %v2639 = vpop.f32.mrb[0].mxu0
  %v2640 = vadd.f32 0.0, %v2639
  %v2641 = vpop.f32.mrb[0].mxu0
  %2642 = vmatprep.mubr.f32.mxu0 0.0
  %2643 = vmatmul.mubr.f32.gmra.mrb[0].mxu0 %v2543
  %v2644 = vpop.f32.mrb[0].mxu0
  %v2645 = vadd.f32 0.0, %v2644
  %v2646 = vpop.f32.mrb[0].mxu0
  %2647 = vmatprep.mubr.f32.mxu0 0.0
  %2648 = vmatmul.mubr.f32.gmra.mrb[0].mxu0 %v2546
  %v2649 = vpop.f32.mrb[0].mxu0
  %v2650 = vadd.f32 0.0, %v2649
  %v2651 = vpop.f32.mrb[0].mxu0
  %2652 = vdwg.mxu0
  %v2653 = vadd.f32 %v1323, %v2615
  %v2654 = vadd.f32 %v1324, %v2620
  %v2655 = vadd.f32 %v1325, %v2625
  %v2656 = vadd.f32 %v1326, %v2630
  %v2657 = vadd.f32 %v1327, %v2635
  %v2658 = vadd.f32 %v1328, %v2640
  %v2659 = vadd.f32 %v1329, %v2645
  %v2660 = vadd.f32 %v1330, %v2650
  %v2662 = vlaneseq
  %v2663 = vshrl.u32 %v2662, 7
  %v2664 = vsub.s32 0, %v2663
  %v2665 = vrot.slane %v96, %v2664
  %v2667 = vadd.f32 %v2653, %v2665
  %v2668 = vadd.f32 %v2654, %v2665
  %v2669 = vadd.f32 %v2655, %v2665
  %v2670 = vadd.f32 %v2656, %v2665
  %v2671 = vadd.f32 %v2657, %v2665
  %v2672 = vadd.f32 %v2658, %v2665
  %v2673 = vadd.f32 %v2659, %v2665
  %v2674 = vadd.f32 %v2660, %v2665
  %v2675 = vsel %vm128, %v2667, 0.0
  %2676 = vadd.xlane.f32.xlu0 %v2675
  %v2677 = vpop.xlane.xlu0 %2676
  %v2678 = vsel %vm128, %v2668, 0.0
  %2679 = vadd.xlane.f32.xlu0 %v2678
  %v2680 = vpop.xlane.xlu0 %2679
  %v2681 = vsel %vm128, %v2669, 0.0
  %2682 = vadd.xlane.f32.xlu0 %v2681
  %v2683 = vpop.xlane.xlu0 %2682
  %v2684 = vsel %vm128, %v2670, 0.0
  %2685 = vadd.xlane.f32.xlu0 %v2684
  %v2686 = vpop.xlane.xlu0 %2685
  %v2687 = vsel %vm128, %v2671, 0.0
  %2688 = vadd.xlane.f32.xlu0 %v2687
  %v2689 = vpop.xlane.xlu0 %2688
  %v2690 = vsel %vm128, %v2672, 0.0
  %2691 = vadd.xlane.f32.xlu0 %v2690
  %v2692 = vpop.xlane.xlu0 %2691
  %v2693 = vsel %vm128, %v2673, 0.0
  %2694 = vadd.xlane.f32.xlu0 %v2693
  %v2695 = vpop.xlane.xlu0 %2694
  %v2696 = vsel %vm128, %v2674, 0.0
  %2697 = vadd.xlane.f32.xlu0 %v2696
  %v2698 = vpop.xlane.xlu0 %2697
  %v2699 = vmul.f32 %v2677, %v1226
  %v2700 = vmul.f32 %v2680, %v1226
  %v2701 = vmul.f32 %v2683, %v1226
  %v2702 = vmul.f32 %v2686, %v1226
  %v2703 = vmul.f32 %v2689, %v1226
  %v2704 = vmul.f32 %v2692, %v1226
  %v2705 = vmul.f32 %v2695, %v1226
  %v2706 = vmul.f32 %v2698, %v1226
  %v2707 = vsub.f32 %v2667, %v2699
  %v2708 = vsub.f32 %v2668, %v2700
  %v2709 = vsub.f32 %v2669, %v2701
  %v2710 = vsub.f32 %v2670, %v2702
  %v2711 = vsub.f32 %v2671, %v2703
  %v2712 = vsub.f32 %v2672, %v2704
  %v2713 = vsub.f32 %v2673, %v2705
  %v2714 = vsub.f32 %v2674, %v2706
  %v2715 = vmul.f32 %v2707, %v2707
  %v2716 = vmul.f32 %v2708, %v2708
  %v2717 = vmul.f32 %v2709, %v2709
  %v2718 = vmul.f32 %v2710, %v2710
  %v2719 = vmul.f32 %v2711, %v2711
  %v2720 = vmul.f32 %v2712, %v2712
  %v2721 = vmul.f32 %v2713, %v2713
  %v2722 = vmul.f32 %v2714, %v2714
  %v2723 = vsel %vm128, %v2715, 0.0
  %2724 = vadd.xlane.f32.xlu0 %v2723
  %v2725 = vpop.xlane.xlu0 %2724
  %v2726 = vsel %vm128, %v2716, 0.0
  %2727 = vadd.xlane.f32.xlu0 %v2726
  %v2728 = vpop.xlane.xlu0 %2727
  %v2729 = vsel %vm128, %v2717, 0.0
  %2730 = vadd.xlane.f32.xlu0 %v2729
  %v2731 = vpop.xlane.xlu0 %2730
  %v2732 = vsel %vm128, %v2718, 0.0
  %2733 = vadd.xlane.f32.xlu0 %v2732
  %v2734 = vpop.xlane.xlu0 %2733
  %v2735 = vsel %vm128, %v2719, 0.0
  %2736 = vadd.xlane.f32.xlu0 %v2735
  %v2737 = vpop.xlane.xlu0 %2736
  %v2738 = vsel %vm128, %v2720, 0.0
  %2739 = vadd.xlane.f32.xlu0 %v2738
  %v2740 = vpop.xlane.xlu0 %2739
  %v2741 = vsel %vm128, %v2721, 0.0
  %2742 = vadd.xlane.f32.xlu0 %v2741
  %v2743 = vpop.xlane.xlu0 %2742
  %v2744 = vsel %vm128, %v2722, 0.0
  %2745 = vadd.xlane.f32.xlu0 %v2744
  %v2746 = vpop.xlane.xlu0 %2745
  %v2747 = vmul.f32 %v2725, %v1226
  %v2748 = vmul.f32 %v2728, %v1226
  %v2749 = vmul.f32 %v2731, %v1226
  %v2750 = vmul.f32 %v2734, %v1226
  %v2751 = vmul.f32 %v2737, %v1226
  %v2752 = vmul.f32 %v2740, %v1226
  %v2753 = vmul.f32 %v2743, %v1226
  %v2754 = vmul.f32 %v2746, %v1226
  %v2755 = vadd.f32 %v2747, 1e-05
  %v2756 = vadd.f32 %v2748, 1e-05
  %v2757 = vadd.f32 %v2749, 1e-05
  %v2758 = vadd.f32 %v2750, 1e-05
  %v2759 = vadd.f32 %v2751, 1e-05
  %v2760 = vadd.f32 %v2752, 1e-05
  %v2761 = vadd.f32 %v2753, 1e-05
  %v2762 = vadd.f32 %v2754, 1e-05
  %v2763 = vrsqrt.pop %v2755
  %v2764 = vrsqrt.pop %v2756
  %v2765 = vrsqrt.pop %v2757
  %v2766 = vrsqrt.pop %v2758
  %v2767 = vrsqrt.pop %v2759
  %v2768 = vrsqrt.pop %v2760
  %v2769 = vrsqrt.pop %v2761
  %v2770 = vrsqrt.pop %v2762
  %v2771 = vmul.f32 %v2707, %v2763
  %v2772 = vmul.f32 %v2708, %v2764
  %v2773 = vmul.f32 %v2709, %v2765
  %v2774 = vmul.f32 %v2710, %v2766
  %v2775 = vmul.f32 %v2711, %v2767
  %v2776 = vmul.f32 %v2712, %v2768
  %v2777 = vmul.f32 %v2713, %v2769
  %v2778 = vmul.f32 %v2714, %v2770
  %v2779 = vlaneseq
  %v2780 = vshrl.u32 %v2779, 7
  %v2781 = vsub.s32 2, %v2780
  %v2782 = vrot.slane %v121, %v2781
  %v2783 = vmul.f32 %v2771, %v2782
  %v2784 = vmul.f32 %v2772, %v2782
  %v2785 = vmul.f32 %v2773, %v2782
  %v2786 = vmul.f32 %v2774, %v2782
  %v2787 = vmul.f32 %v2775, %v2782
  %v2788 = vmul.f32 %v2776, %v2782
  %v2789 = vmul.f32 %v2777, %v2782
  %v2790 = vmul.f32 %v2778, %v2782
  %v2791 = vlaneseq
  %v2792 = vshrl.u32 %v2791, 7
  %v2793 = vsub.s32 3, %v2792
  %v2794 = vrot.slane %v121, %v2793
  %v2795 = vadd.f32 %v2783, %v2794
  %v2796 = vadd.f32 %v2784, %v2794
  %v2797 = vadd.f32 %v2785, %v2794
  %v2798 = vadd.f32 %v2786, %v2794
  %v2799 = vadd.f32 %v2787, %v2794
  %v2800 = vadd.f32 %v2788, %v2794
  %v2801 = vadd.f32 %v2789, %v2794
  %v2802 = vadd.f32 %v2790, %v2794
  %v2804 = vlaneseq
  %v2805 = vshrl.u32 %v2804, 7
  %v2806 = vsub.s32 0, %v2805
  %v2807 = vrot.slane %v83, %v2806
  %v2810 = vsel %vm128, %v2795, 0
  %v2813 = vsel %vm128, %v2796, 0
  %v2816 = vsel %vm128, %v2797, 0
  %v2819 = vsel %vm128, %v2798, 0
  %v2822 = vsel %vm128, %v2799, 0
  %v2825 = vsel %vm128, %v2800, 0
  %v2828 = vsel %vm128, %v2801, 0
  %v2831 = vsel %vm128, %v2802, 0
  %2833 = vmatprep.subr.mxu0 0.0
  %2834 = vmatpush1.msra.mxu0 %v82
  %2835 = vmatprep.subr.mxu0 0.0
  %2836 = vmatpush1.msra.mxu0 0.0
  %2837 = vmatprep.subr.mxu0 0.0
  %2838 = vmatpush1.msra.mxu0 0.0
  %2839 = vmatprep.subr.mxu0 0.0
  %2840 = vmatpush1.msra.mxu0 0.0
  %2841 = vmatprep.subr.mxu0 0.0
  %2842 = vmatpush1.msra.mxu0 0.0
  %2843 = vmatprep.subr.mxu0 0.0
  %2844 = vmatpush1.msra.mxu0 0.0
  %2845 = vmatprep.subr.mxu0 0.0
  %2846 = vmatpush1.msra.mxu0 0.0
  %2847 = vmatprep.subr.mxu0 0.0
  %2848 = vmatpush1.msra.mxu0 0.0
  %2849 = vmatprep.subr.mxu0 0.0
  %2850 = vmatpush1.msra.mxu0 0.0
  %2851 = vmatprep.subr.mxu0 0.0
  %2852 = vmatpush1.msra.mxu0 0.0
  %2853 = vmatprep.subr.mxu0 0.0
  %2854 = vmatpush1.msra.mxu0 0.0
  %2855 = vmatprep.subr.mxu0 0.0
  %2856 = vmatpush1.msra.mxu0 0.0
  %2857 = vmatprep.subr.mxu0 0.0
  %2858 = vmatpush1.msra.mxu0 0.0
  %2859 = vmatprep.subr.mxu0 0.0
  %2860 = vmatpush1.msra.mxu0 0.0
  %2861 = vmatprep.subr.mxu0 0.0
  %2862 = vmatpush1.msra.mxu0 0.0
  %2863 = vmatprep.subr.mxu0 0.0
  %2864 = vmatpush1.msra.mxu0 0.0
  %2865 = vmatprep.subr.mxu0 0.0
  %2866 = vmatpush1.msra.mxu0 0.0
  %2867 = vmatprep.subr.mxu0 0.0
  %2868 = vmatpush1.msra.mxu0 0.0
  %2869 = vmatprep.subr.mxu0 0.0
  %2870 = vmatpush1.msra.mxu0 0.0
  %2871 = vmatprep.subr.mxu0 0.0
  %2872 = vmatpush1.msra.mxu0 0.0
  %2873 = vmatprep.subr.mxu0 0.0
  %2874 = vmatpush1.msra.mxu0 0.0
  %2875 = vmatprep.subr.mxu0 0.0
  %2876 = vmatpush1.msra.mxu0 0.0
  %2877 = vmatprep.subr.mxu0 0.0
  %2878 = vmatpush1.msra.mxu0 0.0
  %2879 = vmatprep.subr.mxu0 0.0
  %2880 = vmatpush1.msra.mxu0 0.0
  %2881 = vmatprep.subr.mxu0 0.0
  %2882 = vmatpush1.msra.mxu0 0.0
  %2883 = vmatprep.subr.mxu0 0.0
  %2884 = vmatpush1.msra.mxu0 0.0
  %2885 = vmatprep.subr.mxu0 0.0
  %2886 = vmatpush1.msra.mxu0 0.0
  %2887 = vmatprep.subr.mxu0 0.0
  %2888 = vmatpush1.msra.mxu0 0.0
  %2889 = vmatprep.subr.mxu0 0.0
  %2890 = vmatpush1.msra.mxu0 0.0
  %2891 = vmatprep.subr.mxu0 0.0
  %2892 = vmatpush1.msra.mxu0 0.0
  %2893 = vmatprep.subr.mxu0 0.0
  %2894 = vmatpush1.msra.mxu0 0.0
  %2895 = vmatprep.subr.mxu0 0.0
  %2896 = vmatpush1.msra.mxu0 0.0
  %2897 = vmatprep.mubr.f32.mxu0 0.0
  %2898 = vmatmul.mubr.f32.gmra.mrb[0].mxu0 %v2810
  %v2899 = vpop.f32.mrb[0].mxu0
  %v2900 = vadd.f32 %v2807, %v2899
  %v2901 = vpop.f32.mrb[0].mxu0
  %2902 = vmatprep.mubr.f32.mxu0 0.0
  %2903 = vmatmul.mubr.f32.gmra.mrb[0].mxu0 %v2813
  %v2904 = vpop.f32.mrb[0].mxu0
  %v2905 = vadd.f32 %v2807, %v2904
  %v2906 = vpop.f32.mrb[0].mxu0
  %2907 = vmatprep.mubr.f32.mxu0 0.0
  %2908 = vmatmul.mubr.f32.gmra.mrb[0].mxu0 %v2816
  %v2909 = vpop.f32.mrb[0].mxu0
  %v2910 = vadd.f32 %v2807, %v2909
  %v2911 = vpop.f32.mrb[0].mxu0
  %2912 = vmatprep.mubr.f32.mxu0 0.0
  %2913 = vmatmul.mubr.f32.gmra.mrb[0].mxu0 %v2819
  %v2914 = vpop.f32.mrb[0].mxu0
  %v2915 = vadd.f32 %v2807, %v2914
  %v2916 = vpop.f32.mrb[0].mxu0
  %2917 = vmatprep.mubr.f32.mxu0 0.0
  %2918 = vmatmul.mubr.f32.gmra.mrb[0].mxu0 %v2822
  %v2919 = vpop.f32.mrb[0].mxu0
  %v2920 = vadd.f32 %v2807, %v2919
  %v2921 = vpop.f32.mrb[0].mxu0
  %2922 = vmatprep.mubr.f32.mxu0 0.0
  %2923 = vmatmul.mubr.f32.gmra.mrb[0].mxu0 %v2825
  %v2924 = vpop.f32.mrb[0].mxu0
  %v2925 = vadd.f32 %v2807, %v2924
  %v2926 = vpop.f32.mrb[0].mxu0
  %2927 = vmatprep.mubr.f32.mxu0 0.0
  %2928 = vmatmul.mubr.f32.gmra.mrb[0].mxu0 %v2828
  %v2929 = vpop.f32.mrb[0].mxu0
  %v2930 = vadd.f32 %v2807, %v2929
  %v2931 = vpop.f32.mrb[0].mxu0
  %2932 = vmatprep.mubr.f32.mxu0 0.0
  %2933 = vmatmul.mubr.f32.gmra.mrb[0].mxu0 %v2831
  %v2934 = vpop.f32.mrb[0].mxu0
  %v2935 = vadd.f32 %v2807, %v2934
  %v2936 = vpop.f32.mrb[0].mxu0
  %2937 = vdwg.mxu0
  %v2939 = vlaneseq
  %v2940 = vshrl.u32 %v2939, 7
  %v2941 = vsub.s32 0, %v2940
  %v2942 = vrot.slane %v85, %v2941
  %v2945 = vsel %vm128, %v70, 0
  %v2948 = vsel %vm128, %v71, 0
  %v2951 = vsel %vm128, %v72, 0
  %v2954 = vsel %vm128, %v73, 0
  %v2957 = vsel %vm128, %v74, 0
  %v2960 = vsel %vm128, %v75, 0
  %v2963 = vsel %vm128, %v76, 0
  %v2966 = vsel %vm128, %v77, 0
  %2968 = vmatprep.subr.mxu0 0.0
  %2969 = vmatpush1.msra.mxu0 %v84
  %2970 = vmatprep.subr.mxu0 0.0
  %2971 = vmatpush1.msra.mxu0 0.0
  %2972 = vmatprep.subr.mxu0 0.0
  %2973 = vmatpush1.msra.mxu0 0.0
  %2974 = vmatprep.subr.mxu0 0.0
  %2975 = vmatpush1.msra.mxu0 0.0
  %2976 = vmatprep.subr.mxu0 0.0
  %2977 = vmatpush1.msra.mxu0 0.0
  %2978 = vmatprep.subr.mxu0 0.0
  %2979 = vmatpush1.msra.mxu0 0.0
  %2980 = vmatprep.subr.mxu0 0.0
  %2981 = vmatpush1.msra.mxu0 0.0
  %2982 = vmatprep.subr.mxu0 0.0
  %2983 = vmatpush1.msra.mxu0 0.0
  %2984 = vmatprep.subr.mxu0 0.0
  %2985 = vmatpush1.msra.mxu0 0.0
  %2986 = vmatprep.subr.mxu0 0.0
  %2987 = vmatpush1.msra.mxu0 0.0
  %2988 = vmatprep.subr.mxu0 0.0
  %2989 = vmatpush1.msra.mxu0 0.0
  %2990 = vmatprep.subr.mxu0 0.0
  %2991 = vmatpush1.msra.mxu0 0.0
  %2992 = vmatprep.subr.mxu0 0.0
  %2993 = vmatpush1.msra.mxu0 0.0
  %2994 = vmatprep.subr.mxu0 0.0
  %2995 = vmatpush1.msra.mxu0 0.0
  %2996 = vmatprep.subr.mxu0 0.0
  %2997 = vmatpush1.msra.mxu0 0.0
  %2998 = vmatprep.subr.mxu0 0.0
  %2999 = vmatpush1.msra.mxu0 0.0
  %3000 = vmatprep.subr.mxu0 0.0
  %3001 = vmatpush1.msra.mxu0 0.0
  %3002 = vmatprep.subr.mxu0 0.0
  %3003 = vmatpush1.msra.mxu0 0.0
  %3004 = vmatprep.subr.mxu0 0.0
  %3005 = vmatpush1.msra.mxu0 0.0
  %3006 = vmatprep.subr.mxu0 0.0
  %3007 = vmatpush1.msra.mxu0 0.0
  %3008 = vmatprep.subr.mxu0 0.0
  %3009 = vmatpush1.msra.mxu0 0.0
  %3010 = vmatprep.subr.mxu0 0.0
  %3011 = vmatpush1.msra.mxu0 0.0
  %3012 = vmatprep.subr.mxu0 0.0
  %3013 = vmatpush1.msra.mxu0 0.0
  %3014 = vmatprep.subr.mxu0 0.0
  %3015 = vmatpush1.msra.mxu0 0.0
  %3016 = vmatprep.subr.mxu0 0.0
  %3017 = vmatpush1.msra.mxu0 0.0
  %3018 = vmatprep.subr.mxu0 0.0
  %3019 = vmatpush1.msra.mxu0 0.0
  %3020 = vmatprep.subr.mxu0 0.0
  %3021 = vmatpush1.msra.mxu0 0.0
  %3022 = vmatprep.subr.mxu0 0.0
  %3023 = vmatpush1.msra.mxu0 0.0
  %3024 = vmatprep.subr.mxu0 0.0
  %3025 = vmatpush1.msra.mxu0 0.0
  %3026 = vmatprep.subr.mxu0 0.0
  %3027 = vmatpush1.msra.mxu0 0.0
  %3028 = vmatprep.subr.mxu0 0.0
  %3029 = vmatpush1.msra.mxu0 0.0
  %3030 = vmatprep.subr.mxu0 0.0
  %3031 = vmatpush1.msra.mxu0 0.0
  %3032 = vmatprep.mubr.f32.mxu0 0.0
  %3033 = vmatmul.mubr.f32.gmra.mrb[0].mxu0 %v2945
  %v3034 = vpop.f32.mrb[0].mxu0
  %v3035 = vadd.f32 %v2942, %v3034
  %v3036 = vpop.f32.mrb[0].mxu0
  %3037 = vmatprep.mubr.f32.mxu0 0.0
  %3038 = vmatmul.mubr.f32.gmra.mrb[0].mxu0 %v2948
  %v3039 = vpop.f32.mrb[0].mxu0
  %v3040 = vadd.f32 %v2942, %v3039
  %v3041 = vpop.f32.mrb[0].mxu0
  %3042 = vmatprep.mubr.f32.mxu0 0.0
  %3043 = vmatmul.mubr.f32.gmra.mrb[0].mxu0 %v2951
  %v3044 = vpop.f32.mrb[0].mxu0
  %v3045 = vadd.f32 %v2942, %v3044
  %v3046 = vpop.f32.mrb[0].mxu0
  %3047 = vmatprep.mubr.f32.mxu0 0.0
  %3048 = vmatmul.mubr.f32.gmra.mrb[0].mxu0 %v2954
  %v3049 = vpop.f32.mrb[0].mxu0
  %v3050 = vadd.f32 %v2942, %v3049
  %v3051 = vpop.f32.mrb[0].mxu0
  %3052 = vmatprep.mubr.f32.mxu0 0.0
  %3053 = vmatmul.mubr.f32.gmra.mrb[0].mxu0 %v2957
  %v3054 = vpop.f32.mrb[0].mxu0
  %v3055 = vadd.f32 %v2942, %v3054
  %v3056 = vpop.f32.mrb[0].mxu0
  %3057 = vmatprep.mubr.f32.mxu0 0.0
  %3058 = vmatmul.mubr.f32.gmra.mrb[0].mxu0 %v2960
  %v3059 = vpop.f32.mrb[0].mxu0
  %v3060 = vadd.f32 %v2942, %v3059
  %v3061 = vpop.f32.mrb[0].mxu0
  %3062 = vmatprep.mubr.f32.mxu0 0.0
  %3063 = vmatmul.mubr.f32.gmra.mrb[0].mxu0 %v2963
  %v3064 = vpop.f32.mrb[0].mxu0
  %v3065 = vadd.f32 %v2942, %v3064
  %v3066 = vpop.f32.mrb[0].mxu0
  %3067 = vmatprep.mubr.f32.mxu0 0.0
  %3068 = vmatmul.mubr.f32.gmra.mrb[0].mxu0 %v2966
  %v3069 = vpop.f32.mrb[0].mxu0
  %v3070 = vadd.f32 %v2942, %v3069
  %v3071 = vpop.f32.mrb[0].mxu0
  %3072 = vdwg.mxu0
  %v3074 = vsel %vm128, %v2900, 0
  %v3077 = vsel %vm128, %v2905, 0
  %v3080 = vsel %vm128, %v3035, 0
  %v3083 = vsel %vm128, %v3040, 0
  %3085 = vmatprep.subr.mxu0 0.0
  %3086 = vmatpush1.xpose.msra.mxu0 %v3080
  %3087 = vmatprep.subr.mxu0 0.0
  %3088 = vmatpush1.xpose.msra.mxu0 %v3083
  %3089 = vmatprep.subr.mxu0 0.0
  %3090 = vmatpush1.xpose.msra.mxu0 0.0
  %3091 = vmatprep.subr.mxu0 0.0
  %3092 = vmatpush1.xpose.msra.mxu0 0.0
  %3093 = vmatprep.subr.mxu0 0.0
  %3094 = vmatpush1.xpose.msra.mxu0 0.0
  %3095 = vmatprep.subr.mxu0 0.0
  %3096 = vmatpush1.xpose.msra.mxu0 0.0
  %3097 = vmatprep.subr.mxu0 0.0
  %3098 = vmatpush1.xpose.msra.mxu0 0.0
  %3099 = vmatprep.subr.mxu0 0.0
  %3100 = vmatpush1.xpose.msra.mxu0 0.0
  %3101 = vmatprep.subr.mxu0 0.0
  %3102 = vmatpush1.xpose.msra.mxu0 0.0
  %3103 = vmatprep.subr.mxu0 0.0
  %3104 = vmatpush1.xpose.msra.mxu0 0.0
  %3105 = vmatprep.subr.mxu0 0.0
  %3106 = vmatpush1.xpose.msra.mxu0 0.0
  %3107 = vmatprep.subr.mxu0 0.0
  %3108 = vmatpush1.xpose.msra.mxu0 0.0
  %3109 = vmatprep.subr.mxu0 0.0
  %3110 = vmatpush1.xpose.msra.mxu0 0.0
  %3111 = vmatprep.subr.mxu0 0.0
  %3112 = vmatpush1.xpose.msra.mxu0 0.0
  %3113 = vmatprep.subr.mxu0 0.0
  %3114 = vmatpush1.xpose.msra.mxu0 0.0
  %3115 = vmatprep.subr.mxu0 0.0
  %3116 = vmatpush1.xpose.msra.mxu0 0.0
  %3117 = vmatprep.subr.mxu0 0.0
  %3118 = vmatpush1.xpose.msra.mxu0 0.0
  %3119 = vmatprep.subr.mxu0 0.0
  %3120 = vmatpush1.xpose.msra.mxu0 0.0
  %3121 = vmatprep.subr.mxu0 0.0
  %3122 = vmatpush1.xpose.msra.mxu0 0.0
  %3123 = vmatprep.subr.mxu0 0.0
  %3124 = vmatpush1.xpose.msra.mxu0 0.0
  %3125 = vmatprep.subr.mxu0 0.0
  %3126 = vmatpush1.xpose.msra.mxu0 0.0
  %3127 = vmatprep.subr.mxu0 0.0
  %3128 = vmatpush1.xpose.msra.mxu0 0.0
  %3129 = vmatprep.subr.mxu0 0.0
  %3130 = vmatpush1.xpose.msra.mxu0 0.0
  %3131 = vmatprep.subr.mxu0 0.0
  %3132 = vmatpush1.xpose.msra.mxu0 0.0
  %3133 = vmatprep.subr.mxu0 0.0
  %3134 = vmatpush1.xpose.msra.mxu0 0.0
  %3135 = vmatprep.subr.mxu0 0.0
  %3136 = vmatpush1.xpose.msra.mxu0 0.0
  %3137 = vmatprep.subr.mxu0 0.0
  %3138 = vmatpush1.xpose.msra.mxu0 0.0
  %3139 = vmatprep.subr.mxu0 0.0
  %3140 = vmatpush1.xpose.msra.mxu0 0.0
  %3141 = vmatprep.subr.mxu0 0.0
  %3142 = vmatpush1.xpose.msra.mxu0 0.0
  %3143 = vmatprep.subr.mxu0 0.0
  %3144 = vmatpush1.xpose.msra.mxu0 0.0
  %3145 = vmatprep.subr.mxu0 0.0
  %3146 = vmatpush1.xpose.msra.mxu0 0.0
  %3147 = vmatprep.subr.mxu0 0.0
  %3148 = vmatpush1.xpose.msra.mxu0 0.0
  %3149 = vmatprep.mubr.f32.mxu0 0.0
  %3150 = vmatmul.mubr.f32.gmra.mrb[0].mxu0 %v3074
  %v3151 = vpop.f32.mrb[0].mxu0
  %v3152 = vadd.f32 0.0, %v3151
  %v3153 = vpop.f32.mrb[0].mxu0
  %3154 = vmatprep.mubr.f32.mxu0 0.0
  %3155 = vmatmul.mubr.f32.gmra.mrb[0].mxu0 %v3077
  %v3156 = vpop.f32.mrb[0].mxu0
  %v3157 = vadd.f32 0.0, %v3156
  %v3158 = vpop.f32.mrb[0].mxu0
  %3159 = vdwg.mxu0
  %v3161 = vsel %vm128, %v2910, 0
  %v3164 = vsel %vm128, %v2915, 0
  %v3167 = vsel %vm128, %v3045, 0
  %v3170 = vsel %vm128, %v3050, 0
  %3172 = vmatprep.subr.mxu0 0.0
  %3173 = vmatpush1.xpose.msra.mxu0 %v3167
  %3174 = vmatprep.subr.mxu0 0.0
  %3175 = vmatpush1.xpose.msra.mxu0 %v3170
  %3176 = vmatprep.subr.mxu0 0.0
  %3177 = vmatpush1.xpose.msra.mxu0 0.0
  %3178 = vmatprep.subr.mxu0 0.0
  %3179 = vmatpush1.xpose.msra.mxu0 0.0
  %3180 = vmatprep.subr.mxu0 0.0
  %3181 = vmatpush1.xpose.msra.mxu0 0.0
  %3182 = vmatprep.subr.mxu0 0.0
  %3183 = vmatpush1.xpose.msra.mxu0 0.0
  %3184 = vmatprep.subr.mxu0 0.0
  %3185 = vmatpush1.xpose.msra.mxu0 0.0
  %3186 = vmatprep.subr.mxu0 0.0
  %3187 = vmatpush1.xpose.msra.mxu0 0.0
  %3188 = vmatprep.subr.mxu0 0.0
  %3189 = vmatpush1.xpose.msra.mxu0 0.0
  %3190 = vmatprep.subr.mxu0 0.0
  %3191 = vmatpush1.xpose.msra.mxu0 0.0
  %3192 = vmatprep.subr.mxu0 0.0
  %3193 = vmatpush1.xpose.msra.mxu0 0.0
  %3194 = vmatprep.subr.mxu0 0.0
  %3195 = vmatpush1.xpose.msra.mxu0 0.0
  %3196 = vmatprep.subr.mxu0 0.0
  %3197 = vmatpush1.xpose.msra.mxu0 0.0
  %3198 = vmatprep.subr.mxu0 0.0
  %3199 = vmatpush1.xpose.msra.mxu0 0.0
  %3200 = vmatprep.subr.mxu0 0.0
  %3201 = vmatpush1.xpose.msra.mxu0 0.0
  %3202 = vmatprep.subr.mxu0 0.0
  %3203 = vmatpush1.xpose.msra.mxu0 0.0
  %3204 = vmatprep.subr.mxu0 0.0
  %3205 = vmatpush1.xpose.msra.mxu0 0.0
  %3206 = vmatprep.subr.mxu0 0.0
  %3207 = vmatpush1.xpose.msra.mxu0 0.0
  %3208 = vmatprep.subr.mxu0 0.0
  %3209 = vmatpush1.xpose.msra.mxu0 0.0
  %3210 = vmatprep.subr.mxu0 0.0
  %3211 = vmatpush1.xpose.msra.mxu0 0.0
  %3212 = vmatprep.subr.mxu0 0.0
  %3213 = vmatpush1.xpose.msra.mxu0 0.0
  %3214 = vmatprep.subr.mxu0 0.0
  %3215 = vmatpush1.xpose.msra.mxu0 0.0
  %3216 = vmatprep.subr.mxu0 0.0
  %3217 = vmatpush1.xpose.msra.mxu0 0.0
  %3218 = vmatprep.subr.mxu0 0.0
  %3219 = vmatpush1.xpose.msra.mxu0 0.0
  %3220 = vmatprep.subr.mxu0 0.0
  %3221 = vmatpush1.xpose.msra.mxu0 0.0
  %3222 = vmatprep.subr.mxu0 0.0
  %3223 = vmatpush1.xpose.msra.mxu0 0.0
  %3224 = vmatprep.subr.mxu0 0.0
  %3225 = vmatpush1.xpose.msra.mxu0 0.0
  %3226 = vmatprep.subr.mxu0 0.0
  %3227 = vmatpush1.xpose.msra.mxu0 0.0
  %3228 = vmatprep.subr.mxu0 0.0
  %3229 = vmatpush1.xpose.msra.mxu0 0.0
  %3230 = vmatprep.subr.mxu0 0.0
  %3231 = vmatpush1.xpose.msra.mxu0 0.0
  %3232 = vmatprep.subr.mxu0 0.0
  %3233 = vmatpush1.xpose.msra.mxu0 0.0
  %3234 = vmatprep.subr.mxu0 0.0
  %3235 = vmatpush1.xpose.msra.mxu0 0.0
  %3236 = vmatprep.mubr.f32.mxu0 0.0
  %3237 = vmatmul.mubr.f32.gmra.mrb[0].mxu0 %v3161
  %v3238 = vpop.f32.mrb[0].mxu0
  %v3239 = vadd.f32 0.0, %v3238
  %v3240 = vpop.f32.mrb[0].mxu0
  %3241 = vmatprep.mubr.f32.mxu0 0.0
  %3242 = vmatmul.mubr.f32.gmra.mrb[0].mxu0 %v3164
  %v3243 = vpop.f32.mrb[0].mxu0
  %v3244 = vadd.f32 0.0, %v3243
  %v3245 = vpop.f32.mrb[0].mxu0
  %3246 = vdwg.mxu0
  %v3248 = vsel %vm128, %v2920, 0
  %v3251 = vsel %vm128, %v2925, 0
  %v3254 = vsel %vm128, %v3055, 0
  %v3257 = vsel %vm128, %v3060, 0
  %3259 = vmatprep.subr.mxu0 0.0
  %3260 = vmatpush1.xpose.msra.mxu0 %v3254
  %3261 = vmatprep.subr.mxu0 0.0
  %3262 = vmatpush1.xpose.msra.mxu0 %v3257
  %3263 = vmatprep.subr.mxu0 0.0
  %3264 = vmatpush1.xpose.msra.mxu0 0.0
  %3265 = vmatprep.subr.mxu0 0.0
  %3266 = vmatpush1.xpose.msra.mxu0 0.0
  %3267 = vmatprep.subr.mxu0 0.0
  %3268 = vmatpush1.xpose.msra.mxu0 0.0
  %3269 = vmatprep.subr.mxu0 0.0
  %3270 = vmatpush1.xpose.msra.mxu0 0.0
  %3271 = vmatprep.subr.mxu0 0.0
  %3272 = vmatpush1.xpose.msra.mxu0 0.0
  %3273 = vmatprep.subr.mxu0 0.0
  %3274 = vmatpush1.xpose.msra.mxu0 0.0
  %3275 = vmatprep.subr.mxu0 0.0
  %3276 = vmatpush1.xpose.msra.mxu0 0.0
  %3277 = vmatprep.subr.mxu0 0.0
  %3278 = vmatpush1.xpose.msra.mxu0 0.0
  %3279 = vmatprep.subr.mxu0 0.0
  %3280 = vmatpush1.xpose.msra.mxu0 0.0
  %3281 = vmatprep.subr.mxu0 0.0
  %3282 = vmatpush1.xpose.msra.mxu0 0.0
  %3283 = vmatprep.subr.mxu0 0.0
  %3284 = vmatpush1.xpose.msra.mxu0 0.0
  %3285 = vmatprep.subr.mxu0 0.0
  %3286 = vmatpush1.xpose.msra.mxu0 0.0
  %3287 = vmatprep.subr.mxu0 0.0
  %3288 = vmatpush1.xpose.msra.mxu0 0.0
  %3289 = vmatprep.subr.mxu0 0.0
  %3290 = vmatpush1.xpose.msra.mxu0 0.0
  %3291 = vmatprep.subr.mxu0 0.0
  %3292 = vmatpush1.xpose.msra.mxu0 0.0
  %3293 = vmatprep.subr.mxu0 0.0
  %3294 = vmatpush1.xpose.msra.mxu0 0.0
  %3295 = vmatprep.subr.mxu0 0.0
  %3296 = vmatpush1.xpose.msra.mxu0 0.0
  %3297 = vmatprep.subr.mxu0 0.0
  %3298 = vmatpush1.xpose.msra.mxu0 0.0
  %3299 = vmatprep.subr.mxu0 0.0
  %3300 = vmatpush1.xpose.msra.mxu0 0.0
  %3301 = vmatprep.subr.mxu0 0.0
  %3302 = vmatpush1.xpose.msra.mxu0 0.0
  %3303 = vmatprep.subr.mxu0 0.0
  %3304 = vmatpush1.xpose.msra.mxu0 0.0
  %3305 = vmatprep.subr.mxu0 0.0
  %3306 = vmatpush1.xpose.msra.mxu0 0.0
  %3307 = vmatprep.subr.mxu0 0.0
  %3308 = vmatpush1.xpose.msra.mxu0 0.0
  %3309 = vmatprep.subr.mxu0 0.0
  %3310 = vmatpush1.xpose.msra.mxu0 0.0
  %3311 = vmatprep.subr.mxu0 0.0
  %3312 = vmatpush1.xpose.msra.mxu0 0.0
  %3313 = vmatprep.subr.mxu0 0.0
  %3314 = vmatpush1.xpose.msra.mxu0 0.0
  %3315 = vmatprep.subr.mxu0 0.0
  %3316 = vmatpush1.xpose.msra.mxu0 0.0
  %3317 = vmatprep.subr.mxu0 0.0
  %3318 = vmatpush1.xpose.msra.mxu0 0.0
  %3319 = vmatprep.subr.mxu0 0.0
  %3320 = vmatpush1.xpose.msra.mxu0 0.0
  %3321 = vmatprep.subr.mxu0 0.0
  %3322 = vmatpush1.xpose.msra.mxu0 0.0
  %3323 = vmatprep.mubr.f32.mxu0 0.0
  %3324 = vmatmul.mubr.f32.gmra.mrb[0].mxu0 %v3248
  %v3325 = vpop.f32.mrb[0].mxu0
  %v3326 = vadd.f32 0.0, %v3325
  %v3327 = vpop.f32.mrb[0].mxu0
  %3328 = vmatprep.mubr.f32.mxu0 0.0
  %3329 = vmatmul.mubr.f32.gmra.mrb[0].mxu0 %v3251
  %v3330 = vpop.f32.mrb[0].mxu0
  %v3331 = vadd.f32 0.0, %v3330
  %v3332 = vpop.f32.mrb[0].mxu0
  %3333 = vdwg.mxu0
  %v3335 = vsel %vm128, %v2930, 0
  %v3338 = vsel %vm128, %v2935, 0
  %v3341 = vsel %vm128, %v3065, 0
  %v3344 = vsel %vm128, %v3070, 0
  %3346 = vmatprep.subr.mxu0 0.0
  %3347 = vmatpush1.xpose.msra.mxu0 %v3341
  %3348 = vmatprep.subr.mxu0 0.0
  %3349 = vmatpush1.xpose.msra.mxu0 %v3344
  %3350 = vmatprep.subr.mxu0 0.0
  %3351 = vmatpush1.xpose.msra.mxu0 0.0
  %3352 = vmatprep.subr.mxu0 0.0
  %3353 = vmatpush1.xpose.msra.mxu0 0.0
  %3354 = vmatprep.subr.mxu0 0.0
  %3355 = vmatpush1.xpose.msra.mxu0 0.0
  %3356 = vmatprep.subr.mxu0 0.0
  %3357 = vmatpush1.xpose.msra.mxu0 0.0
  %3358 = vmatprep.subr.mxu0 0.0
  %3359 = vmatpush1.xpose.msra.mxu0 0.0
  %3360 = vmatprep.subr.mxu0 0.0
  %3361 = vmatpush1.xpose.msra.mxu0 0.0
  %3362 = vmatprep.subr.mxu0 0.0
  %3363 = vmatpush1.xpose.msra.mxu0 0.0
  %3364 = vmatprep.subr.mxu0 0.0
  %3365 = vmatpush1.xpose.msra.mxu0 0.0
  %3366 = vmatprep.subr.mxu0 0.0
  %3367 = vmatpush1.xpose.msra.mxu0 0.0
  %3368 = vmatprep.subr.mxu0 0.0
  %3369 = vmatpush1.xpose.msra.mxu0 0.0
  %3370 = vmatprep.subr.mxu0 0.0
  %3371 = vmatpush1.xpose.msra.mxu0 0.0
  %3372 = vmatprep.subr.mxu0 0.0
  %3373 = vmatpush1.xpose.msra.mxu0 0.0
  %3374 = vmatprep.subr.mxu0 0.0
  %3375 = vmatpush1.xpose.msra.mxu0 0.0
  %3376 = vmatprep.subr.mxu0 0.0
  %3377 = vmatpush1.xpose.msra.mxu0 0.0
  %3378 = vmatprep.subr.mxu0 0.0
  %3379 = vmatpush1.xpose.msra.mxu0 0.0
  %3380 = vmatprep.subr.mxu0 0.0
  %3381 = vmatpush1.xpose.msra.mxu0 0.0
  %3382 = vmatprep.subr.mxu0 0.0
  %3383 = vmatpush1.xpose.msra.mxu0 0.0
  %3384 = vmatprep.subr.mxu0 0.0
  %3385 = vmatpush1.xpose.msra.mxu0 0.0
  %3386 = vmatprep.subr.mxu0 0.0
  %3387 = vmatpush1.xpose.msra.mxu0 0.0
  %3388 = vmatprep.subr.mxu0 0.0
  %3389 = vmatpush1.xpose.msra.mxu0 0.0
  %3390 = vmatprep.subr.mxu0 0.0
  %3391 = vmatpush1.xpose.msra.mxu0 0.0
  %3392 = vmatprep.subr.mxu0 0.0
  %3393 = vmatpush1.xpose.msra.mxu0 0.0
  %3394 = vmatprep.subr.mxu0 0.0
  %3395 = vmatpush1.xpose.msra.mxu0 0.0
  %3396 = vmatprep.subr.mxu0 0.0
  %3397 = vmatpush1.xpose.msra.mxu0 0.0
  %3398 = vmatprep.subr.mxu0 0.0
  %3399 = vmatpush1.xpose.msra.mxu0 0.0
  %3400 = vmatprep.subr.mxu0 0.0
  %3401 = vmatpush1.xpose.msra.mxu0 0.0
  %3402 = vmatprep.subr.mxu0 0.0
  %3403 = vmatpush1.xpose.msra.mxu0 0.0
  %3404 = vmatprep.subr.mxu0 0.0
  %3405 = vmatpush1.xpose.msra.mxu0 0.0
  %3406 = vmatprep.subr.mxu0 0.0
  %3407 = vmatpush1.xpose.msra.mxu0 0.0
  %3408 = vmatprep.subr.mxu0 0.0
  %3409 = vmatpush1.xpose.msra.mxu0 0.0
  %3410 = vmatprep.mubr.f32.mxu0 0.0
  %3411 = vmatmul.mubr.f32.gmra.mrb[0].mxu0 %v3335
  %v3412 = vpop.f32.mrb[0].mxu0
  %v3413 = vadd.f32 0.0, %v3412
  %v3414 = vpop.f32.mrb[0].mxu0
  %3415 = vmatprep.mubr.f32.mxu0 0.0
  %3416 = vmatmul.mubr.f32.gmra.mrb[0].mxu0 %v3338
  %v3417 = vpop.f32.mrb[0].mxu0
  %v3418 = vadd.f32 0.0, %v3417
  %v3419 = vpop.f32.mrb[0].mxu0
  %3420 = vdwg.mxu0
  %v3421 = vsel %vm614, %v3152, -inf
  %3422 = vmax.xlane.f32.xlu0 %v3421
  %v3423 = vpop.xlane.xlu0 %3422
  %v3424 = vsel %vm614, %v3157, -inf
  %3425 = vmax.xlane.f32.xlu0 %v3424
  %v3426 = vpop.xlane.xlu0 %3425
  %v3427 = vsel %vm614, %v3239, -inf
  %3428 = vmax.xlane.f32.xlu0 %v3427
  %v3429 = vpop.xlane.xlu0 %3428
  %v3430 = vsel %vm614, %v3244, -inf
  %3431 = vmax.xlane.f32.xlu0 %v3430
  %v3432 = vpop.xlane.xlu0 %3431
  %v3433 = vsel %vm614, %v3326, -inf
  %3434 = vmax.xlane.f32.xlu0 %v3433
  %v3435 = vpop.xlane.xlu0 %3434
  %v3436 = vsel %vm614, %v3331, -inf
  %3437 = vmax.xlane.f32.xlu0 %v3436
  %v3438 = vpop.xlane.xlu0 %3437
  %v3439 = vsel %vm614, %v3413, -inf
  %3440 = vmax.xlane.f32.xlu0 %v3439
  %v3441 = vpop.xlane.xlu0 %3440
  %v3442 = vsel %vm614, %v3418, -inf
  %3443 = vmax.xlane.f32.xlu0 %v3442
  %v3444 = vpop.xlane.xlu0 %3443
  %v3445 = vsub.f32 %v3152, %v3423
  %v3446 = vsub.f32 %v3157, %v3426
  %v3447 = vsub.f32 %v3239, %v3429
  %v3448 = vsub.f32 %v3244, %v3432
  %v3449 = vsub.f32 %v3326, %v3435
  %v3450 = vsub.f32 %v3331, %v3438
  %v3451 = vsub.f32 %v3413, %v3441
  %v3452 = vsub.f32 %v3418, %v3444
  %v3453 = vmul.f32 %v3445, 1.442695
  %v3454 = vpow.pop %v3453
  %v3455 = vmul.f32 %v3446, 1.442695
  %v3456 = vpow.pop %v3455
  %v3457 = vmul.f32 %v3447, 1.442695
  %v3458 = vpow.pop %v3457
  %v3459 = vmul.f32 %v3448, 1.442695
  %v3460 = vpow.pop %v3459
  %v3461 = vmul.f32 %v3449, 1.442695
  %v3462 = vpow.pop %v3461
  %v3463 = vmul.f32 %v3450, 1.442695
  %v3464 = vpow.pop %v3463
  %v3465 = vmul.f32 %v3451, 1.442695
  %v3466 = vpow.pop %v3465
  %v3467 = vmul.f32 %v3452, 1.442695
  %v3468 = vpow.pop %v3467
  %v3469 = vsel %vm614, %v3454, 0.0
  %3470 = vadd.xlane.f32.xlu0 %v3469
  %v3471 = vpop.xlane.xlu0 %3470
  %v3472 = vsel %vm614, %v3456, 0.0
  %3473 = vadd.xlane.f32.xlu0 %v3472
  %v3474 = vpop.xlane.xlu0 %3473
  %v3475 = vsel %vm614, %v3458, 0.0
  %3476 = vadd.xlane.f32.xlu0 %v3475
  %v3477 = vpop.xlane.xlu0 %3476
  %v3478 = vsel %vm614, %v3460, 0.0
  %3479 = vadd.xlane.f32.xlu0 %v3478
  %v3480 = vpop.xlane.xlu0 %3479
  %v3481 = vsel %vm614, %v3462, 0.0
  %3482 = vadd.xlane.f32.xlu0 %v3481
  %v3483 = vpop.xlane.xlu0 %3482
  %v3484 = vsel %vm614, %v3464, 0.0
  %3485 = vadd.xlane.f32.xlu0 %v3484
  %v3486 = vpop.xlane.xlu0 %3485
  %v3487 = vsel %vm614, %v3466, 0.0
  %3488 = vadd.xlane.f32.xlu0 %v3487
  %v3489 = vpop.xlane.xlu0 %3488
  %v3490 = vsel %vm614, %v3468, 0.0
  %3491 = vadd.xlane.f32.xlu0 %v3490
  %v3492 = vpop.xlane.xlu0 %3491
  %v3493 = vrcp.pop %v3471
  %v3494 = vmul.f32 %v3454, %v3493
  %v3495 = vrcp.pop %v3474
  %v3496 = vmul.f32 %v3456, %v3495
  %v3497 = vrcp.pop %v3477
  %v3498 = vmul.f32 %v3458, %v3497
  %v3499 = vrcp.pop %v3480
  %v3500 = vmul.f32 %v3460, %v3499
  %v3501 = vrcp.pop %v3483
  %v3502 = vmul.f32 %v3462, %v3501
  %v3503 = vrcp.pop %v3486
  %v3504 = vmul.f32 %v3464, %v3503
  %v3505 = vrcp.pop %v3489
  %v3506 = vmul.f32 %v3466, %v3505
  %v3507 = vrcp.pop %v3492
  %v3508 = vmul.f32 %v3468, %v3507
  %3509 = vrot.lane.b32.xlu0 %v3035, 120
  %v3510 = vpop.permute.xlu0 %3509
  %3511 = vrot.lane.b32.xlu0 %v3040, 120
  %v3512 = vpop.permute.xlu0 %3511
  %v3516 = vsel %vm614, %v3494, 0
  %v3519 = vsel %vm614, %v3496, 0
  %3521 = vmatprep.subr.mxu0 0.0
  %3522 = vmatpush1.msra.mxu0 %v3510
  %3523 = vmatprep.subr.mxu0 0.0
  %3524 = vmatpush1.msra.mxu0 %v3512
  %3525 = vmatprep.subr.mxu0 0.0
  %3526 = vmatpush1.msra.mxu0 0.0
  %3527 = vmatprep.subr.mxu0 0.0
  %3528 = vmatpush1.msra.mxu0 0.0
  %3529 = vmatprep.subr.mxu0 0.0
  %3530 = vmatpush1.msra.mxu0 0.0
  %3531 = vmatprep.subr.mxu0 0.0
  %3532 = vmatpush1.msra.mxu0 0.0
  %3533 = vmatprep.subr.mxu0 0.0
  %3534 = vmatpush1.msra.mxu0 0.0
  %3535 = vmatprep.subr.mxu0 0.0
  %3536 = vmatpush1.msra.mxu0 0.0
  %3537 = vmatprep.subr.mxu0 0.0
  %3538 = vmatpush1.msra.mxu0 0.0
  %3539 = vmatprep.subr.mxu0 0.0
  %3540 = vmatpush1.msra.mxu0 0.0
  %3541 = vmatprep.subr.mxu0 0.0
  %3542 = vmatpush1.msra.mxu0 0.0
  %3543 = vmatprep.subr.mxu0 0.0
  %3544 = vmatpush1.msra.mxu0 0.0
  %3545 = vmatprep.subr.mxu0 0.0
  %3546 = vmatpush1.msra.mxu0 0.0
  %3547 = vmatprep.subr.mxu0 0.0
  %3548 = vmatpush1.msra.mxu0 0.0
  %3549 = vmatprep.subr.mxu0 0.0
  %3550 = vmatpush1.msra.mxu0 0.0
  %3551 = vmatprep.subr.mxu0 0.0
  %3552 = vmatpush1.msra.mxu0 0.0
  %3553 = vmatprep.subr.mxu0 0.0
  %3554 = vmatpush1.msra.mxu0 0.0
  %3555 = vmatprep.subr.mxu0 0.0
  %3556 = vmatpush1.msra.mxu0 0.0
  %3557 = vmatprep.subr.mxu0 0.0
  %3558 = vmatpush1.msra.mxu0 0.0
  %3559 = vmatprep.subr.mxu0 0.0
  %3560 = vmatpush1.msra.mxu0 0.0
  %3561 = vmatprep.subr.mxu0 0.0
  %3562 = vmatpush1.msra.mxu0 0.0
  %3563 = vmatprep.subr.mxu0 0.0
  %3564 = vmatpush1.msra.mxu0 0.0
  %3565 = vmatprep.subr.mxu0 0.0
  %3566 = vmatpush1.msra.mxu0 0.0
  %3567 = vmatprep.subr.mxu0 0.0
  %3568 = vmatpush1.msra.mxu0 0.0
  %3569 = vmatprep.subr.mxu0 0.0
  %3570 = vmatpush1.msra.mxu0 0.0
  %3571 = vmatprep.subr.mxu0 0.0
  %3572 = vmatpush1.msra.mxu0 0.0
  %3573 = vmatprep.subr.mxu0 0.0
  %3574 = vmatpush1.msra.mxu0 0.0
  %3575 = vmatprep.subr.mxu0 0.0
  %3576 = vmatpush1.msra.mxu0 0.0
  %3577 = vmatprep.subr.mxu0 0.0
  %3578 = vmatpush1.msra.mxu0 0.0
  %3579 = vmatprep.subr.mxu0 0.0
  %3580 = vmatpush1.msra.mxu0 0.0
  %3581 = vmatprep.subr.mxu0 0.0
  %3582 = vmatpush1.msra.mxu0 0.0
  %3583 = vmatprep.subr.mxu0 0.0
  %3584 = vmatpush1.msra.mxu0 0.0
  %3585 = vmatprep.mubr.f32.mxu0 0.0
  %3586 = vmatmul.mubr.f32.gmra.mrb[0].mxu0 %v3516
  %v3587 = vpop.f32.mrb[0].mxu0
  %v3588 = vadd.f32 0.0, %v3587
  %v3589 = vpop.f32.mrb[0].mxu0
  %3590 = vmatprep.mubr.f32.mxu0 0.0
  %3591 = vmatmul.mubr.f32.gmra.mrb[0].mxu0 %v3519
  %v3592 = vpop.f32.mrb[0].mxu0
  %v3593 = vadd.f32 0.0, %v3592
  %v3594 = vpop.f32.mrb[0].mxu0
  %3595 = vdwg.mxu0
  %3596 = vrot.lane.b32.xlu0 %v3045, 120
  %v3597 = vpop.permute.xlu0 %3596
  %3598 = vrot.lane.b32.xlu0 %v3050, 120
  %v3599 = vpop.permute.xlu0 %3598
  %v3603 = vsel %vm614, %v3498, 0
  %v3606 = vsel %vm614, %v3500, 0
  %3608 = vmatprep.subr.mxu0 0.0
  %3609 = vmatpush1.msra.mxu0 %v3597
  %3610 = vmatprep.subr.mxu0 0.0
  %3611 = vmatpush1.msra.mxu0 %v3599
  %3612 = vmatprep.subr.mxu0 0.0
  %3613 = vmatpush1.msra.mxu0 0.0
  %3614 = vmatprep.subr.mxu0 0.0
  %3615 = vmatpush1.msra.mxu0 0.0
  %3616 = vmatprep.subr.mxu0 0.0
  %3617 = vmatpush1.msra.mxu0 0.0
  %3618 = vmatprep.subr.mxu0 0.0
  %3619 = vmatpush1.msra.mxu0 0.0
  %3620 = vmatprep.subr.mxu0 0.0
  %3621 = vmatpush1.msra.mxu0 0.0
  %3622 = vmatprep.subr.mxu0 0.0
  %3623 = vmatpush1.msra.mxu0 0.0
  %3624 = vmatprep.subr.mxu0 0.0
  %3625 = vmatpush1.msra.mxu0 0.0
  %3626 = vmatprep.subr.mxu0 0.0
  %3627 = vmatpush1.msra.mxu0 0.0
  %3628 = vmatprep.subr.mxu0 0.0
  %3629 = vmatpush1.msra.mxu0 0.0
  %3630 = vmatprep.subr.mxu0 0.0
  %3631 = vmatpush1.msra.mxu0 0.0
  %3632 = vmatprep.subr.mxu0 0.0
  %3633 = vmatpush1.msra.mxu0 0.0
  %3634 = vmatprep.subr.mxu0 0.0
  %3635 = vmatpush1.msra.mxu0 0.0
  %3636 = vmatprep.subr.mxu0 0.0
  %3637 = vmatpush1.msra.mxu0 0.0
  %3638 = vmatprep.subr.mxu0 0.0
  %3639 = vmatpush1.msra.mxu0 0.0
  %3640 = vmatprep.subr.mxu0 0.0
  %3641 = vmatpush1.msra.mxu0 0.0
  %3642 = vmatprep.subr.mxu0 0.0
  %3643 = vmatpush1.msra.mxu0 0.0
  %3644 = vmatprep.subr.mxu0 0.0
  %3645 = vmatpush1.msra.mxu0 0.0
  %3646 = vmatprep.subr.mxu0 0.0
  %3647 = vmatpush1.msra.mxu0 0.0
  %3648 = vmatprep.subr.mxu0 0.0
  %3649 = vmatpush1.msra.mxu0 0.0
  %3650 = vmatprep.subr.mxu0 0.0
  %3651 = vmatpush1.msra.mxu0 0.0
  %3652 = vmatprep.subr.mxu0 0.0
  %3653 = vmatpush1.msra.mxu0 0.0
  %3654 = vmatprep.subr.mxu0 0.0
  %3655 = vmatpush1.msra.mxu0 0.0
  %3656 = vmatprep.subr.mxu0 0.0
  %3657 = vmatpush1.msra.mxu0 0.0
  %3658 = vmatprep.subr.mxu0 0.0
  %3659 = vmatpush1.msra.mxu0 0.0
  %3660 = vmatprep.subr.mxu0 0.0
  %3661 = vmatpush1.msra.mxu0 0.0
  %3662 = vmatprep.subr.mxu0 0.0
  %3663 = vmatpush1.msra.mxu0 0.0
  %3664 = vmatprep.subr.mxu0 0.0
  %3665 = vmatpush1.msra.mxu0 0.0
  %3666 = vmatprep.subr.mxu0 0.0
  %3667 = vmatpush1.msra.mxu0 0.0
  %3668 = vmatprep.subr.mxu0 0.0
  %3669 = vmatpush1.msra.mxu0 0.0
  %3670 = vmatprep.subr.mxu0 0.0
  %3671 = vmatpush1.msra.mxu0 0.0
  %3672 = vmatprep.mubr.f32.mxu0 0.0
  %3673 = vmatmul.mubr.f32.gmra.mrb[0].mxu0 %v3603
  %v3674 = vpop.f32.mrb[0].mxu0
  %v3675 = vadd.f32 0.0, %v3674
  %v3676 = vpop.f32.mrb[0].mxu0
  %3677 = vmatprep.mubr.f32.mxu0 0.0
  %3678 = vmatmul.mubr.f32.gmra.mrb[0].mxu0 %v3606
  %v3679 = vpop.f32.mrb[0].mxu0
  %v3680 = vadd.f32 0.0, %v3679
  %v3681 = vpop.f32.mrb[0].mxu0
  %3682 = vdwg.mxu0
  %3683 = vrot.lane.b32.xlu0 %v3055, 120
  %v3684 = vpop.permute.xlu0 %3683
  %3685 = vrot.lane.b32.xlu0 %v3060, 120
  %v3686 = vpop.permute.xlu0 %3685
  %v3690 = vsel %vm614, %v3502, 0
  %v3693 = vsel %vm614, %v3504, 0
  %3695 = vmatprep.subr.mxu0 0.0
  %3696 = vmatpush1.msra.mxu0 %v3684
  %3697 = vmatprep.subr.mxu0 0.0
  %3698 = vmatpush1.msra.mxu0 %v3686
  %3699 = vmatprep.subr.mxu0 0.0
  %3700 = vmatpush1.msra.mxu0 0.0
  %3701 = vmatprep.subr.mxu0 0.0
  %3702 = vmatpush1.msra.mxu0 0.0
  %3703 = vmatprep.subr.mxu0 0.0
  %3704 = vmatpush1.msra.mxu0 0.0
  %3705 = vmatprep.subr.mxu0 0.0
  %3706 = vmatpush1.msra.mxu0 0.0
  %3707 = vmatprep.subr.mxu0 0.0
  %3708 = vmatpush1.msra.mxu0 0.0
  %3709 = vmatprep.subr.mxu0 0.0
  %3710 = vmatpush1.msra.mxu0 0.0
  %3711 = vmatprep.subr.mxu0 0.0
  %3712 = vmatpush1.msra.mxu0 0.0
  %3713 = vmatprep.subr.mxu0 0.0
  %3714 = vmatpush1.msra.mxu0 0.0
  %3715 = vmatprep.subr.mxu0 0.0
  %3716 = vmatpush1.msra.mxu0 0.0
  %3717 = vmatprep.subr.mxu0 0.0
  %3718 = vmatpush1.msra.mxu0 0.0
  %3719 = vmatprep.subr.mxu0 0.0
  %3720 = vmatpush1.msra.mxu0 0.0
  %3721 = vmatprep.subr.mxu0 0.0
  %3722 = vmatpush1.msra.mxu0 0.0
  %3723 = vmatprep.subr.mxu0 0.0
  %3724 = vmatpush1.msra.mxu0 0.0
  %3725 = vmatprep.subr.mxu0 0.0
  %3726 = vmatpush1.msra.mxu0 0.0
  %3727 = vmatprep.subr.mxu0 0.0
  %3728 = vmatpush1.msra.mxu0 0.0
  %3729 = vmatprep.subr.mxu0 0.0
  %3730 = vmatpush1.msra.mxu0 0.0
  %3731 = vmatprep.subr.mxu0 0.0
  %3732 = vmatpush1.msra.mxu0 0.0
  %3733 = vmatprep.subr.mxu0 0.0
  %3734 = vmatpush1.msra.mxu0 0.0
  %3735 = vmatprep.subr.mxu0 0.0
  %3736 = vmatpush1.msra.mxu0 0.0
  %3737 = vmatprep.subr.mxu0 0.0
  %3738 = vmatpush1.msra.mxu0 0.0
  %3739 = vmatprep.subr.mxu0 0.0
  %3740 = vmatpush1.msra.mxu0 0.0
  %3741 = vmatprep.subr.mxu0 0.0
  %3742 = vmatpush1.msra.mxu0 0.0
  %3743 = vmatprep.subr.mxu0 0.0
  %3744 = vmatpush1.msra.mxu0 0.0
  %3745 = vmatprep.subr.mxu0 0.0
  %3746 = vmatpush1.msra.mxu0 0.0
  %3747 = vmatprep.subr.mxu0 0.0
  %3748 = vmatpush1.msra.mxu0 0.0
  %3749 = vmatprep.subr.mxu0 0.0
  %3750 = vmatpush1.msra.mxu0 0.0
  %3751 = vmatprep.subr.mxu0 0.0
  %3752 = vmatpush1.msra.mxu0 0.0
  %3753 = vmatprep.subr.mxu0 0.0
  %3754 = vmatpush1.msra.mxu0 0.0
  %3755 = vmatprep.subr.mxu0 0.0
  %3756 = vmatpush1.msra.mxu0 0.0
  %3757 = vmatprep.subr.mxu0 0.0
  %3758 = vmatpush1.msra.mxu0 0.0
  %3759 = vmatprep.mubr.f32.mxu0 0.0
  %3760 = vmatmul.mubr.f32.gmra.mrb[0].mxu0 %v3690
  %v3761 = vpop.f32.mrb[0].mxu0
  %v3762 = vadd.f32 0.0, %v3761
  %v3763 = vpop.f32.mrb[0].mxu0
  %3764 = vmatprep.mubr.f32.mxu0 0.0
  %3765 = vmatmul.mubr.f32.gmra.mrb[0].mxu0 %v3693
  %v3766 = vpop.f32.mrb[0].mxu0
  %v3767 = vadd.f32 0.0, %v3766
  %v3768 = vpop.f32.mrb[0].mxu0
  %3769 = vdwg.mxu0
  %3770 = vrot.lane.b32.xlu0 %v3065, 120
  %v3771 = vpop.permute.xlu0 %3770
  %3772 = vrot.lane.b32.xlu0 %v3070, 120
  %v3773 = vpop.permute.xlu0 %3772
  %v3777 = vsel %vm614, %v3506, 0
  %v3780 = vsel %vm614, %v3508, 0
  %3782 = vmatprep.subr.mxu0 0.0
  %3783 = vmatpush1.msra.mxu0 %v3771
  %3784 = vmatprep.subr.mxu0 0.0
  %3785 = vmatpush1.msra.mxu0 %v3773
  %3786 = vmatprep.subr.mxu0 0.0
  %3787 = vmatpush1.msra.mxu0 0.0
  %3788 = vmatprep.subr.mxu0 0.0
  %3789 = vmatpush1.msra.mxu0 0.0
  %3790 = vmatprep.subr.mxu0 0.0
  %3791 = vmatpush1.msra.mxu0 0.0
  %3792 = vmatprep.subr.mxu0 0.0
  %3793 = vmatpush1.msra.mxu0 0.0
  %3794 = vmatprep.subr.mxu0 0.0
  %3795 = vmatpush1.msra.mxu0 0.0
  %3796 = vmatprep.subr.mxu0 0.0
  %3797 = vmatpush1.msra.mxu0 0.0
  %3798 = vmatprep.subr.mxu0 0.0
  %3799 = vmatpush1.msra.mxu0 0.0
  %3800 = vmatprep.subr.mxu0 0.0
  %3801 = vmatpush1.msra.mxu0 0.0
  %3802 = vmatprep.subr.mxu0 0.0
  %3803 = vmatpush1.msra.mxu0 0.0
  %3804 = vmatprep.subr.mxu0 0.0
  %3805 = vmatpush1.msra.mxu0 0.0
  %3806 = vmatprep.subr.mxu0 0.0
  %3807 = vmatpush1.msra.mxu0 0.0
  %3808 = vmatprep.subr.mxu0 0.0
  %3809 = vmatpush1.msra.mxu0 0.0
  %3810 = vmatprep.subr.mxu0 0.0
  %3811 = vmatpush1.msra.mxu0 0.0
  %3812 = vmatprep.subr.mxu0 0.0
  %3813 = vmatpush1.msra.mxu0 0.0
  %3814 = vmatprep.subr.mxu0 0.0
  %3815 = vmatpush1.msra.mxu0 0.0
  %3816 = vmatprep.subr.mxu0 0.0
  %3817 = vmatpush1.msra.mxu0 0.0
  %3818 = vmatprep.subr.mxu0 0.0
  %3819 = vmatpush1.msra.mxu0 0.0
  %3820 = vmatprep.subr.mxu0 0.0
  %3821 = vmatpush1.msra.mxu0 0.0
  %3822 = vmatprep.subr.mxu0 0.0
  %3823 = vmatpush1.msra.mxu0 0.0
  %3824 = vmatprep.subr.mxu0 0.0
  %3825 = vmatpush1.msra.mxu0 0.0
  %3826 = vmatprep.subr.mxu0 0.0
  %3827 = vmatpush1.msra.mxu0 0.0
  %3828 = vmatprep.subr.mxu0 0.0
  %3829 = vmatpush1.msra.mxu0 0.0
  %3830 = vmatprep.subr.mxu0 0.0
  %3831 = vmatpush1.msra.mxu0 0.0
  %3832 = vmatprep.subr.mxu0 0.0
  %3833 = vmatpush1.msra.mxu0 0.0
  %3834 = vmatprep.subr.mxu0 0.0
  %3835 = vmatpush1.msra.mxu0 0.0
  %3836 = vmatprep.subr.mxu0 0.0
  %3837 = vmatpush1.msra.mxu0 0.0
  %3838 = vmatprep.subr.mxu0 0.0
  %3839 = vmatpush1.msra.mxu0 0.0
  %3840 = vmatprep.subr.mxu0 0.0
  %3841 = vmatpush1.msra.mxu0 0.0
  %3842 = vmatprep.subr.mxu0 0.0
  %3843 = vmatpush1.msra.mxu0 0.0
  %3844 = vmatprep.subr.mxu0 0.0
  %3845 = vmatpush1.msra.mxu0 0.0
  %3846 = vmatprep.mubr.f32.mxu0 0.0
  %3847 = vmatmul.mubr.f32.gmra.mrb[0].mxu0 %v3777
  %v3848 = vpop.f32.mrb[0].mxu0
  %v3849 = vadd.f32 0.0, %v3848
  %v3850 = vpop.f32.mrb[0].mxu0
  %3851 = vmatprep.mubr.f32.mxu0 0.0
  %3852 = vmatmul.mubr.f32.gmra.mrb[0].mxu0 %v3780
  %v3853 = vpop.f32.mrb[0].mxu0
  %v3854 = vadd.f32 0.0, %v3853
  %v3855 = vpop.f32.mrb[0].mxu0
  %3856 = vdwg.mxu0
  %v3858 = vsel %vm128, %v3588, 0
  %v3861 = vsel %vm128, %v3593, 0
  %v3864 = vsel %vm128, %v3675, 0
  %v3867 = vsel %vm128, %v3680, 0
  %v3870 = vsel %vm128, %v3762, 0
  %v3873 = vsel %vm128, %v3767, 0
  %v3876 = vsel %vm128, %v3849, 0
  %v3879 = vsel %vm128, %v3854, 0
  %3881 = vmatprep.subr.mxu0 0.0
  %3882 = vmatpush1.msra.mxu0 %v86
  %3883 = vmatprep.subr.mxu0 0.0
  %3884 = vmatpush1.msra.mxu0 0.0
  %3885 = vmatprep.subr.mxu0 0.0
  %3886 = vmatpush1.msra.mxu0 0.0
  %3887 = vmatprep.subr.mxu0 0.0
  %3888 = vmatpush1.msra.mxu0 0.0
  %3889 = vmatprep.subr.mxu0 0.0
  %3890 = vmatpush1.msra.mxu0 0.0
  %3891 = vmatprep.subr.mxu0 0.0
  %3892 = vmatpush1.msra.mxu0 0.0
  %3893 = vmatprep.subr.mxu0 0.0
  %3894 = vmatpush1.msra.mxu0 0.0
  %3895 = vmatprep.subr.mxu0 0.0
  %3896 = vmatpush1.msra.mxu0 0.0
  %3897 = vmatprep.subr.mxu0 0.0
  %3898 = vmatpush1.msra.mxu0 0.0
  %3899 = vmatprep.subr.mxu0 0.0
  %3900 = vmatpush1.msra.mxu0 0.0
  %3901 = vmatprep.subr.mxu0 0.0
  %3902 = vmatpush1.msra.mxu0 0.0
  %3903 = vmatprep.subr.mxu0 0.0
  %3904 = vmatpush1.msra.mxu0 0.0
  %3905 = vmatprep.subr.mxu0 0.0
  %3906 = vmatpush1.msra.mxu0 0.0
  %3907 = vmatprep.subr.mxu0 0.0
  %3908 = vmatpush1.msra.mxu0 0.0
  %3909 = vmatprep.subr.mxu0 0.0
  %3910 = vmatpush1.msra.mxu0 0.0
  %3911 = vmatprep.subr.mxu0 0.0
  %3912 = vmatpush1.msra.mxu0 0.0
  %3913 = vmatprep.subr.mxu0 0.0
  %3914 = vmatpush1.msra.mxu0 0.0
  %3915 = vmatprep.subr.mxu0 0.0
  %3916 = vmatpush1.msra.mxu0 0.0
  %3917 = vmatprep.subr.mxu0 0.0
  %3918 = vmatpush1.msra.mxu0 0.0
  %3919 = vmatprep.subr.mxu0 0.0
  %3920 = vmatpush1.msra.mxu0 0.0
  %3921 = vmatprep.subr.mxu0 0.0
  %3922 = vmatpush1.msra.mxu0 0.0
  %3923 = vmatprep.subr.mxu0 0.0
  %3924 = vmatpush1.msra.mxu0 0.0
  %3925 = vmatprep.subr.mxu0 0.0
  %3926 = vmatpush1.msra.mxu0 0.0
  %3927 = vmatprep.subr.mxu0 0.0
  %3928 = vmatpush1.msra.mxu0 0.0
  %3929 = vmatprep.subr.mxu0 0.0
  %3930 = vmatpush1.msra.mxu0 0.0
  %3931 = vmatprep.subr.mxu0 0.0
  %3932 = vmatpush1.msra.mxu0 0.0
  %3933 = vmatprep.subr.mxu0 0.0
  %3934 = vmatpush1.msra.mxu0 0.0
  %3935 = vmatprep.subr.mxu0 0.0
  %3936 = vmatpush1.msra.mxu0 0.0
  %3937 = vmatprep.subr.mxu0 0.0
  %3938 = vmatpush1.msra.mxu0 0.0
  %3939 = vmatprep.subr.mxu0 0.0
  %3940 = vmatpush1.msra.mxu0 0.0
  %3941 = vmatprep.subr.mxu0 0.0
  %3942 = vmatpush1.msra.mxu0 0.0
  %3943 = vmatprep.subr.mxu0 0.0
  %3944 = vmatpush1.msra.mxu0 0.0
  %3945 = vmatprep.mubr.f32.mxu0 0.0
  %3946 = vmatmul.mubr.f32.gmra.mrb[0].mxu0 %v3858
  %v3947 = vpop.f32.mrb[0].mxu0
  %v3948 = vadd.f32 0.0, %v3947
  %v3949 = vpop.f32.mrb[0].mxu0
  %3950 = vmatprep.mubr.f32.mxu0 0.0
  %3951 = vmatmul.mubr.f32.gmra.mrb[0].mxu0 %v3861
  %v3952 = vpop.f32.mrb[0].mxu0
  %v3953 = vadd.f32 0.0, %v3952
  %v3954 = vpop.f32.mrb[0].mxu0
  %3955 = vmatprep.mubr.f32.mxu0 0.0
  %3956 = vmatmul.mubr.f32.gmra.mrb[0].mxu0 %v3864
  %v3957 = vpop.f32.mrb[0].mxu0
  %v3958 = vadd.f32 0.0, %v3957
  %v3959 = vpop.f32.mrb[0].mxu0
  %3960 = vmatprep.mubr.f32.mxu0 0.0
  %3961 = vmatmul.mubr.f32.gmra.mrb[0].mxu0 %v3867
  %v3962 = vpop.f32.mrb[0].mxu0
  %v3963 = vadd.f32 0.0, %v3962
  %v3964 = vpop.f32.mrb[0].mxu0
  %3965 = vmatprep.mubr.f32.mxu0 0.0
  %3966 = vmatmul.mubr.f32.gmra.mrb[0].mxu0 %v3870
  %v3967 = vpop.f32.mrb[0].mxu0
  %v3968 = vadd.f32 0.0, %v3967
  %v3969 = vpop.f32.mrb[0].mxu0
  %3970 = vmatprep.mubr.f32.mxu0 0.0
  %3971 = vmatmul.mubr.f32.gmra.mrb[0].mxu0 %v3873
  %v3972 = vpop.f32.mrb[0].mxu0
  %v3973 = vadd.f32 0.0, %v3972
  %v3974 = vpop.f32.mrb[0].mxu0
  %3975 = vmatprep.mubr.f32.mxu0 0.0
  %3976 = vmatmul.mubr.f32.gmra.mrb[0].mxu0 %v3876
  %v3977 = vpop.f32.mrb[0].mxu0
  %v3978 = vadd.f32 0.0, %v3977
  %v3979 = vpop.f32.mrb[0].mxu0
  %3980 = vmatprep.mubr.f32.mxu0 0.0
  %3981 = vmatmul.mubr.f32.gmra.mrb[0].mxu0 %v3879
  %v3982 = vpop.f32.mrb[0].mxu0
  %v3983 = vadd.f32 0.0, %v3982
  %v3984 = vpop.f32.mrb[0].mxu0
  %3985 = vdwg.mxu0
  %v3986 = vadd.f32 %v2795, %v3948
  %v3987 = vadd.f32 %v2796, %v3953
  %v3988 = vadd.f32 %v2797, %v3958
  %v3989 = vadd.f32 %v2798, %v3963
  %v3990 = vadd.f32 %v2799, %v3968
  %v3991 = vadd.f32 %v2800, %v3973
  %v3992 = vadd.f32 %v2801, %v3978
  %v3993 = vadd.f32 %v2802, %v3983
  %v3995 = vlaneseq
  %v3996 = vshrl.u32 %v3995, 7
  %v3997 = vsub.s32 0, %v3996
  %v3998 = vrot.slane %v87, %v3997
  %v4000 = vadd.f32 %v3986, %v3998
  %v4001 = vadd.f32 %v3987, %v3998
  %v4002 = vadd.f32 %v3988, %v3998
  %v4003 = vadd.f32 %v3989, %v3998
  %v4004 = vadd.f32 %v3990, %v3998
  %v4005 = vadd.f32 %v3991, %v3998
  %v4006 = vadd.f32 %v3992, %v3998
  %v4007 = vadd.f32 %v3993, %v3998
  %v4009 = vsel %vm614, %v105, 0
  %v4012 = vsel %vm614, %v106, 0
  %v4015 = vsel %vm614, %v107, 0
  %v4018 = vsel %vm614, %v108, 0
  %4020 = vmatprep.subr.mxu0 0.0
  %4021 = vmatpush1.msra.mxu0 %v2272
  %4022 = vmatprep.subr.mxu0 0.0
  %4023 = vmatpush1.msra.mxu0 %v2274
  %4024 = vmatprep.subr.mxu0 0.0
  %4025 = vmatpush1.msra.mxu0 0.0
  %4026 = vmatprep.subr.mxu0 0.0
  %4027 = vmatpush1.msra.mxu0 0.0
  %4028 = vmatprep.subr.mxu0 0.0
  %4029 = vmatpush1.msra.mxu0 0.0
  %4030 = vmatprep.subr.mxu0 0.0
  %4031 = vmatpush1.msra.mxu0 0.0
  %4032 = vmatprep.subr.mxu0 0.0
  %4033 = vmatpush1.msra.mxu0 0.0
  %4034 = vmatprep.subr.mxu0 0.0
  %4035 = vmatpush1.msra.mxu0 0.0
  %4036 = vmatprep.subr.mxu0 0.0
  %4037 = vmatpush1.msra.mxu0 0.0
  %4038 = vmatprep.subr.mxu0 0.0
  %4039 = vmatpush1.msra.mxu0 0.0
  %4040 = vmatprep.subr.mxu0 0.0
  %4041 = vmatpush1.msra.mxu0 0.0
  %4042 = vmatprep.subr.mxu0 0.0
  %4043 = vmatpush1.msra.mxu0 0.0
  %4044 = vmatprep.subr.mxu0 0.0
  %4045 = vmatpush1.msra.mxu0 0.0
  %4046 = vmatprep.subr.mxu0 0.0
  %4047 = vmatpush1.msra.mxu0 0.0
  %4048 = vmatprep.subr.mxu0 0.0
  %4049 = vmatpush1.msra.mxu0 0.0
  %4050 = vmatprep.subr.mxu0 0.0
  %4051 = vmatpush1.msra.mxu0 0.0
  %4052 = vmatprep.subr.mxu0 0.0
  %4053 = vmatpush1.msra.mxu0 0.0
  %4054 = vmatprep.subr.mxu0 0.0
  %4055 = vmatpush1.msra.mxu0 0.0
  %4056 = vmatprep.subr.mxu0 0.0
  %4057 = vmatpush1.msra.mxu0 0.0
  %4058 = vmatprep.subr.mxu0 0.0
  %4059 = vmatpush1.msra.mxu0 0.0
  %4060 = vmatprep.subr.mxu0 0.0
  %4061 = vmatpush1.msra.mxu0 0.0
  %4062 = vmatprep.subr.mxu0 0.0
  %4063 = vmatpush1.msra.mxu0 0.0
  %4064 = vmatprep.subr.mxu0 0.0
  %4065 = vmatpush1.msra.mxu0 0.0
  %4066 = vmatprep.subr.mxu0 0.0
  %4067 = vmatpush1.msra.mxu0 0.0
  %4068 = vmatprep.subr.mxu0 0.0
  %4069 = vmatpush1.msra.mxu0 0.0
  %4070 = vmatprep.subr.mxu0 0.0
  %4071 = vmatpush1.msra.mxu0 0.0
  %4072 = vmatprep.subr.mxu0 0.0
  %4073 = vmatpush1.msra.mxu0 0.0
  %4074 = vmatprep.subr.mxu0 0.0
  %4075 = vmatpush1.msra.mxu0 0.0
  %4076 = vmatprep.subr.mxu0 0.0
  %4077 = vmatpush1.msra.mxu0 0.0
  %4078 = vmatprep.subr.mxu0 0.0
  %4079 = vmatpush1.msra.mxu0 0.0
  %4080 = vmatprep.subr.mxu0 0.0
  %4081 = vmatpush1.msra.mxu0 0.0
  %4082 = vmatprep.subr.mxu0 0.0
  %4083 = vmatpush1.msra.mxu0 0.0
  %4084 = vmatprep.mubr.f32.mxu0 0.0
  %4085 = vmatmul.mubr.f32.gmra.mrb[0].mxu0 %v4009
  %v4086 = vpop.f32.mrb[0].mxu0
  %v4087 = vadd.f32 0.0, %v4086
  %v4088 = vpop.f32.mrb[0].mxu0
  %4089 = vmatprep.mubr.f32.mxu0 0.0
  %4090 = vmatmul.mubr.f32.gmra.mrb[0].mxu0 %v4012
  %v4091 = vpop.f32.mrb[0].mxu0
  %v4092 = vadd.f32 0.0, %v4091
  %v4093 = vpop.f32.mrb[0].mxu0
  %4094 = vmatprep.mubr.f32.mxu0 0.0
  %4095 = vmatmul.mubr.f32.gmra.mrb[0].mxu0 %v4015
  %v4096 = vpop.f32.mrb[0].mxu0
  %v4097 = vadd.f32 0.0, %v4096
  %v4098 = vpop.f32.mrb[0].mxu0
  %4099 = vmatprep.mubr.f32.mxu0 0.0
  %4100 = vmatmul.mubr.f32.gmra.mrb[0].mxu0 %v4018
  %v4101 = vpop.f32.mrb[0].mxu0
  %v4102 = vadd.f32 0.0, %v4101
  %v4103 = vpop.f32.mrb[0].mxu0
  %4104 = vdwg.mxu0
  %4105 = vmatprep.subr.mxu0 0.0
  %4106 = vmatpush1.msra.mxu0 %v2280
  %4107 = vmatprep.subr.mxu0 0.0
  %4108 = vmatpush1.msra.mxu0 %v2282
  %4109 = vmatprep.subr.mxu0 0.0
  %4110 = vmatpush1.msra.mxu0 0.0
  %4111 = vmatprep.subr.mxu0 0.0
  %4112 = vmatpush1.msra.mxu0 0.0
  %4113 = vmatprep.subr.mxu0 0.0
  %4114 = vmatpush1.msra.mxu0 0.0
  %4115 = vmatprep.subr.mxu0 0.0
  %4116 = vmatpush1.msra.mxu0 0.0
  %4117 = vmatprep.subr.mxu0 0.0
  %4118 = vmatpush1.msra.mxu0 0.0
  %4119 = vmatprep.subr.mxu0 0.0
  %4120 = vmatpush1.msra.mxu0 0.0
  %4121 = vmatprep.subr.mxu0 0.0
  %4122 = vmatpush1.msra.mxu0 0.0
  %4123 = vmatprep.subr.mxu0 0.0
  %4124 = vmatpush1.msra.mxu0 0.0
  %4125 = vmatprep.subr.mxu0 0.0
  %4126 = vmatpush1.msra.mxu0 0.0
  %4127 = vmatprep.subr.mxu0 0.0
  %4128 = vmatpush1.msra.mxu0 0.0
  %4129 = vmatprep.subr.mxu0 0.0
  %4130 = vmatpush1.msra.mxu0 0.0
  %4131 = vmatprep.subr.mxu0 0.0
  %4132 = vmatpush1.msra.mxu0 0.0
  %4133 = vmatprep.subr.mxu0 0.0
  %4134 = vmatpush1.msra.mxu0 0.0
  %4135 = vmatprep.subr.mxu0 0.0
  %4136 = vmatpush1.msra.mxu0 0.0
  %4137 = vmatprep.subr.mxu0 0.0
  %4138 = vmatpush1.msra.mxu0 0.0
  %4139 = vmatprep.subr.mxu0 0.0
  %4140 = vmatpush1.msra.mxu0 0.0
  %4141 = vmatprep.subr.mxu0 0.0
  %4142 = vmatpush1.msra.mxu0 0.0
  %4143 = vmatprep.subr.mxu0 0.0
  %4144 = vmatpush1.msra.mxu0 0.0
  %4145 = vmatprep.subr.mxu0 0.0
  %4146 = vmatpush1.msra.mxu0 0.0
  %4147 = vmatprep.subr.mxu0 0.0
  %4148 = vmatpush1.msra.mxu0 0.0
  %4149 = vmatprep.subr.mxu0 0.0
  %4150 = vmatpush1.msra.mxu0 0.0
  %4151 = vmatprep.subr.mxu0 0.0
  %4152 = vmatpush1.msra.mxu0 0.0
  %4153 = vmatprep.subr.mxu0 0.0
  %4154 = vmatpush1.msra.mxu0 0.0
  %4155 = vmatprep.subr.mxu0 0.0
  %4156 = vmatpush1.msra.mxu0 0.0
  %4157 = vmatprep.subr.mxu0 0.0
  %4158 = vmatpush1.msra.mxu0 0.0
  %4159 = vmatprep.subr.mxu0 0.0
  %4160 = vmatpush1.msra.mxu0 0.0
  %4161 = vmatprep.subr.mxu0 0.0
  %4162 = vmatpush1.msra.mxu0 0.0
  %4163 = vmatprep.subr.mxu0 0.0
  %4164 = vmatpush1.msra.mxu0 0.0
  %4165 = vmatprep.subr.mxu0 0.0
  %4166 = vmatpush1.msra.mxu0 0.0
  %4167 = vmatprep.subr.mxu0 0.0
  %4168 = vmatpush1.msra.mxu0 0.0
  %4169 = vmatprep.mubr.f32.mxu0 0.0
  %4170 = vmatmul.mubr.f32.gmra.mrb[0].mxu0 %v4009
  %v4171 = vpop.f32.mrb[0].mxu0
  %v4172 = vadd.f32 0.0, %v4171
  %v4173 = vpop.f32.mrb[0].mxu0
  %4174 = vmatprep.mubr.f32.mxu0 0.0
  %4175 = vmatmul.mubr.f32.gmra.mrb[0].mxu0 %v4012
  %v4176 = vpop.f32.mrb[0].mxu0
  %v4177 = vadd.f32 0.0, %v4176
  %v4178 = vpop.f32.mrb[0].mxu0
  %4179 = vmatprep.mubr.f32.mxu0 0.0
  %4180 = vmatmul.mubr.f32.gmra.mrb[0].mxu0 %v4015
  %v4181 = vpop.f32.mrb[0].mxu0
  %v4182 = vadd.f32 0.0, %v4181
  %v4183 = vpop.f32.mrb[0].mxu0
  %4184 = vmatprep.mubr.f32.mxu0 0.0
  %4185 = vmatmul.mubr.f32.gmra.mrb[0].mxu0 %v4018
  %v4186 = vpop.f32.mrb[0].mxu0
  %v4187 = vadd.f32 0.0, %v4186
  %v4188 = vpop.f32.mrb[0].mxu0
  %4189 = vdwg.mxu0
  %4190 = vmatprep.subr.mxu0 0.0
  %4191 = vmatpush1.msra.mxu0 %v2288
  %4192 = vmatprep.subr.mxu0 0.0
  %4193 = vmatpush1.msra.mxu0 %v2290
  %4194 = vmatprep.subr.mxu0 0.0
  %4195 = vmatpush1.msra.mxu0 0.0
  %4196 = vmatprep.subr.mxu0 0.0
  %4197 = vmatpush1.msra.mxu0 0.0
  %4198 = vmatprep.subr.mxu0 0.0
  %4199 = vmatpush1.msra.mxu0 0.0
  %4200 = vmatprep.subr.mxu0 0.0
  %4201 = vmatpush1.msra.mxu0 0.0
  %4202 = vmatprep.subr.mxu0 0.0
  %4203 = vmatpush1.msra.mxu0 0.0
  %4204 = vmatprep.subr.mxu0 0.0
  %4205 = vmatpush1.msra.mxu0 0.0
  %4206 = vmatprep.subr.mxu0 0.0
  %4207 = vmatpush1.msra.mxu0 0.0
  %4208 = vmatprep.subr.mxu0 0.0
  %4209 = vmatpush1.msra.mxu0 0.0
  %4210 = vmatprep.subr.mxu0 0.0
  %4211 = vmatpush1.msra.mxu0 0.0
  %4212 = vmatprep.subr.mxu0 0.0
  %4213 = vmatpush1.msra.mxu0 0.0
  %4214 = vmatprep.subr.mxu0 0.0
  %4215 = vmatpush1.msra.mxu0 0.0
  %4216 = vmatprep.subr.mxu0 0.0
  %4217 = vmatpush1.msra.mxu0 0.0
  %4218 = vmatprep.subr.mxu0 0.0
  %4219 = vmatpush1.msra.mxu0 0.0
  %4220 = vmatprep.subr.mxu0 0.0
  %4221 = vmatpush1.msra.mxu0 0.0
  %4222 = vmatprep.subr.mxu0 0.0
  %4223 = vmatpush1.msra.mxu0 0.0
  %4224 = vmatprep.subr.mxu0 0.0
  %4225 = vmatpush1.msra.mxu0 0.0
  %4226 = vmatprep.subr.mxu0 0.0
  %4227 = vmatpush1.msra.mxu0 0.0
  %4228 = vmatprep.subr.mxu0 0.0
  %4229 = vmatpush1.msra.mxu0 0.0
  %4230 = vmatprep.subr.mxu0 0.0
  %4231 = vmatpush1.msra.mxu0 0.0
  %4232 = vmatprep.subr.mxu0 0.0
  %4233 = vmatpush1.msra.mxu0 0.0
  %4234 = vmatprep.subr.mxu0 0.0
  %4235 = vmatpush1.msra.mxu0 0.0
  %4236 = vmatprep.subr.mxu0 0.0
  %4237 = vmatpush1.msra.mxu0 0.0
  %4238 = vmatprep.subr.mxu0 0.0
  %4239 = vmatpush1.msra.mxu0 0.0
  %4240 = vmatprep.subr.mxu0 0.0
  %4241 = vmatpush1.msra.mxu0 0.0
  %4242 = vmatprep.subr.mxu0 0.0
  %4243 = vmatpush1.msra.mxu0 0.0
  %4244 = vmatprep.subr.mxu0 0.0
  %4245 = vmatpush1.msra.mxu0 0.0
  %4246 = vmatprep.subr.mxu0 0.0
  %4247 = vmatpush1.msra.mxu0 0.0
  %4248 = vmatprep.subr.mxu0 0.0
  %4249 = vmatpush1.msra.mxu0 0.0
  %4250 = vmatprep.subr.mxu0 0.0
  %4251 = vmatpush1.msra.mxu0 0.0
  %4252 = vmatprep.subr.mxu0 0.0
  %4253 = vmatpush1.msra.mxu0 0.0
  %4254 = vmatprep.mubr.f32.mxu0 0.0
  %4255 = vmatmul.mubr.f32.gmra.mrb[0].mxu0 %v4009
  %v4256 = vpop.f32.mrb[0].mxu0
  %v4257 = vadd.f32 0.0, %v4256
  %v4258 = vpop.f32.mrb[0].mxu0
  %4259 = vmatprep.mubr.f32.mxu0 0.0
  %4260 = vmatmul.mubr.f32.gmra.mrb[0].mxu0 %v4012
  %v4261 = vpop.f32.mrb[0].mxu0
  %v4262 = vadd.f32 0.0, %v4261
  %v4263 = vpop.f32.mrb[0].mxu0
  %4264 = vmatprep.mubr.f32.mxu0 0.0
  %4265 = vmatmul.mubr.f32.gmra.mrb[0].mxu0 %v4015
  %v4266 = vpop.f32.mrb[0].mxu0
  %v4267 = vadd.f32 0.0, %v4266
  %v4268 = vpop.f32.mrb[0].mxu0
  %4269 = vmatprep.mubr.f32.mxu0 0.0
  %4270 = vmatmul.mubr.f32.gmra.mrb[0].mxu0 %v4018
  %v4271 = vpop.f32.mrb[0].mxu0
  %v4272 = vadd.f32 0.0, %v4271
  %v4273 = vpop.f32.mrb[0].mxu0
  %4274 = vdwg.mxu0
  %4275 = vmatprep.subr.mxu0 0.0
  %4276 = vmatpush1.msra.mxu0 %v2296
  %4277 = vmatprep.subr.mxu0 0.0
  %4278 = vmatpush1.msra.mxu0 %v2298
  %4279 = vmatprep.subr.mxu0 0.0
  %4280 = vmatpush1.msra.mxu0 0.0
  %4281 = vmatprep.subr.mxu0 0.0
  %4282 = vmatpush1.msra.mxu0 0.0
  %4283 = vmatprep.subr.mxu0 0.0
  %4284 = vmatpush1.msra.mxu0 0.0
  %4285 = vmatprep.subr.mxu0 0.0
  %4286 = vmatpush1.msra.mxu0 0.0
  %4287 = vmatprep.subr.mxu0 0.0
  %4288 = vmatpush1.msra.mxu0 0.0
  %4289 = vmatprep.subr.mxu0 0.0
  %4290 = vmatpush1.msra.mxu0 0.0
  %4291 = vmatprep.subr.mxu0 0.0
  %4292 = vmatpush1.msra.mxu0 0.0
  %4293 = vmatprep.subr.mxu0 0.0
  %4294 = vmatpush1.msra.mxu0 0.0
  %4295 = vmatprep.subr.mxu0 0.0
  %4296 = vmatpush1.msra.mxu0 0.0
  %4297 = vmatprep.subr.mxu0 0.0
  %4298 = vmatpush1.msra.mxu0 0.0
  %4299 = vmatprep.subr.mxu0 0.0
  %4300 = vmatpush1.msra.mxu0 0.0
  %4301 = vmatprep.subr.mxu0 0.0
  %4302 = vmatpush1.msra.mxu0 0.0
  %4303 = vmatprep.subr.mxu0 0.0
  %4304 = vmatpush1.msra.mxu0 0.0
  %4305 = vmatprep.subr.mxu0 0.0
  %4306 = vmatpush1.msra.mxu0 0.0
  %4307 = vmatprep.subr.mxu0 0.0
  %4308 = vmatpush1.msra.mxu0 0.0
  %4309 = vmatprep.subr.mxu0 0.0
  %4310 = vmatpush1.msra.mxu0 0.0
  %4311 = vmatprep.subr.mxu0 0.0
  %4312 = vmatpush1.msra.mxu0 0.0
  %4313 = vmatprep.subr.mxu0 0.0
  %4314 = vmatpush1.msra.mxu0 0.0
  %4315 = vmatprep.subr.mxu0 0.0
  %4316 = vmatpush1.msra.mxu0 0.0
  %4317 = vmatprep.subr.mxu0 0.0
  %4318 = vmatpush1.msra.mxu0 0.0
  %4319 = vmatprep.subr.mxu0 0.0
  %4320 = vmatpush1.msra.mxu0 0.0
  %4321 = vmatprep.subr.mxu0 0.0
  %4322 = vmatpush1.msra.mxu0 0.0
  %4323 = vmatprep.subr.mxu0 0.0
  %4324 = vmatpush1.msra.mxu0 0.0
  %4325 = vmatprep.subr.mxu0 0.0
  %4326 = vmatpush1.msra.mxu0 0.0
  %4327 = vmatprep.subr.mxu0 0.0
  %4328 = vmatpush1.msra.mxu0 0.0
  %4329 = vmatprep.subr.mxu0 0.0
  %4330 = vmatpush1.msra.mxu0 0.0
  %4331 = vmatprep.subr.mxu0 0.0
  %4332 = vmatpush1.msra.mxu0 0.0
  %4333 = vmatprep.subr.mxu0 0.0
  %4334 = vmatpush1.msra.mxu0 0.0
  %4335 = vmatprep.subr.mxu0 0.0
  %4336 = vmatpush1.msra.mxu0 0.0
  %4337 = vmatprep.subr.mxu0 0.0
  %4338 = vmatpush1.msra.mxu0 0.0
  %4339 = vmatprep.mubr.f32.mxu0 0.0
  %4340 = vmatmul.mubr.f32.gmra.mrb[0].mxu0 %v4009
  %v4341 = vpop.f32.mrb[0].mxu0
  %v4342 = vadd.f32 0.0, %v4341
  %v4343 = vpop.f32.mrb[0].mxu0
  %4344 = vmatprep.mubr.f32.mxu0 0.0
  %4345 = vmatmul.mubr.f32.gmra.mrb[0].mxu0 %v4012
  %v4346 = vpop.f32.mrb[0].mxu0
  %v4347 = vadd.f32 0.0, %v4346
  %v4348 = vpop.f32.mrb[0].mxu0
  %4349 = vmatprep.mubr.f32.mxu0 0.0
  %4350 = vmatmul.mubr.f32.gmra.mrb[0].mxu0 %v4015
  %v4351 = vpop.f32.mrb[0].mxu0
  %v4352 = vadd.f32 0.0, %v4351
  %v4353 = vpop.f32.mrb[0].mxu0
  %4354 = vmatprep.mubr.f32.mxu0 0.0
  %4355 = vmatmul.mubr.f32.gmra.mrb[0].mxu0 %v4018
  %v4356 = vpop.f32.mrb[0].mxu0
  %v4357 = vadd.f32 0.0, %v4356
  %v4358 = vpop.f32.mrb[0].mxu0
  %4359 = vdwg.mxu0
  %4361 = vset.pattern.permute.xlu0 0
  %4362 = vperm.xlu0 %4361, %v117
  %v4363 = vpop.permute.xlu0 %4362
  %4366 = vset.pattern.permute.xlu0 0
  %4367 = vperm.xlu0 %4366, %v118
  %v4368 = vpop.permute.xlu0 %4367
  %4371 = vset.pattern.permute.xlu0 0
  %4372 = vperm.xlu0 %4371, %v119
  %v4373 = vpop.permute.xlu0 %4372
  %4376 = vset.pattern.permute.xlu0 0
  %4377 = vperm.xlu0 %4376, %v120
  %v4378 = vpop.permute.xlu0 %4377
  %v4380 = vadd.f32 %v4087, %v4363
  %v4381 = vadd.f32 %v4092, %v4368
  %v4382 = vadd.f32 %v4097, %v4373
  %v4383 = vadd.f32 %v4102, %v4378
  %v4384 = vadd.f32 %v4172, %v4363
  %v4385 = vadd.f32 %v4177, %v4368
  %v4386 = vadd.f32 %v4182, %v4373
  %v4387 = vadd.f32 %v4187, %v4378
  %v4388 = vadd.f32 %v4257, %v4363
  %v4389 = vadd.f32 %v4262, %v4368
  %v4390 = vadd.f32 %v4267, %v4373
  %v4391 = vadd.f32 %v4272, %v4378
  %v4392 = vadd.f32 %v4342, %v4363
  %v4393 = vadd.f32 %v4347, %v4368
  %v4394 = vadd.f32 %v4352, %v4373
  %v4395 = vadd.f32 %v4357, %v4378
  %v4396 = vxor.u32 %v4380, 2147483648
  %v4397 = vxor.u32 %v4381, 2147483648
  %v4398 = vxor.u32 %v4382, 2147483648
  %v4399 = vxor.u32 %v4383, 2147483648
  %v4400 = vxor.u32 %v4384, 2147483648
  %v4401 = vxor.u32 %v4385, 2147483648
  %v4402 = vxor.u32 %v4386, 2147483648
  %v4403 = vxor.u32 %v4387, 2147483648
  %v4404 = vxor.u32 %v4388, 2147483648
  %v4405 = vxor.u32 %v4389, 2147483648
  %v4406 = vxor.u32 %v4390, 2147483648
  %v4407 = vxor.u32 %v4391, 2147483648
  %v4408 = vxor.u32 %v4392, 2147483648
  %v4409 = vxor.u32 %v4393, 2147483648
  %v4410 = vxor.u32 %v4394, 2147483648
  %v4411 = vxor.u32 %v4395, 2147483648
  %v4412 = vmul.f32 %v4396, 1.442695
  %v4413 = vpow.pop %v4412
  %v4414 = vmul.f32 %v4397, 1.442695
  %v4415 = vpow.pop %v4414
  %v4416 = vmul.f32 %v4398, 1.442695
  %v4417 = vpow.pop %v4416
  %v4418 = vmul.f32 %v4399, 1.442695
  %v4419 = vpow.pop %v4418
  %v4420 = vmul.f32 %v4400, 1.442695
  %v4421 = vpow.pop %v4420
  %v4422 = vmul.f32 %v4401, 1.442695
  %v4423 = vpow.pop %v4422
  %v4424 = vmul.f32 %v4402, 1.442695
  %v4425 = vpow.pop %v4424
  %v4426 = vmul.f32 %v4403, 1.442695
  %v4427 = vpow.pop %v4426
  %v4428 = vmul.f32 %v4404, 1.442695
  %v4429 = vpow.pop %v4428
  %v4430 = vmul.f32 %v4405, 1.442695
  %v4431 = vpow.pop %v4430
  %v4432 = vmul.f32 %v4406, 1.442695
  %v4433 = vpow.pop %v4432
  %v4434 = vmul.f32 %v4407, 1.442695
  %v4435 = vpow.pop %v4434
  %v4436 = vmul.f32 %v4408, 1.442695
  %v4437 = vpow.pop %v4436
  %v4438 = vmul.f32 %v4409, 1.442695
  %v4439 = vpow.pop %v4438
  %v4440 = vmul.f32 %v4410, 1.442695
  %v4441 = vpow.pop %v4440
  %v4442 = vmul.f32 %v4411, 1.442695
  %v4443 = vpow.pop %v4442
  %v4444 = vadd.f32 %v4413, 1.0
  %v4445 = vadd.f32 %v4415, 1.0
  %v4446 = vadd.f32 %v4417, 1.0
  %v4447 = vadd.f32 %v4419, 1.0
  %v4448 = vadd.f32 %v4421, 1.0
  %v4449 = vadd.f32 %v4423, 1.0
  %v4450 = vadd.f32 %v4425, 1.0
  %v4451 = vadd.f32 %v4427, 1.0
  %v4452 = vadd.f32 %v4429, 1.0
  %v4453 = vadd.f32 %v4431, 1.0
  %v4454 = vadd.f32 %v4433, 1.0
  %v4455 = vadd.f32 %v4435, 1.0
  %v4456 = vadd.f32 %v4437, 1.0
  %v4457 = vadd.f32 %v4439, 1.0
  %v4458 = vadd.f32 %v4441, 1.0
  %v4459 = vadd.f32 %v4443, 1.0
  %v4460 = vrcp.pop %v4444
  %v4461 = vmul.f32 1.0, %v4460
  %v4462 = vrcp.pop %v4445
  %v4463 = vmul.f32 1.0, %v4462
  %v4464 = vrcp.pop %v4446
  %v4465 = vmul.f32 1.0, %v4464
  %v4466 = vrcp.pop %v4447
  %v4467 = vmul.f32 1.0, %v4466
  %v4468 = vrcp.pop %v4448
  %v4469 = vmul.f32 1.0, %v4468
  %v4470 = vrcp.pop %v4449
  %v4471 = vmul.f32 1.0, %v4470
  %v4472 = vrcp.pop %v4450
  %v4473 = vmul.f32 1.0, %v4472
  %v4474 = vrcp.pop %v4451
  %v4475 = vmul.f32 1.0, %v4474
  %v4476 = vrcp.pop %v4452
  %v4477 = vmul.f32 1.0, %v4476
  %v4478 = vrcp.pop %v4453
  %v4479 = vmul.f32 1.0, %v4478
  %v4480 = vrcp.pop %v4454
  %v4481 = vmul.f32 1.0, %v4480
  %v4482 = vrcp.pop %v4455
  %v4483 = vmul.f32 1.0, %v4482
  %v4484 = vrcp.pop %v4456
  %v4485 = vmul.f32 1.0, %v4484
  %v4486 = vrcp.pop %v4457
  %v4487 = vmul.f32 1.0, %v4486
  %v4488 = vrcp.pop %v4458
  %v4489 = vmul.f32 1.0, %v4488
  %v4490 = vrcp.pop %v4459
  %v4491 = vmul.f32 1.0, %v4490
  %v4492 = vadd.f32 %v4000, %v4461
  %v4493 = vadd.f32 %v4001, %v4463
  %v4494 = vadd.f32 %v4002, %v4469
  %v4495 = vadd.f32 %v4003, %v4471
  %v4496 = vadd.f32 %v4004, %v4477
  %v4497 = vadd.f32 %v4005, %v4479
  %v4498 = vadd.f32 %v4006, %v4485
  %v4499 = vadd.f32 %v4007, %v4487
  %v4500 = vadd.f32 %v4492, %v4465
  %v4501 = vadd.f32 %v4493, %v4467
  %v4502 = vadd.f32 %v4494, %v4473
  %v4503 = vadd.f32 %v4495, %v4475
  %v4504 = vadd.f32 %v4496, %v4481
  %v4505 = vadd.f32 %v4497, %v4483
  %v4506 = vadd.f32 %v4498, %v4489
  %v4507 = vadd.f32 %v4499, %v4491
  %v4508 = vsel %vm128, %v4500, 0.0
  %4509 = vadd.xlane.f32.xlu0 %v4508
  %v4510 = vpop.xlane.xlu0 %4509
  %v4511 = vsel %vm128, %v4501, 0.0
  %4512 = vadd.xlane.f32.xlu0 %v4511
  %v4513 = vpop.xlane.xlu0 %4512
  %v4514 = vsel %vm128, %v4502, 0.0
  %4515 = vadd.xlane.f32.xlu0 %v4514
  %v4516 = vpop.xlane.xlu0 %4515
  %v4517 = vsel %vm128, %v4503, 0.0
  %4518 = vadd.xlane.f32.xlu0 %v4517
  %v4519 = vpop.xlane.xlu0 %4518
  %v4520 = vsel %vm128, %v4504, 0.0
  %4521 = vadd.xlane.f32.xlu0 %v4520
  %v4522 = vpop.xlane.xlu0 %4521
  %v4523 = vsel %vm128, %v4505, 0.0
  %4524 = vadd.xlane.f32.xlu0 %v4523
  %v4525 = vpop.xlane.xlu0 %4524
  %v4526 = vsel %vm128, %v4506, 0.0
  %4527 = vadd.xlane.f32.xlu0 %v4526
  %v4528 = vpop.xlane.xlu0 %4527
  %v4529 = vsel %vm128, %v4507, 0.0
  %4530 = vadd.xlane.f32.xlu0 %v4529
  %v4531 = vpop.xlane.xlu0 %4530
  %v4532 = vmul.f32 %v4510, %v1226
  %v4533 = vmul.f32 %v4513, %v1226
  %v4534 = vmul.f32 %v4516, %v1226
  %v4535 = vmul.f32 %v4519, %v1226
  %v4536 = vmul.f32 %v4522, %v1226
  %v4537 = vmul.f32 %v4525, %v1226
  %v4538 = vmul.f32 %v4528, %v1226
  %v4539 = vmul.f32 %v4531, %v1226
  %v4540 = vsub.f32 %v4500, %v4532
  %v4541 = vsub.f32 %v4501, %v4533
  %v4542 = vsub.f32 %v4502, %v4534
  %v4543 = vsub.f32 %v4503, %v4535
  %v4544 = vsub.f32 %v4504, %v4536
  %v4545 = vsub.f32 %v4505, %v4537
  %v4546 = vsub.f32 %v4506, %v4538
  %v4547 = vsub.f32 %v4507, %v4539
  %v4548 = vmul.f32 %v4540, %v4540
  %v4549 = vmul.f32 %v4541, %v4541
  %v4550 = vmul.f32 %v4542, %v4542
  %v4551 = vmul.f32 %v4543, %v4543
  %v4552 = vmul.f32 %v4544, %v4544
  %v4553 = vmul.f32 %v4545, %v4545
  %v4554 = vmul.f32 %v4546, %v4546
  %v4555 = vmul.f32 %v4547, %v4547
  %v4556 = vsel %vm128, %v4548, 0.0
  %4557 = vadd.xlane.f32.xlu0 %v4556
  %v4558 = vpop.xlane.xlu0 %4557
  %v4559 = vsel %vm128, %v4549, 0.0
  %4560 = vadd.xlane.f32.xlu0 %v4559
  %v4561 = vpop.xlane.xlu0 %4560
  %v4562 = vsel %vm128, %v4550, 0.0
  %4563 = vadd.xlane.f32.xlu0 %v4562
  %v4564 = vpop.xlane.xlu0 %4563
  %v4565 = vsel %vm128, %v4551, 0.0
  %4566 = vadd.xlane.f32.xlu0 %v4565
  %v4567 = vpop.xlane.xlu0 %4566
  %v4568 = vsel %vm128, %v4552, 0.0
  %4569 = vadd.xlane.f32.xlu0 %v4568
  %v4570 = vpop.xlane.xlu0 %4569
  %v4571 = vsel %vm128, %v4553, 0.0
  %4572 = vadd.xlane.f32.xlu0 %v4571
  %v4573 = vpop.xlane.xlu0 %4572
  %v4574 = vsel %vm128, %v4554, 0.0
  %4575 = vadd.xlane.f32.xlu0 %v4574
  %v4576 = vpop.xlane.xlu0 %4575
  %v4577 = vsel %vm128, %v4555, 0.0
  %4578 = vadd.xlane.f32.xlu0 %v4577
  %v4579 = vpop.xlane.xlu0 %4578
  %v4580 = vmul.f32 %v4558, %v1226
  %v4581 = vmul.f32 %v4561, %v1226
  %v4582 = vmul.f32 %v4564, %v1226
  %v4583 = vmul.f32 %v4567, %v1226
  %v4584 = vmul.f32 %v4570, %v1226
  %v4585 = vmul.f32 %v4573, %v1226
  %v4586 = vmul.f32 %v4576, %v1226
  %v4587 = vmul.f32 %v4579, %v1226
  %v4588 = vadd.f32 %v4580, 1e-05
  %v4589 = vadd.f32 %v4581, 1e-05
  %v4590 = vadd.f32 %v4582, 1e-05
  %v4591 = vadd.f32 %v4583, 1e-05
  %v4592 = vadd.f32 %v4584, 1e-05
  %v4593 = vadd.f32 %v4585, 1e-05
  %v4594 = vadd.f32 %v4586, 1e-05
  %v4595 = vadd.f32 %v4587, 1e-05
  %v4596 = vrsqrt.pop %v4588
  %v4597 = vrsqrt.pop %v4589
  %v4598 = vrsqrt.pop %v4590
  %v4599 = vrsqrt.pop %v4591
  %v4600 = vrsqrt.pop %v4592
  %v4601 = vrsqrt.pop %v4593
  %v4602 = vrsqrt.pop %v4594
  %v4603 = vrsqrt.pop %v4595
  %v4604 = vmul.f32 %v4540, %v4596
  %v4605 = vmul.f32 %v4541, %v4597
  %v4606 = vmul.f32 %v4542, %v4598
  %v4607 = vmul.f32 %v4543, %v4599
  %v4608 = vmul.f32 %v4544, %v4600
  %v4609 = vmul.f32 %v4545, %v4601
  %v4610 = vmul.f32 %v4546, %v4602
  %v4611 = vmul.f32 %v4547, %v4603
  %v4612 = vlaneseq
  %v4613 = vshrl.u32 %v4612, 7
  %v4614 = vsub.s32 4, %v4613
  %v4615 = vrot.slane %v121, %v4614
  %v4616 = vmul.f32 %v4604, %v4615
  %v4617 = vmul.f32 %v4605, %v4615
  %v4618 = vmul.f32 %v4606, %v4615
  %v4619 = vmul.f32 %v4607, %v4615
  %v4620 = vmul.f32 %v4608, %v4615
  %v4621 = vmul.f32 %v4609, %v4615
  %v4622 = vmul.f32 %v4610, %v4615
  %v4623 = vmul.f32 %v4611, %v4615
  %v4624 = vlaneseq
  %v4625 = vshrl.u32 %v4624, 7
  %v4626 = vsub.s32 5, %v4625
  %v4627 = vrot.slane %v121, %v4626
  %v4628 = vadd.f32 %v4616, %v4627
  %v4629 = vadd.f32 %v4617, %v4627
  %v4630 = vadd.f32 %v4618, %v4627
  %v4631 = vadd.f32 %v4619, %v4627
  %v4632 = vadd.f32 %v4620, %v4627
  %v4633 = vadd.f32 %v4621, %v4627
  %v4634 = vadd.f32 %v4622, %v4627
  %v4635 = vadd.f32 %v4623, %v4627
  %4636 = vst.msk [vmem:[%s19] sm:$0xff] %vm128, %v4628
  %4637 = vst.msk [vmem:[%s19 + $0x8] sm:$0xff] %vm128, %v4629
  %4638 = vst.msk [vmem:[%s19 + $0x10] sm:$0xff] %vm128, %v4630
  %4639 = vst.msk [vmem:[%s19 + $0x18] sm:$0xff] %vm128, %v4631
  %4640 = vst.msk [vmem:[%s19 + $0x20] sm:$0xff] %vm128, %v4632
  %4641 = vst.msk [vmem:[%s19 + $0x28] sm:$0xff] %vm128, %v4633
  %4642 = vst.msk [vmem:[%s19 + $0x30] sm:$0xff] %vm128, %v4634
  %4643 = vst.msk [vmem:[%s19 + $0x38] sm:$0xff] %vm128, %v4635
  // Predicated region
  $region78: #{tpu_custom_call.1} parent=0 // pred_check
    _
  $region79: #{tpu_custom_call.1} parent=0 // pred_check_branch
    %4645 = sbr.rel (0) target = $region81
  $region80: #{tpu_custom_call.1} parent=0 // pred_region
    _
  $region81: #{tpu_custom_call.1} parent=0 // pred_fallthru
    _
  // Predicated region
  $region82: #{tpu_custom_call.1} parent=0 // pred_check
    _
  $region83: #{tpu_custom_call.1} parent=0 // pred_check_branch
    %4647 = sbr.rel (0) target = $region85
  $region84: #{tpu_custom_call.1} parent=0 // pred_region
    _
  $region85: #{tpu_custom_call.1} parent=0 // pred_fallthru
    _

</llo_original>
